<compile_context>
chip_gen: v7x
topology: tpu7x:2x2x1
jax: 0.10.0
libtpu: 0.0.40
codegen_flags: <defaults>
</compile_context>

<pallas_src>
import jax
import jax.numpy as jnp
from jax.experimental import pallas as pl
from jax.experimental.pallas import tpu as pltpu

# ----------------------------- model config ---------------------------------
CHANNELS = 4
IMG = 16
PATCH = 4
NUM_PATCHES = (IMG // PATCH) * (IMG // PATCH)      # 16
TOKENS = NUM_PATCHES + 1                           # 17 (CLS token)
T_PAD = ((TOKENS + 7) // 8) * 8                    # 24 (sublane-aligned stride/img)
DIM = 32                                           # embed dim == z_dim
HEADS = 2
HEAD_DIM = DIM // HEADS                            # 16
LAYERS = 2
MLP_HIDDEN = 4 * DIM                               # 128
LN_EPS = 1e-5
PATCH_FEAT = CHANNELS * PATCH * PATCH              # 64
BB_MAX = 8                                         # images folded per grid step

# rows inside the per-layer vector slab (LAYERS, 8, 128)
_V_LN1G, _V_LN1B, _V_QKVB, _V_PROJB, _V_LN2G, _V_LN2B, _V_FC1B, _V_FC2B = range(8)
# rows inside the globals slab (T_PAD + 8, DIM)
_G_LNFG = T_PAD + 0
_G_LNFB = T_PAD + 1


# ------------------------- fused ViT Pallas kernel ---------------------------
def _vit_kernel(patches_ref, patch_w_ref, glob_ref, vecs_ref,
                qkv_w_ref, proj_w_ref, fc1_w_ref, fc2_w_ref,
                z_ref, attn_ref):
    """One grid step == Bb images.  Everything stays in VMEM/vregs."""
    f32 = jnp.float32
    bb = patches_ref.shape[0]
    rows = bb * T_PAD

    def ln(x, g, b):
        mu = jnp.mean(x, axis=-1, keepdims=True)
        xc = x - mu
        var = jnp.mean(xc * xc, axis=-1, keepdims=True)
        return xc * jax.lax.rsqrt(var + LN_EPS) * g + b

    # globals slab: rows [0:T_PAD] = pos (+ CLS embedding folded into row 0 and
    # patch-embed bias folded into rows 1..16, zeros in padded rows), then the
    # final-LN gain / bias.
    pos_all = glob_ref[0:T_PAD, :]                                  # (24, DIM)
    lnf_g = glob_ref[_G_LNFG:_G_LNFG + 1, :]                        # (1, DIM)
    lnf_b = glob_ref[_G_LNFB:_G_LNFB + 1, :]                        # (1, DIM)

    # ---- patch embedding for all bb images in one (rows, 64) matmul ----
    patches = patches_ref[...].reshape(rows, PATCH_FEAT)            # free (24 % 8 == 0)
    emb = jnp.dot(patches, patch_w_ref[...], preferred_element_type=f32)
    tok = (emb.reshape(bb, T_PAD, DIM) + pos_all).reshape(rows, DIM)

    # mask for padded key slots (per-image token index >= TOKENS)
    key_id = jax.lax.broadcasted_iota(jnp.int32, (bb, T_PAD, T_PAD), 2)
    key_mask = key_id < TOKENS
    neg = jnp.float32(-1e30)

    scale = float(HEAD_DIM) ** -0.5

    for l in range(LAYERS):                                   # static unroll
        ln1_g = vecs_ref[l, _V_LN1G:_V_LN1G + 1, 0:DIM]
        ln1_b = vecs_ref[l, _V_LN1B:_V_LN1B + 1, 0:DIM]
        qkv_b = vecs_ref[l, _V_QKVB:_V_QKVB + 1, 0:3 * DIM]
        proj_b = vecs_ref[l, _V_PROJB:_V_PROJB + 1, 0:DIM]
        ln2_g = vecs_ref[l, _V_LN2G:_V_LN2G + 1, 0:DIM]
        ln2_b = vecs_ref[l, _V_LN2B:_V_LN2B + 1, 0:DIM]
        fc1_b = vecs_ref[l, _V_FC1B:_V_FC1B + 1, 0:MLP_HIDDEN]
        fc2_b = vecs_ref[l, _V_FC2B:_V_FC2B + 1, 0:DIM]

        # ---- attention block ----
        y = ln(tok, ln1_g, ln1_b)
        qkv = jnp.dot(y, qkv_w_ref[l], preferred_element_type=f32) + qkv_b
        qkv3 = qkv.reshape(bb, T_PAD, 3 * DIM)                # free reshape

        o_heads = []
        for h in range(HEADS):                                # static unroll
            lo = h * HEAD_DIM
            q = qkv3[:, :, 0 * DIM + lo: 0 * DIM + lo + HEAD_DIM]   # (bb,24,16)
            k = qkv3[:, :, 1 * DIM + lo: 1 * DIM + lo + HEAD_DIM]
            v = qkv3[:, :, 2 * DIM + lo: 2 * DIM + lo + HEAD_DIM]

            # image-batched q @ k^T without materializing a transpose
            s = jax.lax.dot_general(q, k, (((2,), (2,)), ((0,), (0,))),
                                    preferred_element_type=f32) * scale  # (bb,24,24)
            s = jnp.where(key_mask, s, neg)
            s = s - jnp.max(s, axis=-1, keepdims=True)
            p = jnp.exp(s)                                   # masked cols -> exactly 0
            denom = jnp.sum(p, axis=-1, keepdims=True)
            p = p * (1.0 / denom)

            # what attn_drop's forward hook records in eval mode — one slab
            # store per (layer, head) covering all bb images.
            attn_ref[:, l * HEADS + h, :, :] = (
                p[:, :TOKENS, :TOKENS].astype(attn_ref.dtype))

            o_heads.append(jax.lax.dot_general(
                p, v, (((2,), (1,)), ((0,), (0,))),
                preferred_element_type=f32))                  # (bb,24,16)

        o = jnp.concatenate(o_heads, axis=-1).reshape(rows, DIM)     # (rows, DIM)
        tok = tok + jnp.dot(o, proj_w_ref[l], preferred_element_type=f32) + proj_b

        # ---- MLP block ----
        y2 = ln(tok, ln2_g, ln2_b)
        h1 = jnp.dot(y2, fc1_w_ref[l], preferred_element_type=f32) + fc1_b
        # TODO(synk): PyTorch nn.GELU defaults to the exact erf form; tanh-approx
        # is used here since erf is not guaranteed to lower in Mosaic.
        h1 = jax.nn.gelu(h1)
        tok = tok + jnp.dot(h1, fc2_w_ref[l], preferred_element_type=f32) + fc2_b

    # final LayerNorm only on the CLS rows that are actually emitted
    cls_rows = tok.reshape(bb, T_PAD, DIM)[:, 0, :]                  # (bb, DIM)
    z_ref[:, 0, :] = ln(cls_rows, lnf_g, lnf_b).astype(z_ref.dtype)


def _rep_spec(shape):
    """Full-array block that stays VMEM-resident across all grid steps."""
    return pl.BlockSpec(shape, lambda i, _n=len(shape): (0,) * _n)


def _choose_bb(B: int) -> int:
    # Bb*T_PAD matmul rows per step; cap at 8 (192 rows, near the 128 / 256 MXU
    # row targets for v5e / v6e+) while keeping >= 2 grid steps whenever B >= 2
    # so both v7x TensorCores get work.
    return max(1, min(BB_MAX, (B + 1) // 2))


def fused_vit(patches, Bb, patch_w, glob, vecs, qkvw, projw, fc1w, fc2w):
    B_pad = patches.shape[0]
    assert B_pad % Bb == 0
    z, attns = pl.pallas_call(
        _vit_kernel,
        grid=(B_pad // Bb,),
        out_shape=(
            jax.ShapeDtypeStruct((B_pad, 1, DIM), jnp.float32),
            jax.ShapeDtypeStruct((B_pad, LAYERS * HEADS, TOKENS, TOKENS),
                                 jnp.float32),
        ),
        in_specs=[
            pl.BlockSpec((Bb, T_PAD, PATCH_FEAT), lambda i: (i, 0, 0)),
            _rep_spec((PATCH_FEAT, DIM)),
            _rep_spec((T_PAD + 8, DIM)),
            _rep_spec((LAYERS, 8, 128)),
            _rep_spec((LAYERS, DIM, 3 * DIM)),
            _rep_spec((LAYERS, DIM, DIM)),
            _rep_spec((LAYERS, DIM, MLP_HIDDEN)),
            _rep_spec((LAYERS, MLP_HIDDEN, DIM)),
        ],
        out_specs=(
            pl.BlockSpec((Bb, 1, DIM), lambda i: (i, 0, 0)),
            pl.BlockSpec((Bb, LAYERS * HEADS, TOKENS, TOKENS),
                         lambda i: (i, 0, 0, 0)),
        ),
        compiler_params=pltpu.CompilerParams(dimension_semantics=("parallel",)),
    )(patches, patch_w, glob, vecs, qkvw, projw, fc1w, fc2w)
    return z, attns


# ----------------------------- parameters -----------------------------------
def init_params(key):
    def nrm(k, shape, s=0.02):
        return (jax.random.normal(k, shape, jnp.float32) * s).astype(jnp.float32)

    keys = iter(jax.random.split(key, 8 + LAYERS * 8))
    params = {
        "patch_w": nrm(next(keys), (PATCH_FEAT, DIM)),
        "patch_b": jnp.zeros((DIM,), jnp.float32),
        "cls": nrm(next(keys), (1, 1, DIM)),
        "pos": nrm(next(keys), (1, TOKENS, DIM)),
        "ln_f_g": jnp.ones((DIM,), jnp.float32),
        "ln_f_b": jnp.zeros((DIM,), jnp.float32),
        "layers": [],
    }
    for _ in range(LAYERS):
        params["layers"].append({
            "ln1_g": jnp.ones((DIM,), jnp.float32),
            "ln1_b": jnp.zeros((DIM,), jnp.float32),
            "qkv_w": nrm(next(keys), (DIM, 3 * DIM)),
            "qkv_b": jnp.zeros((3 * DIM,), jnp.float32),
            "proj_w": nrm(next(keys), (DIM, DIM)),
            "proj_b": jnp.zeros((DIM,), jnp.float32),
            "ln2_g": jnp.ones((DIM,), jnp.float32),
            "ln2_b": jnp.zeros((DIM,), jnp.float32),
            "fc1_w": nrm(next(keys), (DIM, MLP_HIDDEN)),
            "fc1_b": jnp.zeros((MLP_HIDDEN,), jnp.float32),
            "fc2_w": nrm(next(keys), (MLP_HIDDEN, DIM)),
            "fc2_b": jnp.zeros((DIM,), jnp.float32),
        })
    return params


# ----------------------------- ViT forward ----------------------------------
def vit_forward(params, x):
    """x: (B, C, H, W) NCHW -> (z (B, DIM), attns (B, L, H, T, T))."""
    B = x.shape[0]
    p = PATCH
    # Conv2d(stride=p) == patch extraction (flatten order c, kh, kw, matching
    # Conv2d weight (D, C, p, p) flattening) + matmul (done inside the kernel).
    patches = (
        x.astype(jnp.float32)
         .reshape(B, CHANNELS, IMG // p, p, IMG // p, p)
         .transpose(0, 2, 4, 1, 3, 5)
         .reshape(B, NUM_PATCHES, PATCH_FEAT)
    )
    # token axis: row 0 = zero CLS placeholder (the CLS embedding is folded into
    # the position slab), rows 1..16 = patches, rows 17..23 = zero padding.
    patches = jnp.pad(patches, ((0, 0), (1, T_PAD - TOKENS), (0, 0)))

    Bb = _choose_bb(B)
    B_pad = ((B + Bb - 1) // Bb) * Bb
    patches = jnp.pad(patches, ((0, B_pad - B), (0, 0), (0, 0)))

    # globals slab: pos (+ CLS folded into row 0, patch-embed bias folded into
    # the real patch rows), then the final-LN gain / bias.
    pos = params["pos"].reshape(TOKENS, DIM)
    pos_all = jnp.zeros((T_PAD, DIM), jnp.float32)
    pos_all = pos_all.at[0].set(pos[0] + params["cls"].reshape(DIM))
    pos_all = pos_all.at[1:TOKENS].set(pos[1:] + params["patch_b"])
    glob = jnp.zeros((T_PAD + 8, DIM), jnp.float32)
    glob = glob.at[:T_PAD].set(pos_all)
    glob = glob.at[_G_LNFG].set(params["ln_f_g"])
    glob = glob.at[_G_LNFB].set(params["ln_f_b"])

    # per-layer vector slab (LAYERS, 8, 128) — each row one bias/gain vector.
    def vrow(v):
        return jnp.pad(v, (0, 128 - v.shape[0]))

    vecs = jnp.stack([
        jnp.stack([vrow(lp["ln1_g"]), vrow(lp["ln1_b"]), vrow(lp["qkv_b"]),
                   vrow(lp["proj_b"]), vrow(lp["ln2_g"]), vrow(lp["ln2_b"]),
                   vrow(lp["fc1_b"]), vrow(lp["fc2_b"])], axis=0)
        for lp in params["layers"]], axis=0)

    qkvw = jnp.stack([lp["qkv_w"] for lp in params["layers"]], axis=0)
    projw = jnp.stack([lp["proj_w"] for lp in params["layers"]], axis=0)
    fc1w = jnp.stack([lp["fc1_w"] for lp in params["layers"]], axis=0)
    fc2w = jnp.stack([lp["fc2_w"] for lp in params["layers"]], axis=0)

    z, attns = fused_vit(patches, Bb, params["patch_w"], glob, vecs,
                         qkvw, projw, fc1w, fc2w)
    z = z[:B].reshape(B, DIM)
    attns = attns[:B].reshape(B, LAYERS, HEADS, TOKENS, TOKENS)
    return z, attns


# --------------------------- Recorder.forward -------------------------------
def _recorder_forward(params, x):
    """Mirrors Recorder.forward: accepts (bs, seq, c, h, w) or (bs, c, h, w)."""
    # TODO(synk): PyTorch forward-hook registration / eject / clear are framework
    # mechanics with no Pallas equivalent; attention maps are returned explicitly.
    if x.ndim == 5:
        bs, seq_len, c, h, w = x.shape
        xf = x.reshape(-1, c, h, w)
        z_t, attns = vit_forward(params, xf)
        z_t = z_t.reshape(bs, seq_len, -1)
        attns = attns.reshape((bs, seq_len) + attns.shape[1:])
    else:
        z_t, attns = vit_forward(params, x)
    return z_t, attns


recorder_forward = jax.jit(_recorder_forward)


# --------------------------- pure-JAX reference ------------------------------
def vit_reference(params, x):
    B = x.shape[0]
    p = PATCH
    patches = (x.reshape(B, CHANNELS, IMG // p, p, IMG // p, p)
                .transpose(0, 2, 4, 1, 3, 5)
                .reshape(B, NUM_PATCHES, CHANNELS * p * p))
    emb = patches @ params["patch_w"] + params["patch_b"]
    cls = jnp.broadcast_to(params["cls"], (B, 1, DIM))
    tok = jnp.concatenate([cls, emb], axis=1) + params["pos"]

    def ln(x, g, b):
        mu = x.mean(-1, keepdims=True)
        var = ((x - mu) ** 2).mean(-1, keepdims=True)
        return (x - mu) * jax.lax.rsqrt(var + LN_EPS) * g + b

    recs = []
    scale = float(HEAD_DIM) ** -0.5
    for lp in params["layers"]:
        y = ln(tok, lp["ln1_g"], lp["ln1_b"])
        qkv = y @ lp["qkv_w"] + lp["qkv_b"]
        qkv = qkv.reshape(B, TOKENS, 3, HEADS, HEAD_DIM).transpose(2, 0, 3, 1, 4)
        q, k, v = qkv[0], qkv[1], qkv[2]                       # (B, H, T, Dh)
        s = jnp.einsum("bhtd,bhsd->bhts", q, k) * scale
        a = jax.nn.softmax(s, axis=-1)
        recs.append(a)
        o = jnp.einsum("bhts,bhsd->bhtd", a, v).transpose(0, 2, 1, 3).reshape(B, TOKENS, DIM)
        tok = tok + (o @ lp["proj_w"] + lp["proj_b"])
        y2 = ln(tok, lp["ln2_g"], lp["ln2_b"])
        h1 = jax.nn.gelu(y2 @ lp["fc1_w"] + lp["fc1_b"])
        tok = tok + (h1 @ lp["fc2_w"] + lp["fc2_b"])
    tok = ln(tok, params["ln_f_g"], params["ln_f_b"])
    return tok[:, 0, :], jnp.stack(recs, axis=1)


# --------------------------------- main --------------------------------------
if __name__ == "__main__":
    key = jax.random.PRNGKey(0)
    params = init_params(jax.random.PRNGKey(42))

    bs, seq_len = 2, 3
    x = jax.random.normal(key, (bs, seq_len, CHANNELS, IMG, IMG), jnp.float32)

    z_t, attns = recorder_forward(params, x)
    z_t = jax.block_until_ready(z_t)
    attns = jax.block_until_ready(attns)

    assert z_t.shape == (bs, seq_len, DIM), z_t.shape
    assert attns.shape == (bs, seq_len, LAYERS, HEADS, TOKENS, TOKENS), attns.shape

    # attention rows are probabilities -> sum to 1
    row_sums = jnp.sum(attns, axis=-1)
    assert jnp.allclose(row_sums, jnp.ones_like(row_sums), atol=1e-4)

    # numeric check against a pure-JAX reference of the same encoder
    z_ref, attn_ref = vit_reference(params, x.reshape(-1, CHANNELS, IMG, IMG))
    z_ref = z_ref.reshape(bs, seq_len, DIM)
    attn_ref = attn_ref.reshape(bs, seq_len, LAYERS, HEADS, TOKENS, TOKENS)
    assert jnp.allclose(z_t, z_ref, atol=2e-3, rtol=2e-3)
    assert jnp.allclose(attns, attn_ref, atol=2e-3, rtol=2e-3)

    # 4-D input path (bs, c, h, w)
    z4, a4 = recorder_forward(params, x[:, 0])
    z4 = jax.block_until_ready(z4)
    assert z4.shape == (bs, DIM) and a4.shape == (bs, LAYERS, HEADS, TOKENS, TOKENS)

    print("KERNEL_OK")
</pallas_src>

<mosaic_0001>
module attributes {stable_mosaic.version = 11 : i64} {
  func.func @_vit_kernel(%arg0: i32, %arg1: memref<3x24x64xf32, #tpu.memory_space<vmem>>, %arg2: memref<64x32xf32, #tpu.memory_space<vmem>>, %arg3: memref<32x32xf32, #tpu.memory_space<vmem>>, %arg4: memref<2x8x128xf32, #tpu.memory_space<vmem>>, %arg5: memref<2x32x96xf32, #tpu.memory_space<vmem>>, %arg6: memref<2x32x32xf32, #tpu.memory_space<vmem>>, %arg7: memref<2x32x128xf32, #tpu.memory_space<vmem>>, %arg8: memref<2x128x32xf32, #tpu.memory_space<vmem>>, %arg9: memref<3x1x32xf32, #tpu.memory_space<vmem>>, %arg10: memref<3x4x17x17xf32, #tpu.memory_space<vmem>>) attributes {dimension_semantics = [#tpu.dimension_semantics<parallel>], iteration_bounds = array<i64: 2>, scalar_prefetch = 0 : i64, scratch_operands = 0 : i64, tpu.core_type = #tpu.core_type<tc>, window_params = [{transform_indices = @transform_0, window_bounds = array<i64: 3, 24, 64>}, {pipeline_mode = #tpu.pipeline_mode<synchronous>, transform_indices = @transform_1, window_bounds = array<i64: 64, 32>}, {pipeline_mode = #tpu.pipeline_mode<synchronous>, transform_indices = @transform_2, window_bounds = array<i64: 32, 32>}, {pipeline_mode = #tpu.pipeline_mode<synchronous>, transform_indices = @transform_3, window_bounds = array<i64: 2, 8, 128>}, {pipeline_mode = #tpu.pipeline_mode<synchronous>, transform_indices = @transform_4, window_bounds = array<i64: 2, 32, 96>}, {pipeline_mode = #tpu.pipeline_mode<synchronous>, transform_indices = @transform_5, window_bounds = array<i64: 2, 32, 32>}, {pipeline_mode = #tpu.pipeline_mode<synchronous>, transform_indices = @transform_6, window_bounds = array<i64: 2, 32, 128>}, {pipeline_mode = #tpu.pipeline_mode<synchronous>, transform_indices = @transform_7, window_bounds = array<i64: 2, 128, 32>}, {transform_indices = @transform_8, window_bounds = array<i64: 3, 1, 32>}, {transform_indices = @transform_9, window_bounds = array<i64: 3, 4, 17, 17>}]} {
    %c0 = arith.constant 0 : index
    %c0_0 = arith.constant 0 : index
    %0 = vector.load %arg3[%c0, %c0_0] : memref<32x32xf32, #tpu.memory_space<vmem>>, vector<24x32xf32>
    %c24 = arith.constant 24 : index
    %c0_1 = arith.constant 0 : index
    %1 = vector.load %arg3[%c24, %c0_1] : memref<32x32xf32, #tpu.memory_space<vmem>>, vector<1x32xf32>
    %c25 = arith.constant 25 : index
    %c0_2 = arith.constant 0 : index
    %2 = vector.load %arg3[%c25, %c0_2] : memref<32x32xf32, #tpu.memory_space<vmem>>, vector<1x32xf32>
    %c0_3 = arith.constant 0 : index
    %c0_4 = arith.constant 0 : index
    %c0_5 = arith.constant 0 : index
    %3 = vector.load %arg1[%c0_3, %c0_4, %c0_5] : memref<3x24x64xf32, #tpu.memory_space<vmem>>, vector<3x24x64xf32>
    %4 = vector.shape_cast %3 : vector<3x24x64xf32> to vector<72x64xf32>
    %c0_6 = arith.constant 0 : index
    %c0_7 = arith.constant 0 : index
    %5 = vector.load %arg2[%c0_6, %c0_7] : memref<64x32xf32, #tpu.memory_space<vmem>>, vector<64x32xf32>
    %cst = arith.constant dense<0.000000e+00> : vector<72x32xf32>
    %6 = tpu.matmul %4, %5, %cst {dimension_numbers = #tpu.dot_dimension_numbers<[1], [0], [0], [1], [0, 0, 1, 1], [], []>} : vector<72x64xf32>, vector<64x32xf32>, vector<72x32xf32> -> vector<72x32xf32>
    %7 = vector.shape_cast %6 : vector<72x32xf32> to vector<3x24x32xf32>
    %8 = vector.shape_cast %0 : vector<24x32xf32> to vector<1x24x32xf32>
    %9 = vector.broadcast %8 : vector<1x24x32xf32> to vector<3x24x32xf32>
    %10 = arith.addf %7, %9 : vector<3x24x32xf32>
    %11 = vector.shape_cast %10 : vector<3x24x32xf32> to vector<72x32xf32>
    %12 = tpu.iota {dimensions = array<i32: 2>} : vector<3x24x24xi32>
    %c17_i32 = arith.constant 17 : i32
    %13 = vector.broadcast %c17_i32 : i32 to vector<3x24x24xi32>
    %14 = arith.cmpi slt, %12, %13 : vector<3x24x24xi32>
    %c0_8 = arith.constant 0 : index
    %c0_9 = arith.constant 0 : index
    %c0_10 = arith.constant 0 : index
    %15 = vector.load %arg4[%c0_8, %c0_9, %c0_10] : memref<2x8x128xf32, #tpu.memory_space<vmem>>, vector<1x1x32xf32>
    %16 = vector.shape_cast %15 : vector<1x1x32xf32> to vector<1x32xf32>
    %c0_11 = arith.constant 0 : index
    %c1 = arith.constant 1 : index
    %c0_12 = arith.constant 0 : index
    %17 = vector.load %arg4[%c0_11, %c1, %c0_12] : memref<2x8x128xf32, #tpu.memory_space<vmem>>, vector<1x1x32xf32>
    %18 = vector.shape_cast %17 : vector<1x1x32xf32> to vector<1x32xf32>
    %c0_13 = arith.constant 0 : index
    %c2 = arith.constant 2 : index
    %c0_14 = arith.constant 0 : index
    %19 = vector.load %arg4[%c0_13, %c2, %c0_14] : memref<2x8x128xf32, #tpu.memory_space<vmem>>, vector<1x1x96xf32>
    %20 = vector.shape_cast %19 : vector<1x1x96xf32> to vector<1x96xf32>
    %c0_15 = arith.constant 0 : index
    %c3 = arith.constant 3 : index
    %c0_16 = arith.constant 0 : index
    %21 = vector.load %arg4[%c0_15, %c3, %c0_16] : memref<2x8x128xf32, #tpu.memory_space<vmem>>, vector<1x1x32xf32>
    %22 = vector.shape_cast %21 : vector<1x1x32xf32> to vector<1x32xf32>
    %c0_17 = arith.constant 0 : index
    %c4 = arith.constant 4 : index
    %c0_18 = arith.constant 0 : index
    %23 = vector.load %arg4[%c0_17, %c4, %c0_18] : memref<2x8x128xf32, #tpu.memory_space<vmem>>, vector<1x1x32xf32>
    %24 = vector.shape_cast %23 : vector<1x1x32xf32> to vector<1x32xf32>
    %c0_19 = arith.constant 0 : index
    %c5 = arith.constant 5 : index
    %c0_20 = arith.constant 0 : index
    %25 = vector.load %arg4[%c0_19, %c5, %c0_20] : memref<2x8x128xf32, #tpu.memory_space<vmem>>, vector<1x1x32xf32>
    %26 = vector.shape_cast %25 : vector<1x1x32xf32> to vector<1x32xf32>
    %c0_21 = arith.constant 0 : index
    %c6 = arith.constant 6 : index
    %c0_22 = arith.constant 0 : index
    %27 = vector.load %arg4[%c0_21, %c6, %c0_22] : memref<2x8x128xf32, #tpu.memory_space<vmem>>, vector<1x1x128xf32>
    %28 = vector.shape_cast %27 : vector<1x1x128xf32> to vector<1x128xf32>
    %c0_23 = arith.constant 0 : index
    %c7 = arith.constant 7 : index
    %c0_24 = arith.constant 0 : index
    %29 = vector.load %arg4[%c0_23, %c7, %c0_24] : memref<2x8x128xf32, #tpu.memory_space<vmem>>, vector<1x1x32xf32>
    %30 = vector.shape_cast %29 : vector<1x1x32xf32> to vector<1x32xf32>
    %cst_25 = arith.constant dense<0.000000e+00> : vector<72xf32>
    %31 = vector.multi_reduction <add>, %11, %cst_25 [1] : vector<72x32xf32> to vector<72xf32>
    %32 = vector.shape_cast %31 : vector<72xf32> to vector<72x1xf32>
    %cst_26 = arith.constant 3.200000e+01 : f32
    %33 = vector.broadcast %cst_26 : f32 to vector<72x1xf32>
    %34 = arith.divf %32, %33 : vector<72x1xf32>
    %35 = vector.broadcast %34 : vector<72x1xf32> to vector<72x32xf32>
    %36 = arith.subf %11, %35 : vector<72x32xf32>
    %37 = arith.mulf %36, %36 : vector<72x32xf32>
    %cst_27 = arith.constant dense<0.000000e+00> : vector<72xf32>
    %38 = vector.multi_reduction <add>, %37, %cst_27 [1] : vector<72x32xf32> to vector<72xf32>
    %39 = vector.shape_cast %38 : vector<72xf32> to vector<72x1xf32>
    %cst_28 = arith.constant 3.200000e+01 : f32
    %40 = vector.broadcast %cst_28 : f32 to vector<72x1xf32>
    %41 = arith.divf %39, %40 : vector<72x1xf32>
    %cst_29 = arith.constant 9.99999974E-6 : f32
    %42 = vector.broadcast %cst_29 : f32 to vector<72x1xf32>
    %43 = arith.addf %41, %42 : vector<72x1xf32>
    %44 = math.rsqrt %43 : vector<72x1xf32>
    %45 = vector.broadcast %44 : vector<72x1xf32> to vector<72x32xf32>
    %46 = arith.mulf %36, %45 : vector<72x32xf32>
    %47 = vector.broadcast %16 : vector<1x32xf32> to vector<72x32xf32>
    %48 = arith.mulf %46, %47 : vector<72x32xf32>
    %49 = vector.broadcast %18 : vector<1x32xf32> to vector<72x32xf32>
    %50 = arith.addf %48, %49 : vector<72x32xf32>
    %c0_30 = arith.constant 0 : index
    %c0_31 = arith.constant 0 : index
    %c0_32 = arith.constant 0 : index
    %51 = vector.load %arg5[%c0_30, %c0_31, %c0_32] : memref<2x32x96xf32, #tpu.memory_space<vmem>>, vector<1x32x96xf32>
    %52 = vector.shape_cast %51 : vector<1x32x96xf32> to vector<32x96xf32>
    %cst_33 = arith.constant dense<0.000000e+00> : vector<72x96xf32>
    %53 = tpu.matmul %50, %52, %cst_33 {dimension_numbers = #tpu.dot_dimension_numbers<[1], [0], [0], [1], [0, 0, 1, 1], [], []>} : vector<72x32xf32>, vector<32x96xf32>, vector<72x96xf32> -> vector<72x96xf32>
    %54 = vector.broadcast %20 : vector<1x96xf32> to vector<72x96xf32>
    %55 = arith.addf %53, %54 : vector<72x96xf32>
    %56 = vector.shape_cast %55 : vector<72x96xf32> to vector<3x24x96xf32>
    %57 = vector.extract_strided_slice %56 {offsets = [0, 0, 0], sizes = [3, 24, 16], strides = [1, 1, 1]} : vector<3x24x96xf32> to vector<3x24x16xf32>
    %58 = vector.extract_strided_slice %56 {offsets = [0, 0, 32], sizes = [3, 24, 16], strides = [1, 1, 1]} : vector<3x24x96xf32> to vector<3x24x16xf32>
    %59 = vector.extract_strided_slice %56 {offsets = [0, 0, 64], sizes = [3, 24, 16], strides = [1, 1, 1]} : vector<3x24x96xf32> to vector<3x24x16xf32>
    %cst_34 = arith.constant dense<0.000000e+00> : vector<3x24x24xf32>
    %60 = tpu.matmul %57, %58, %cst_34 {dimension_numbers = #tpu.dot_dimension_numbers<[2], [2], [1], [1], [0, 0, 0, 1, 1, 1], [0], [0]>} : vector<3x24x16xf32>, vector<3x24x16xf32>, vector<3x24x24xf32> -> vector<3x24x24xf32>
    %cst_35 = arith.constant 2.500000e-01 : f32
    %61 = vector.broadcast %cst_35 : f32 to vector<3x24x24xf32>
    %62 = arith.mulf %60, %61 : vector<3x24x24xf32>
    %cst_36 = arith.constant -1.000000e+30 : f32
    %63 = vector.broadcast %cst_36 : f32 to vector<3x24x24xf32>
    %64 = arith.select %14, %62, %63 : vector<3x24x24xi1>, vector<3x24x24xf32>
    %cst_37 = arith.constant dense<0xFF800000> : vector<3x24xf32>
    %65 = vector.multi_reduction <maximumf>, %64, %cst_37 [2] : vector<3x24x24xf32> to vector<3x24xf32>
    %66 = vector.shape_cast %65 : vector<3x24xf32> to vector<3x24x1xf32>
    %67 = vector.broadcast %66 : vector<3x24x1xf32> to vector<3x24x24xf32>
    %68 = arith.subf %64, %67 : vector<3x24x24xf32>
    %69 = math.exp %68 : vector<3x24x24xf32>
    %cst_38 = arith.constant dense<0.000000e+00> : vector<3x24xf32>
    %70 = vector.multi_reduction <add>, %69, %cst_38 [2] : vector<3x24x24xf32> to vector<3x24xf32>
    %71 = vector.shape_cast %70 : vector<3x24xf32> to vector<3x24x1xf32>
    %cst_39 = arith.constant 1.000000e+00 : f32
    %72 = vector.broadcast %cst_39 : f32 to vector<3x24x1xf32>
    %73 = arith.divf %72, %71 : vector<3x24x1xf32>
    %74 = vector.broadcast %73 : vector<3x24x1xf32> to vector<3x24x24xf32>
    %75 = arith.mulf %69, %74 : vector<3x24x24xf32>
    %76 = vector.extract_strided_slice %75 {offsets = [0, 0, 0], sizes = [3, 17, 17], strides = [1, 1, 1]} : vector<3x24x24xf32> to vector<3x17x17xf32>
    %c0_40 = arith.constant 0 : index
    %c0_41 = arith.constant 0 : index
    %c0_42 = arith.constant 0 : index
    %c0_43 = arith.constant 0 : index
    %77 = vector.load %arg10[%c0_40, %c0_41, %c0_42, %c0_43] : memref<3x4x17x17xf32, #tpu.memory_space<vmem>>, vector<3x1x17x17xf32>
    %78 = vector.shape_cast %77 : vector<3x1x17x17xf32> to vector<3x17x17xf32>
    %79 = vector.shape_cast %76 : vector<3x17x17xf32> to vector<3x1x17x17xf32>
    tpu.vector_store %arg10[%c0_40, %c0_41, %c0_42, %c0_43], %79 {strides = array<i32>} : memref<3x4x17x17xf32, #tpu.memory_space<vmem>>, vector<3x1x17x17xf32>,
    %cst_44 = arith.constant dense<0.000000e+00> : vector<3x24x16xf32>
    %80 = tpu.matmul %75, %59, %cst_44 {dimension_numbers = #tpu.dot_dimension_numbers<[2], [1], [1], [2], [0, 0, 0, 1, 1, 2], [0], [0]>} : vector<3x24x24xf32>, vector<3x24x16xf32>, vector<3x24x16xf32> -> vector<3x24x16xf32>
    %81 = vector.extract_strided_slice %56 {offsets = [0, 0, 16], sizes = [3, 24, 16], strides = [1, 1, 1]} : vector<3x24x96xf32> to vector<3x24x16xf32>
    %82 = vector.extract_strided_slice %56 {offsets = [0, 0, 48], sizes = [3, 24, 16], strides = [1, 1, 1]} : vector<3x24x96xf32> to vector<3x24x16xf32>
    %83 = vector.extract_strided_slice %56 {offsets = [0, 0, 80], sizes = [3, 24, 16], strides = [1, 1, 1]} : vector<3x24x96xf32> to vector<3x24x16xf32>
    %cst_45 = arith.constant dense<0.000000e+00> : vector<3x24x24xf32>
    %84 = tpu.matmul %81, %82, %cst_45 {dimension_numbers = #tpu.dot_dimension_numbers<[2], [2], [1], [1], [0, 0, 0, 1, 1, 1], [0], [0]>} : vector<3x24x16xf32>, vector<3x24x16xf32>, vector<3x24x24xf32> -> vector<3x24x24xf32>
    %cst_46 = arith.constant 2.500000e-01 : f32
    %85 = vector.broadcast %cst_46 : f32 to vector<3x24x24xf32>
    %86 = arith.mulf %84, %85 : vector<3x24x24xf32>
    %cst_47 = arith.constant -1.000000e+30 : f32
    %87 = vector.broadcast %cst_47 : f32 to vector<3x24x24xf32>
    %88 = arith.select %14, %86, %87 : vector<3x24x24xi1>, vector<3x24x24xf32>
    %cst_48 = arith.constant dense<0xFF800000> : vector<3x24xf32>
    %89 = vector.multi_reduction <maximumf>, %88, %cst_48 [2] : vector<3x24x24xf32> to vector<3x24xf32>
    %90 = vector.shape_cast %89 : vector<3x24xf32> to vector<3x24x1xf32>
    %91 = vector.broadcast %90 : vector<3x24x1xf32> to vector<3x24x24xf32>
    %92 = arith.subf %88, %91 : vector<3x24x24xf32>
    %93 = math.exp %92 : vector<3x24x24xf32>
    %cst_49 = arith.constant dense<0.000000e+00> : vector<3x24xf32>
    %94 = vector.multi_reduction <add>, %93, %cst_49 [2] : vector<3x24x24xf32> to vector<3x24xf32>
    %95 = vector.shape_cast %94 : vector<3x24xf32> to vector<3x24x1xf32>
    %cst_50 = arith.constant 1.000000e+00 : f32
    %96 = vector.broadcast %cst_50 : f32 to vector<3x24x1xf32>
    %97 = arith.divf %96, %95 : vector<3x24x1xf32>
    %98 = vector.broadcast %97 : vector<3x24x1xf32> to vector<3x24x24xf32>
    %99 = arith.mulf %93, %98 : vector<3x24x24xf32>
    %100 = vector.extract_strided_slice %99 {offsets = [0, 0, 0], sizes = [3, 17, 17], strides = [1, 1, 1]} : vector<3x24x24xf32> to vector<3x17x17xf32>
    %c0_51 = arith.constant 0 : index
    %c1_52 = arith.constant 1 : index
    %c0_53 = arith.constant 0 : index
    %c0_54 = arith.constant 0 : index
    %101 = vector.load %arg10[%c0_51, %c1_52, %c0_53, %c0_54] : memref<3x4x17x17xf32, #tpu.memory_space<vmem>>, vector<3x1x17x17xf32>
    %102 = vector.shape_cast %101 : vector<3x1x17x17xf32> to vector<3x17x17xf32>
    %103 = vector.shape_cast %100 : vector<3x17x17xf32> to vector<3x1x17x17xf32>
    tpu.vector_store %arg10[%c0_51, %c1_52, %c0_53, %c0_54], %103 {strides = array<i32>} : memref<3x4x17x17xf32, #tpu.memory_space<vmem>>, vector<3x1x17x17xf32>,
    %cst_55 = arith.constant dense<0.000000e+00> : vector<3x24x16xf32>
    %104 = tpu.matmul %99, %83, %cst_55 {dimension_numbers = #tpu.dot_dimension_numbers<[2], [1], [1], [2], [0, 0, 0, 1, 1, 2], [0], [0]>} : vector<3x24x24xf32>, vector<3x24x16xf32>, vector<3x24x16xf32> -> vector<3x24x16xf32>
    %105 = tpu.concatenate %80, %104 in 2 : vector<3x24x16xf32>, vector<3x24x16xf32> -> vector<3x24x32xf32>
    %106 = vector.shape_cast %105 : vector<3x24x32xf32> to vector<72x32xf32>
    %c0_56 = arith.constant 0 : index
    %c0_57 = arith.constant 0 : index
    %c0_58 = arith.constant 0 : index
    %107 = vector.load %arg6[%c0_56, %c0_57, %c0_58] : memref<2x32x32xf32, #tpu.memory_space<vmem>>, vector<1x32x32xf32>
    %108 = vector.shape_cast %107 : vector<1x32x32xf32> to vector<32x32xf32>
    %cst_59 = arith.constant dense<0.000000e+00> : vector<72x32xf32>
    %109 = tpu.matmul %106, %108, %cst_59 {dimension_numbers = #tpu.dot_dimension_numbers<[1], [0], [0], [1], [0, 0, 1, 1], [], []>} : vector<72x32xf32>, vector<32x32xf32>, vector<72x32xf32> -> vector<72x32xf32>
    %110 = arith.addf %11, %109 : vector<72x32xf32>
    %111 = vector.broadcast %22 : vector<1x32xf32> to vector<72x32xf32>
    %112 = arith.addf %110, %111 : vector<72x32xf32>
    %cst_60 = arith.constant dense<0.000000e+00> : vector<72xf32>
    %113 = vector.multi_reduction <add>, %112, %cst_60 [1] : vector<72x32xf32> to vector<72xf32>
    %114 = vector.shape_cast %113 : vector<72xf32> to vector<72x1xf32>
    %cst_61 = arith.constant 3.200000e+01 : f32
    %115 = vector.broadcast %cst_61 : f32 to vector<72x1xf32>
    %116 = arith.divf %114, %115 : vector<72x1xf32>
    %117 = vector.broadcast %116 : vector<72x1xf32> to vector<72x32xf32>
    %118 = arith.subf %112, %117 : vector<72x32xf32>
    %119 = arith.mulf %118, %118 : vector<72x32xf32>
    %cst_62 = arith.constant dense<0.000000e+00> : vector<72xf32>
    %120 = vector.multi_reduction <add>, %119, %cst_62 [1] : vector<72x32xf32> to vector<72xf32>
    %121 = vector.shape_cast %120 : vector<72xf32> to vector<72x1xf32>
    %cst_63 = arith.constant 3.200000e+01 : f32
    %122 = vector.broadcast %cst_63 : f32 to vector<72x1xf32>
    %123 = arith.divf %121, %122 : vector<72x1xf32>
    %cst_64 = arith.constant 9.99999974E-6 : f32
    %124 = vector.broadcast %cst_64 : f32 to vector<72x1xf32>
    %125 = arith.addf %123, %124 : vector<72x1xf32>
    %126 = math.rsqrt %125 : vector<72x1xf32>
    %127 = vector.broadcast %126 : vector<72x1xf32> to vector<72x32xf32>
    %128 = arith.mulf %118, %127 : vector<72x32xf32>
    %129 = vector.broadcast %24 : vector<1x32xf32> to vector<72x32xf32>
    %130 = arith.mulf %128, %129 : vector<72x32xf32>
    %131 = vector.broadcast %26 : vector<1x32xf32> to vector<72x32xf32>
    %132 = arith.addf %130, %131 : vector<72x32xf32>
    %c0_65 = arith.constant 0 : index
    %c0_66 = arith.constant 0 : index
    %c0_67 = arith.constant 0 : index
    %133 = vector.load %arg7[%c0_65, %c0_66, %c0_67] : memref<2x32x128xf32, #tpu.memory_space<vmem>>, vector<1x32x128xf32>
    %134 = vector.shape_cast %133 : vector<1x32x128xf32> to vector<32x128xf32>
    %cst_68 = arith.constant dense<0.000000e+00> : vector<72x128xf32>
    %135 = tpu.matmul %132, %134, %cst_68 {dimension_numbers = #tpu.dot_dimension_numbers<[1], [0], [0], [1], [0, 0, 1, 1], [], []>} : vector<72x32xf32>, vector<32x128xf32>, vector<72x128xf32> -> vector<72x128xf32>
    %136 = vector.broadcast %28 : vector<1x128xf32> to vector<72x128xf32>
    %137 = arith.addf %135, %136 : vector<72x128xf32>
    %138 = arith.mulf %137, %137 : vector<72x128xf32>
    %139 = arith.mulf %137, %138 : vector<72x128xf32>
    %cst_69 = arith.constant 4.471500e-02 : f32
    %140 = vector.broadcast %cst_69 : f32 to vector<72x128xf32>
    %141 = arith.mulf %140, %139 : vector<72x128xf32>
    %142 = arith.addf %137, %141 : vector<72x128xf32>
    %cst_70 = arith.constant 0.797884583 : f32
    %143 = vector.broadcast %cst_70 : f32 to vector<72x128xf32>
    %144 = arith.mulf %143, %142 : vector<72x128xf32>
    %145 = math.tanh %144 : vector<72x128xf32>
    %cst_71 = arith.constant 1.000000e+00 : f32
    %146 = vector.broadcast %cst_71 : f32 to vector<72x128xf32>
    %147 = arith.addf %146, %145 : vector<72x128xf32>
    %cst_72 = arith.constant 5.000000e-01 : f32
    %148 = vector.broadcast %cst_72 : f32 to vector<72x128xf32>
    %149 = arith.mulf %148, %147 : vector<72x128xf32>
    %150 = arith.mulf %137, %149 : vector<72x128xf32>
    %c0_73 = arith.constant 0 : index
    %c0_74 = arith.constant 0 : index
    %c0_75 = arith.constant 0 : index
    %151 = vector.load %arg8[%c0_73, %c0_74, %c0_75] : memref<2x128x32xf32, #tpu.memory_space<vmem>>, vector<1x128x32xf32>
    %152 = vector.shape_cast %151 : vector<1x128x32xf32> to vector<128x32xf32>
    %cst_76 = arith.constant dense<0.000000e+00> : vector<72x32xf32>
    %153 = tpu.matmul %150, %152, %cst_76 {dimension_numbers = #tpu.dot_dimension_numbers<[1], [0], [0], [1], [0, 0, 1, 1], [], []>} : vector<72x128xf32>, vector<128x32xf32>, vector<72x32xf32> -> vector<72x32xf32>
    %154 = arith.addf %112, %153 : vector<72x32xf32>
    %155 = vector.broadcast %30 : vector<1x32xf32> to vector<72x32xf32>
    %156 = arith.addf %154, %155 : vector<72x32xf32>
    %c1_77 = arith.constant 1 : index
    %c0_78 = arith.constant 0 : index
    %c0_79 = arith.constant 0 : index
    %157 = vector.load %arg4[%c1_77, %c0_78, %c0_79] : memref<2x8x128xf32, #tpu.memory_space<vmem>>, vector<1x1x32xf32>
    %158 = vector.shape_cast %157 : vector<1x1x32xf32> to vector<1x32xf32>
    %c1_80 = arith.constant 1 : index
    %c1_81 = arith.constant 1 : index
    %c0_82 = arith.constant 0 : index
    %159 = vector.load %arg4[%c1_80, %c1_81, %c0_82] : memref<2x8x128xf32, #tpu.memory_space<vmem>>, vector<1x1x32xf32>
    %160 = vector.shape_cast %159 : vector<1x1x32xf32> to vector<1x32xf32>
    %c1_83 = arith.constant 1 : index
    %c2_84 = arith.constant 2 : index
    %c0_85 = arith.constant 0 : index
    %161 = vector.load %arg4[%c1_83, %c2_84, %c0_85] : memref<2x8x128xf32, #tpu.memory_space<vmem>>, vector<1x1x96xf32>
    %162 = vector.shape_cast %161 : vector<1x1x96xf32> to vector<1x96xf32>
    %c1_86 = arith.constant 1 : index
    %c3_87 = arith.constant 3 : index
    %c0_88 = arith.constant 0 : index
    %163 = vector.load %arg4[%c1_86, %c3_87, %c0_88] : memref<2x8x128xf32, #tpu.memory_space<vmem>>, vector<1x1x32xf32>
    %164 = vector.shape_cast %163 : vector<1x1x32xf32> to vector<1x32xf32>
    %c1_89 = arith.constant 1 : index
    %c4_90 = arith.constant 4 : index
    %c0_91 = arith.constant 0 : index
    %165 = vector.load %arg4[%c1_89, %c4_90, %c0_91] : memref<2x8x128xf32, #tpu.memory_space<vmem>>, vector<1x1x32xf32>
    %166 = vector.shape_cast %165 : vector<1x1x32xf32> to vector<1x32xf32>
    %c1_92 = arith.constant 1 : index
    %c5_93 = arith.constant 5 : index
    %c0_94 = arith.constant 0 : index
    %167 = vector.load %arg4[%c1_92, %c5_93, %c0_94] : memref<2x8x128xf32, #tpu.memory_space<vmem>>, vector<1x1x32xf32>
    %168 = vector.shape_cast %167 : vector<1x1x32xf32> to vector<1x32xf32>
    %c1_95 = arith.constant 1 : index
    %c6_96 = arith.constant 6 : index
    %c0_97 = arith.constant 0 : index
    %169 = vector.load %arg4[%c1_95, %c6_96, %c0_97] : memref<2x8x128xf32, #tpu.memory_space<vmem>>, vector<1x1x128xf32>
    %170 = vector.shape_cast %169 : vector<1x1x128xf32> to vector<1x128xf32>
    %c1_98 = arith.constant 1 : index
    %c7_99 = arith.constant 7 : index
    %c0_100 = arith.constant 0 : index
    %171 = vector.load %arg4[%c1_98, %c7_99, %c0_100] : memref<2x8x128xf32, #tpu.memory_space<vmem>>, vector<1x1x32xf32>
    %172 = vector.shape_cast %171 : vector<1x1x32xf32> to vector<1x32xf32>
    %cst_101 = arith.constant dense<0.000000e+00> : vector<72xf32>
    %173 = vector.multi_reduction <add>, %156, %cst_101 [1] : vector<72x32xf32> to vector<72xf32>
    %174 = vector.shape_cast %173 : vector<72xf32> to vector<72x1xf32>
    %cst_102 = arith.constant 3.200000e+01 : f32
    %175 = vector.broadcast %cst_102 : f32 to vector<72x1xf32>
    %176 = arith.divf %174, %175 : vector<72x1xf32>
    %177 = vector.broadcast %176 : vector<72x1xf32> to vector<72x32xf32>
    %178 = arith.subf %156, %177 : vector<72x32xf32>
    %179 = arith.mulf %178, %178 : vector<72x32xf32>
    %cst_103 = arith.constant dense<0.000000e+00> : vector<72xf32>
    %180 = vector.multi_reduction <add>, %179, %cst_103 [1] : vector<72x32xf32> to vector<72xf32>
    %181 = vector.shape_cast %180 : vector<72xf32> to vector<72x1xf32>
    %cst_104 = arith.constant 3.200000e+01 : f32
    %182 = vector.broadcast %cst_104 : f32 to vector<72x1xf32>
    %183 = arith.divf %181, %182 : vector<72x1xf32>
    %cst_105 = arith.constant 9.99999974E-6 : f32
    %184 = vector.broadcast %cst_105 : f32 to vector<72x1xf32>
    %185 = arith.addf %183, %184 : vector<72x1xf32>
    %186 = math.rsqrt %185 : vector<72x1xf32>
    %187 = vector.broadcast %186 : vector<72x1xf32> to vector<72x32xf32>
    %188 = arith.mulf %178, %187 : vector<72x32xf32>
    %189 = vector.broadcast %158 : vector<1x32xf32> to vector<72x32xf32>
    %190 = arith.mulf %188, %189 : vector<72x32xf32>
    %191 = vector.broadcast %160 : vector<1x32xf32> to vector<72x32xf32>
    %192 = arith.addf %190, %191 : vector<72x32xf32>
    %c1_106 = arith.constant 1 : index
    %c0_107 = arith.constant 0 : index
    %c0_108 = arith.constant 0 : index
    %193 = vector.load %arg5[%c1_106, %c0_107, %c0_108] : memref<2x32x96xf32, #tpu.memory_space<vmem>>, vector<1x32x96xf32>
    %194 = vector.shape_cast %193 : vector<1x32x96xf32> to vector<32x96xf32>
    %cst_109 = arith.constant dense<0.000000e+00> : vector<72x96xf32>
    %195 = tpu.matmul %192, %194, %cst_109 {dimension_numbers = #tpu.dot_dimension_numbers<[1], [0], [0], [1], [0, 0, 1, 1], [], []>} : vector<72x32xf32>, vector<32x96xf32>, vector<72x96xf32> -> vector<72x96xf32>
    %196 = vector.broadcast %162 : vector<1x96xf32> to vector<72x96xf32>
    %197 = arith.addf %195, %196 : vector<72x96xf32>
    %198 = vector.shape_cast %197 : vector<72x96xf32> to vector<3x24x96xf32>
    %199 = vector.extract_strided_slice %198 {offsets = [0, 0, 0], sizes = [3, 24, 16], strides = [1, 1, 1]} : vector<3x24x96xf32> to vector<3x24x16xf32>
    %200 = vector.extract_strided_slice %198 {offsets = [0, 0, 32], sizes = [3, 24, 16], strides = [1, 1, 1]} : vector<3x24x96xf32> to vector<3x24x16xf32>
    %201 = vector.extract_strided_slice %198 {offsets = [0, 0, 64], sizes = [3, 24, 16], strides = [1, 1, 1]} : vector<3x24x96xf32> to vector<3x24x16xf32>
    %cst_110 = arith.constant dense<0.000000e+00> : vector<3x24x24xf32>
    %202 = tpu.matmul %199, %200, %cst_110 {dimension_numbers = #tpu.dot_dimension_numbers<[2], [2], [1], [1], [0, 0, 0, 1, 1, 1], [0], [0]>} : vector<3x24x16xf32>, vector<3x24x16xf32>, vector<3x24x24xf32> -> vector<3x24x24xf32>
    %cst_111 = arith.constant 2.500000e-01 : f32
    %203 = vector.broadcast %cst_111 : f32 to vector<3x24x24xf32>
    %204 = arith.mulf %202, %203 : vector<3x24x24xf32>
    %cst_112 = arith.constant -1.000000e+30 : f32
    %205 = vector.broadcast %cst_112 : f32 to vector<3x24x24xf32>
    %206 = arith.select %14, %204, %205 : vector<3x24x24xi1>, vector<3x24x24xf32>
    %cst_113 = arith.constant dense<0xFF800000> : vector<3x24xf32>
    %207 = vector.multi_reduction <maximumf>, %206, %cst_113 [2] : vector<3x24x24xf32> to vector<3x24xf32>
    %208 = vector.shape_cast %207 : vector<3x24xf32> to vector<3x24x1xf32>
    %209 = vector.broadcast %208 : vector<3x24x1xf32> to vector<3x24x24xf32>
    %210 = arith.subf %206, %209 : vector<3x24x24xf32>
    %211 = math.exp %210 : vector<3x24x24xf32>
    %cst_114 = arith.constant dense<0.000000e+00> : vector<3x24xf32>
    %212 = vector.multi_reduction <add>, %211, %cst_114 [2] : vector<3x24x24xf32> to vector<3x24xf32>
    %213 = vector.shape_cast %212 : vector<3x24xf32> to vector<3x24x1xf32>
    %cst_115 = arith.constant 1.000000e+00 : f32
    %214 = vector.broadcast %cst_115 : f32 to vector<3x24x1xf32>
    %215 = arith.divf %214, %213 : vector<3x24x1xf32>
    %216 = vector.broadcast %215 : vector<3x24x1xf32> to vector<3x24x24xf32>
    %217 = arith.mulf %211, %216 : vector<3x24x24xf32>
    %218 = vector.extract_strided_slice %217 {offsets = [0, 0, 0], sizes = [3, 17, 17], strides = [1, 1, 1]} : vector<3x24x24xf32> to vector<3x17x17xf32>
    %c0_116 = arith.constant 0 : index
    %c2_117 = arith.constant 2 : index
    %c0_118 = arith.constant 0 : index
    %c0_119 = arith.constant 0 : index
    %219 = vector.load %arg10[%c0_116, %c2_117, %c0_118, %c0_119] : memref<3x4x17x17xf32, #tpu.memory_space<vmem>>, vector<3x1x17x17xf32>
    %220 = vector.shape_cast %219 : vector<3x1x17x17xf32> to vector<3x17x17xf32>
    %221 = vector.shape_cast %218 : vector<3x17x17xf32> to vector<3x1x17x17xf32>
    tpu.vector_store %arg10[%c0_116, %c2_117, %c0_118, %c0_119], %221 {strides = array<i32>} : memref<3x4x17x17xf32, #tpu.memory_space<vmem>>, vector<3x1x17x17xf32>,
    %cst_120 = arith.constant dense<0.000000e+00> : vector<3x24x16xf32>
    %222 = tpu.matmul %217, %201, %cst_120 {dimension_numbers = #tpu.dot_dimension_numbers<[2], [1], [1], [2], [0, 0, 0, 1, 1, 2], [0], [0]>} : vector<3x24x24xf32>, vector<3x24x16xf32>, vector<3x24x16xf32> -> vector<3x24x16xf32>
    %223 = vector.extract_strided_slice %198 {offsets = [0, 0, 16], sizes = [3, 24, 16], strides = [1, 1, 1]} : vector<3x24x96xf32> to vector<3x24x16xf32>
    %224 = vector.extract_strided_slice %198 {offsets = [0, 0, 48], sizes = [3, 24, 16], strides = [1, 1, 1]} : vector<3x24x96xf32> to vector<3x24x16xf32>
    %225 = vector.extract_strided_slice %198 {offsets = [0, 0, 80], sizes = [3, 24, 16], strides = [1, 1, 1]} : vector<3x24x96xf32> to vector<3x24x16xf32>
    %cst_121 = arith.constant dense<0.000000e+00> : vector<3x24x24xf32>
    %226 = tpu.matmul %223, %224, %cst_121 {dimension_numbers = #tpu.dot_dimension_numbers<[2], [2], [1], [1], [0, 0, 0, 1, 1, 1], [0], [0]>} : vector<3x24x16xf32>, vector<3x24x16xf32>, vector<3x24x24xf32> -> vector<3x24x24xf32>
    %cst_122 = arith.constant 2.500000e-01 : f32
    %227 = vector.broadcast %cst_122 : f32 to vector<3x24x24xf32>
    %228 = arith.mulf %226, %227 : vector<3x24x24xf32>
    %cst_123 = arith.constant -1.000000e+30 : f32
    %229 = vector.broadcast %cst_123 : f32 to vector<3x24x24xf32>
    %230 = arith.select %14, %228, %229 : vector<3x24x24xi1>, vector<3x24x24xf32>
    %cst_124 = arith.constant dense<0xFF800000> : vector<3x24xf32>
    %231 = vector.multi_reduction <maximumf>, %230, %cst_124 [2] : vector<3x24x24xf32> to vector<3x24xf32>
    %232 = vector.shape_cast %231 : vector<3x24xf32> to vector<3x24x1xf32>
    %233 = vector.broadcast %232 : vector<3x24x1xf32> to vector<3x24x24xf32>
    %234 = arith.subf %230, %233 : vector<3x24x24xf32>
    %235 = math.exp %234 : vector<3x24x24xf32>
    %cst_125 = arith.constant dense<0.000000e+00> : vector<3x24xf32>
    %236 = vector.multi_reduction <add>, %235, %cst_125 [2] : vector<3x24x24xf32> to vector<3x24xf32>
    %237 = vector.shape_cast %236 : vector<3x24xf32> to vector<3x24x1xf32>
    %cst_126 = arith.constant 1.000000e+00 : f32
    %238 = vector.broadcast %cst_126 : f32 to vector<3x24x1xf32>
    %239 = arith.divf %238, %237 : vector<3x24x1xf32>
    %240 = vector.broadcast %239 : vector<3x24x1xf32> to vector<3x24x24xf32>
    %241 = arith.mulf %235, %240 : vector<3x24x24xf32>
    %242 = vector.extract_strided_slice %241 {offsets = [0, 0, 0], sizes = [3, 17, 17], strides = [1, 1, 1]} : vector<3x24x24xf32> to vector<3x17x17xf32>
    %c0_127 = arith.constant 0 : index
    %c3_128 = arith.constant 3 : index
    %c0_129 = arith.constant 0 : index
    %c0_130 = arith.constant 0 : index
    %243 = vector.load %arg10[%c0_127, %c3_128, %c0_129, %c0_130] : memref<3x4x17x17xf32, #tpu.memory_space<vmem>>, vector<3x1x17x17xf32>
    %244 = vector.shape_cast %243 : vector<3x1x17x17xf32> to vector<3x17x17xf32>
    %245 = vector.shape_cast %242 : vector<3x17x17xf32> to vector<3x1x17x17xf32>
    tpu.vector_store %arg10[%c0_127, %c3_128, %c0_129, %c0_130], %245 {strides = array<i32>} : memref<3x4x17x17xf32, #tpu.memory_space<vmem>>, vector<3x1x17x17xf32>,
    %cst_131 = arith.constant dense<0.000000e+00> : vector<3x24x16xf32>
    %246 = tpu.matmul %241, %225, %cst_131 {dimension_numbers = #tpu.dot_dimension_numbers<[2], [1], [1], [2], [0, 0, 0, 1, 1, 2], [0], [0]>} : vector<3x24x24xf32>, vector<3x24x16xf32>, vector<3x24x16xf32> -> vector<3x24x16xf32>
    %247 = tpu.concatenate %222, %246 in 2 : vector<3x24x16xf32>, vector<3x24x16xf32> -> vector<3x24x32xf32>
    %248 = vector.shape_cast %247 : vector<3x24x32xf32> to vector<72x32xf32>
    %c1_132 = arith.constant 1 : index
    %c0_133 = arith.constant 0 : index
    %c0_134 = arith.constant 0 : index
    %249 = vector.load %arg6[%c1_132, %c0_133, %c0_134] : memref<2x32x32xf32, #tpu.memory_space<vmem>>, vector<1x32x32xf32>
    %250 = vector.shape_cast %249 : vector<1x32x32xf32> to vector<32x32xf32>
    %cst_135 = arith.constant dense<0.000000e+00> : vector<72x32xf32>
    %251 = tpu.matmul %248, %250, %cst_135 {dimension_numbers = #tpu.dot_dimension_numbers<[1], [0], [0], [1], [0, 0, 1, 1], [], []>} : vector<72x32xf32>, vector<32x32xf32>, vector<72x32xf32> -> vector<72x32xf32>
    %252 = arith.addf %156, %251 : vector<72x32xf32>
    %253 = vector.broadcast %164 : vector<1x32xf32> to vector<72x32xf32>
    %254 = arith.addf %252, %253 : vector<72x32xf32>
    %cst_136 = arith.constant dense<0.000000e+00> : vector<72xf32>
    %255 = vector.multi_reduction <add>, %254, %cst_136 [1] : vector<72x32xf32> to vector<72xf32>
    %256 = vector.shape_cast %255 : vector<72xf32> to vector<72x1xf32>
    %cst_137 = arith.constant 3.200000e+01 : f32
    %257 = vector.broadcast %cst_137 : f32 to vector<72x1xf32>
    %258 = arith.divf %256, %257 : vector<72x1xf32>
    %259 = vector.broadcast %258 : vector<72x1xf32> to vector<72x32xf32>
    %260 = arith.subf %254, %259 : vector<72x32xf32>
    %261 = arith.mulf %260, %260 : vector<72x32xf32>
    %cst_138 = arith.constant dense<0.000000e+00> : vector<72xf32>
    %262 = vector.multi_reduction <add>, %261, %cst_138 [1] : vector<72x32xf32> to vector<72xf32>
    %263 = vector.shape_cast %262 : vector<72xf32> to vector<72x1xf32>
    %cst_139 = arith.constant 3.200000e+01 : f32
    %264 = vector.broadcast %cst_139 : f32 to vector<72x1xf32>
    %265 = arith.divf %263, %264 : vector<72x1xf32>
    %cst_140 = arith.constant 9.99999974E-6 : f32
    %266 = vector.broadcast %cst_140 : f32 to vector<72x1xf32>
    %267 = arith.addf %265, %266 : vector<72x1xf32>
    %268 = math.rsqrt %267 : vector<72x1xf32>
    %269 = vector.broadcast %268 : vector<72x1xf32> to vector<72x32xf32>
    %270 = arith.mulf %260, %269 : vector<72x32xf32>
    %271 = vector.broadcast %166 : vector<1x32xf32> to vector<72x32xf32>
    %272 = arith.mulf %270, %271 : vector<72x32xf32>
    %273 = vector.broadcast %168 : vector<1x32xf32> to vector<72x32xf32>
    %274 = arith.addf %272, %273 : vector<72x32xf32>
    %c1_141 = arith.constant 1 : index
    %c0_142 = arith.constant 0 : index
    %c0_143 = arith.constant 0 : index
    %275 = vector.load %arg7[%c1_141, %c0_142, %c0_143] : memref<2x32x128xf32, #tpu.memory_space<vmem>>, vector<1x32x128xf32>
    %276 = vector.shape_cast %275 : vector<1x32x128xf32> to vector<32x128xf32>
    %cst_144 = arith.constant dense<0.000000e+00> : vector<72x128xf32>
    %277 = tpu.matmul %274, %276, %cst_144 {dimension_numbers = #tpu.dot_dimension_numbers<[1], [0], [0], [1], [0, 0, 1, 1], [], []>} : vector<72x32xf32>, vector<32x128xf32>, vector<72x128xf32> -> vector<72x128xf32>
    %278 = vector.broadcast %170 : vector<1x128xf32> to vector<72x128xf32>
    %279 = arith.addf %277, %278 : vector<72x128xf32>
    %280 = arith.mulf %279, %279 : vector<72x128xf32>
    %281 = arith.mulf %279, %280 : vector<72x128xf32>
    %cst_145 = arith.constant 4.471500e-02 : f32
    %282 = vector.broadcast %cst_145 : f32 to vector<72x128xf32>
    %283 = arith.mulf %282, %281 : vector<72x128xf32>
    %284 = arith.addf %279, %283 : vector<72x128xf32>
    %cst_146 = arith.constant 0.797884583 : f32
    %285 = vector.broadcast %cst_146 : f32 to vector<72x128xf32>
    %286 = arith.mulf %285, %284 : vector<72x128xf32>
    %287 = math.tanh %286 : vector<72x128xf32>
    %cst_147 = arith.constant 1.000000e+00 : f32
    %288 = vector.broadcast %cst_147 : f32 to vector<72x128xf32>
    %289 = arith.addf %288, %287 : vector<72x128xf32>
    %cst_148 = arith.constant 5.000000e-01 : f32
    %290 = vector.broadcast %cst_148 : f32 to vector<72x128xf32>
    %291 = arith.mulf %290, %289 : vector<72x128xf32>
    %292 = arith.mulf %279, %291 : vector<72x128xf32>
    %c1_149 = arith.constant 1 : index
    %c0_150 = arith.constant 0 : index
    %c0_151 = arith.constant 0 : index
    %293 = vector.load %arg8[%c1_149, %c0_150, %c0_151] : memref<2x128x32xf32, #tpu.memory_space<vmem>>, vector<1x128x32xf32>
    %294 = vector.shape_cast %293 : vector<1x128x32xf32> to vector<128x32xf32>
    %cst_152 = arith.constant dense<0.000000e+00> : vector<72x32xf32>
    %295 = tpu.matmul %292, %294, %cst_152 {dimension_numbers = #tpu.dot_dimension_numbers<[1], [0], [0], [1], [0, 0, 1, 1], [], []>} : vector<72x128xf32>, vector<128x32xf32>, vector<72x32xf32> -> vector<72x32xf32>
    %296 = arith.addf %254, %295 : vector<72x32xf32>
    %297 = vector.broadcast %172 : vector<1x32xf32> to vector<72x32xf32>
    %298 = arith.addf %296, %297 : vector<72x32xf32>
    %299 = vector.shape_cast %298 : vector<72x32xf32> to vector<3x24x32xf32>
    %300 = vector.extract_strided_slice %299 {offsets = [0, 0, 0], sizes = [3, 1, 32], strides = [1, 1, 1]} : vector<3x24x32xf32> to vector<3x1x32xf32>
    %301 = vector.shape_cast %300 : vector<3x1x32xf32> to vector<3x32xf32>
    %cst_153 = arith.constant dense<0.000000e+00> : vector<3xf32>
    %302 = vector.multi_reduction <add>, %301, %cst_153 [1] : vector<3x32xf32> to vector<3xf32>
    %303 = vector.shape_cast %302 : vector<3xf32> to vector<3x1xf32>
    %cst_154 = arith.constant 3.200000e+01 : f32
    %304 = vector.broadcast %cst_154 : f32 to vector<3x1xf32>
    %305 = arith.divf %303, %304 : vector<3x1xf32>
    %306 = vector.broadcast %305 : vector<3x1xf32> to vector<3x32xf32>
    %307 = arith.subf %301, %306 : vector<3x32xf32>
    %308 = arith.mulf %307, %307 : vector<3x32xf32>
    %cst_155 = arith.constant dense<0.000000e+00> : vector<3xf32>
    %309 = vector.multi_reduction <add>, %308, %cst_155 [1] : vector<3x32xf32> to vector<3xf32>
    %310 = vector.shape_cast %309 : vector<3xf32> to vector<3x1xf32>
    %cst_156 = arith.constant 3.200000e+01 : f32
    %311 = vector.broadcast %cst_156 : f32 to vector<3x1xf32>
    %312 = arith.divf %310, %311 : vector<3x1xf32>
    %cst_157 = arith.constant 9.99999974E-6 : f32
    %313 = vector.broadcast %cst_157 : f32 to vector<3x1xf32>
    %314 = arith.addf %312, %313 : vector<3x1xf32>
    %315 = math.rsqrt %314 : vector<3x1xf32>
    %316 = vector.broadcast %315 : vector<3x1xf32> to vector<3x32xf32>
    %317 = arith.mulf %307, %316 : vector<3x32xf32>
    %318 = vector.broadcast %1 : vector<1x32xf32> to vector<3x32xf32>
    %319 = arith.mulf %317, %318 : vector<3x32xf32>
    %320 = vector.broadcast %2 : vector<1x32xf32> to vector<3x32xf32>
    %321 = arith.addf %319, %320 : vector<3x32xf32>
    %c0_158 = arith.constant 0 : index
    %c0_159 = arith.constant 0 : index
    %c0_160 = arith.constant 0 : index
    %322 = vector.load %arg9[%c0_158, %c0_159, %c0_160] : memref<3x1x32xf32, #tpu.memory_space<vmem>>, vector<3x1x32xf32>
    %323 = vector.shape_cast %322 : vector<3x1x32xf32> to vector<3x32xf32>
    %324 = vector.shape_cast %321 : vector<3x32xf32> to vector<3x1x32xf32>
    tpu.vector_store %arg9[%c0_158, %c0_159, %c0_160], %324 {strides = array<i32>} : memref<3x1x32xf32, #tpu.memory_space<vmem>>, vector<3x1x32xf32>,
    return
  }
  func.func @transform_0(%arg0: i32) -> (i32, i32, i32) {
    %c0_i32 = arith.constant 0 : i32
    %c0_i32_0 = arith.constant 0 : i32
    %c0_i32_1 = arith.constant 0 : i32
    return %arg0, %c0_i32, %c0_i32_0 : i32, i32, i32
  }
  func.func @transform_1(%arg0: i32) -> (i32, i32) {
    %c0_i32 = arith.constant 0 : i32
    %c0_i32_0 = arith.constant 0 : i32
    %c0_i32_1 = arith.constant 0 : i32
    return %c0_i32, %c0_i32_0 : i32, i32
  }
  func.func @transform_2(%arg0: i32) -> (i32, i32) {
    %c0_i32 = arith.constant 0 : i32
    %c0_i32_0 = arith.constant 0 : i32
    %c0_i32_1 = arith.constant 0 : i32
    return %c0_i32, %c0_i32_0 : i32, i32
  }
  func.func @transform_3(%arg0: i32) -> (i32, i32, i32) {
    %c0_i32 = arith.constant 0 : i32
    %c0_i32_0 = arith.constant 0 : i32
    %c0_i32_1 = arith.constant 0 : i32
    %c0_i32_2 = arith.constant 0 : i32
    return %c0_i32, %c0_i32_0, %c0_i32_1 : i32, i32, i32
  }
  func.func @transform_4(%arg0: i32) -> (i32, i32, i32) {
    %c0_i32 = arith.constant 0 : i32
    %c0_i32_0 = arith.constant 0 : i32
    %c0_i32_1 = arith.constant 0 : i32
    %c0_i32_2 = arith.constant 0 : i32
    return %c0_i32, %c0_i32_0, %c0_i32_1 : i32, i32, i32
  }
  func.func @transform_5(%arg0: i32) -> (i32, i32, i32) {
    %c0_i32 = arith.constant 0 : i32
    %c0_i32_0 = arith.constant 0 : i32
    %c0_i32_1 = arith.constant 0 : i32
    %c0_i32_2 = arith.constant 0 : i32
    return %c0_i32, %c0_i32_0, %c0_i32_1 : i32, i32, i32
  }
  func.func @transform_6(%arg0: i32) -> (i32, i32, i32) {
    %c0_i32 = arith.constant 0 : i32
    %c0_i32_0 = arith.constant 0 : i32
    %c0_i32_1 = arith.constant 0 : i32
    %c0_i32_2 = arith.constant 0 : i32
    return %c0_i32, %c0_i32_0, %c0_i32_1 : i32, i32, i32
  }
  func.func @transform_7(%arg0: i32) -> (i32, i32, i32) {
    %c0_i32 = arith.constant 0 : i32
    %c0_i32_0 = arith.constant 0 : i32
    %c0_i32_1 = arith.constant 0 : i32
    %c0_i32_2 = arith.constant 0 : i32
    return %c0_i32, %c0_i32_0, %c0_i32_1 : i32, i32, i32
  }
  func.func @transform_8(%arg0: i32) -> (i32, i32, i32) {
    %c0_i32 = arith.constant 0 : i32
    %c0_i32_0 = arith.constant 0 : i32
    %c0_i32_1 = arith.constant 0 : i32
    return %arg0, %c0_i32, %c0_i32_0 : i32, i32, i32
  }
  func.func @transform_9(%arg0: i32) -> (i32, i32, i32, i32) {
    %c0_i32 = arith.constant 0 : i32
    %c0_i32_0 = arith.constant 0 : i32
    %c0_i32_1 = arith.constant 0 : i32
    %c0_i32_2 = arith.constant 0 : i32
    return %arg0, %c0_i32, %c0_i32_0, %c0_i32_1 : i32, i32, i32, i32
  }
}

</mosaic_0001>

<llo_original>
// kernel: _recorder_forward.1
$region0: #{_recorder_forward.1}
  #allocation0 [shape = 'u32[]', space=smem, size = 0x4, offset = 0x4, fixed_abs, tag = 'smem constant byte address 0x4 - core index']
  #allocation1 [shape = 'u32[144,128]{1,0:T(1,128)}', space=vmem, size = 0x12000, scoped, tag = 'internal scratch']
  %s0 = inlined_call_operand.vmem [shape: f32[6,24,64], index: 0, kind: input, shape index: {}]
  %s1 = inlined_call_operand.vmem [shape: f32[64,32], index: 1, kind: input, shape index: {}]
  %s2 = inlined_call_operand.vmem [shape: f32[32,32], index: 2, kind: input, shape index: {}]
  %s3 = inlined_call_operand.vmem [shape: f32[2,8,128], index: 3, kind: input, shape index: {}]
  %s4 = inlined_call_operand.vmem [shape: f32[2,32,96], index: 4, kind: input, shape index: {}]
  %s5 = inlined_call_operand.vmem [shape: f32[2,32,32], index: 5, kind: input, shape index: {}]
  %s6 = inlined_call_operand.vmem [shape: f32[2,32,128], index: 6, kind: input, shape index: {}]
  %s7 = inlined_call_operand.vmem [shape: f32[2,128,32], index: 7, kind: input, shape index: {}]
  %s8 = inlined_call_operand.vmem [shape: f32[6,1,32], index: 8, kind: output, shape index: {0}]
  %s9 = inlined_call_operand.vmem [shape: f32[6,4,17,17], index: 9, kind: output, shape index: {1}]
  %10 = xla_tuple %s8, %s9
  %s11 = sld [smem:[#allocation0]]
  $region73: #{_recorder_forward.1} parent=0
    _
  %s13 = ssub.s32 1, %s11
  %s14 = scalar_select 0, %s13, %s11
  loop: start=0, step=1, limit=4
  $region2: #{_recorder_forward.1} parent=0 // loop_pre_header
    _
  $region3: #{_recorder_forward.1} parent=0 // loop_header
    %s16 = sphi 0, %s20
    %p17 = scmp.ge.s32.totalorder %s16, 4
    %s26 = sphi 0, %s28
    %s29 = sphi 0, %s26
    %s30 = sphi 0, %s29
    %s46 = sphi 0, %s30
    %s50 = sphi 0, %s50
    %s52 = sphi 0, %s50
    %s53 = sphi 0, %s52
    %s67 = sphi 0, %s53
    %s71 = sphi 0, %s71
    %s73 = sphi 0, %s71
    %s74 = sphi 0, %s73
    %s88 = sphi 0, %s74
    %s92 = sphi 0, %s92
    %s94 = sphi 0, %s92
    %s95 = sphi 0, %s94
    %s109 = sphi 0, %s95
    %s113 = sphi 0, %s113
    %s115 = sphi 0, %s113
    %s116 = sphi 0, %s115
    %s130 = sphi 0, %s116
    %s134 = sphi 0, %s134
    %s136 = sphi 0, %s134
    %s137 = sphi 0, %s136
    %s151 = sphi 0, %s137
    %s155 = sphi 0, %s155
    %s157 = sphi 0, %s155
    %s158 = sphi 0, %s157
    %s172 = sphi 0, %s158
    %s176 = sphi 0, %s176
    %s178 = sphi 0, %s176
    %s179 = sphi 0, %s178
    %s193 = sphi 0, %s179
    %s199 = sphi 0, %s201
    %s202 = sphi 0, %s199
    %s203 = sphi 0, %s202
    %s219 = sphi 0, %s203
    %s225 = sphi 0, %s227
    %s228 = sphi 0, %s225
    %s229 = sphi 0, %s228
    %s245 = sphi 0, %s229
  $region4: #{_recorder_forward.1} parent=0 // loop_header_branch
    %19 = sbr.rel (%p17) target = $region8
  $region5: #{_recorder_forward.1} parent=0 // loop_body
    %s21 = ssub.s32 %s16, 1
    %s22 = ssub.s32 %s16, 2
    %s23 = sadd.s32 %s16, 1
    %s24 = ssub.s32 %s16, %s23
    %p25 = scmp.eq.s32.totalorder %s24, 0
    %s27 = sadd.s32 %s26, 1
    %s28 = scalar_select %p25, %s26, %s27
    %p31 = pneg %p25
    %p32 = scmp.eq.s32.totalorder %s16, 1
    %p33 = por %p31, %p32
    %p34 = scmp.ne.s32.totalorder %s26, %s29
    %p35 = scmp.eq.s32.totalorder %s16, 0
    %p36 = por %p34, %p35
    %p37 = scmp.ne.s32.totalorder %s26, %s29
    %p38 = scmp.eq.s32.totalorder %s21, 1
    %p39 = por %p37, %p38
    %p40 = scmp.ne.s32.totalorder %s29, %s30
    %p41 = scmp.eq.s32.totalorder %s21, 0
    %p42 = por %p40, %p41
    %p43 = scmp.ne.s32.totalorder %s29, %s30
    %p44 = scmp.eq.s32.totalorder %s22, 1
    %p45 = por %p43, %p44
    %p47 = scmp.ne.s32.totalorder %s30, %s46
    %p48 = scmp.eq.s32.totalorder %s22, 0
    %p49 = por %p47, %p48
    %s51 = sadd.s32 %s50, 1
    %p54 = scmp.eq.s32.totalorder %s16, 1
    %p55 = scmp.ne.s32.totalorder %s50, %s52
    %p56 = scmp.eq.s32.totalorder %s16, 0
    %p57 = por %p55, %p56
    %p58 = scmp.ne.s32.totalorder %s50, %s52
    %p59 = scmp.eq.s32.totalorder %s21, 1
    %p60 = por %p58, %p59
    %p61 = scmp.ne.s32.totalorder %s52, %s53
    %p62 = scmp.eq.s32.totalorder %s21, 0
    %p63 = por %p61, %p62
    %p64 = scmp.ne.s32.totalorder %s52, %s53
    %p65 = scmp.eq.s32.totalorder %s22, 1
    %p66 = por %p64, %p65
    %p68 = scmp.ne.s32.totalorder %s53, %s67
    %p69 = scmp.eq.s32.totalorder %s22, 0
    %p70 = por %p68, %p69
    %s72 = sadd.s32 %s71, 1
    %p75 = scmp.eq.s32.totalorder %s16, 1
    %p76 = scmp.ne.s32.totalorder %s71, %s73
    %p77 = scmp.eq.s32.totalorder %s16, 0
    %p78 = por %p76, %p77
    %p79 = scmp.ne.s32.totalorder %s71, %s73
    %p80 = scmp.eq.s32.totalorder %s21, 1
    %p81 = por %p79, %p80
    %p82 = scmp.ne.s32.totalorder %s73, %s74
    %p83 = scmp.eq.s32.totalorder %s21, 0
    %p84 = por %p82, %p83
    %p85 = scmp.ne.s32.totalorder %s73, %s74
    %p86 = scmp.eq.s32.totalorder %s22, 1
    %p87 = por %p85, %p86
    %p89 = scmp.ne.s32.totalorder %s74, %s88
    %p90 = scmp.eq.s32.totalorder %s22, 0
    %p91 = por %p89, %p90
    %s93 = sadd.s32 %s92, 1
    %p96 = scmp.eq.s32.totalorder %s16, 1
    %p97 = scmp.ne.s32.totalorder %s92, %s94
    %p98 = scmp.eq.s32.totalorder %s16, 0
    %p99 = por %p97, %p98
    %p100 = scmp.ne.s32.totalorder %s92, %s94
    %p101 = scmp.eq.s32.totalorder %s21, 1
    %p102 = por %p100, %p101
    %p103 = scmp.ne.s32.totalorder %s94, %s95
    %p104 = scmp.eq.s32.totalorder %s21, 0
    %p105 = por %p103, %p104
    %p106 = scmp.ne.s32.totalorder %s94, %s95
    %p107 = scmp.eq.s32.totalorder %s22, 1
    %p108 = por %p106, %p107
    %p110 = scmp.ne.s32.totalorder %s95, %s109
    %p111 = scmp.eq.s32.totalorder %s22, 0
    %p112 = por %p110, %p111
    %s114 = sadd.s32 %s113, 1
    %p117 = scmp.eq.s32.totalorder %s16, 1
    %p118 = scmp.ne.s32.totalorder %s113, %s115
    %p119 = scmp.eq.s32.totalorder %s16, 0
    %p120 = por %p118, %p119
    %p121 = scmp.ne.s32.totalorder %s113, %s115
    %p122 = scmp.eq.s32.totalorder %s21, 1
    %p123 = por %p121, %p122
    %p124 = scmp.ne.s32.totalorder %s115, %s116
    %p125 = scmp.eq.s32.totalorder %s21, 0
    %p126 = por %p124, %p125
    %p127 = scmp.ne.s32.totalorder %s115, %s116
    %p128 = scmp.eq.s32.totalorder %s22, 1
    %p129 = por %p127, %p128
    %p131 = scmp.ne.s32.totalorder %s116, %s130
    %p132 = scmp.eq.s32.totalorder %s22, 0
    %p133 = por %p131, %p132
    %s135 = sadd.s32 %s134, 1
    %p138 = scmp.eq.s32.totalorder %s16, 1
    %p139 = scmp.ne.s32.totalorder %s134, %s136
    %p140 = scmp.eq.s32.totalorder %s16, 0
    %p141 = por %p139, %p140
    %p142 = scmp.ne.s32.totalorder %s134, %s136
    %p143 = scmp.eq.s32.totalorder %s21, 1
    %p144 = por %p142, %p143
    %p145 = scmp.ne.s32.totalorder %s136, %s137
    %p146 = scmp.eq.s32.totalorder %s21, 0
    %p147 = por %p145, %p146
    %p148 = scmp.ne.s32.totalorder %s136, %s137
    %p149 = scmp.eq.s32.totalorder %s22, 1
    %p150 = por %p148, %p149
    %p152 = scmp.ne.s32.totalorder %s137, %s151
    %p153 = scmp.eq.s32.totalorder %s22, 0
    %p154 = por %p152, %p153
    %s156 = sadd.s32 %s155, 1
    %p159 = scmp.eq.s32.totalorder %s16, 1
    %p160 = scmp.ne.s32.totalorder %s155, %s157
    %p161 = scmp.eq.s32.totalorder %s16, 0
    %p162 = por %p160, %p161
    %p163 = scmp.ne.s32.totalorder %s155, %s157
    %p164 = scmp.eq.s32.totalorder %s21, 1
    %p165 = por %p163, %p164
    %p166 = scmp.ne.s32.totalorder %s157, %s158
    %p167 = scmp.eq.s32.totalorder %s21, 0
    %p168 = por %p166, %p167
    %p169 = scmp.ne.s32.totalorder %s157, %s158
    %p170 = scmp.eq.s32.totalorder %s22, 1
    %p171 = por %p169, %p170
    %p173 = scmp.ne.s32.totalorder %s158, %s172
    %p174 = scmp.eq.s32.totalorder %s22, 0
    %p175 = por %p173, %p174
    %s177 = sadd.s32 %s176, 1
    %p180 = scmp.eq.s32.totalorder %s16, 1
    %p181 = scmp.ne.s32.totalorder %s176, %s178
    %p182 = scmp.eq.s32.totalorder %s16, 0
    %p183 = por %p181, %p182
    %p184 = scmp.ne.s32.totalorder %s176, %s178
    %p185 = scmp.eq.s32.totalorder %s21, 1
    %p186 = por %p184, %p185
    %p187 = scmp.ne.s32.totalorder %s178, %s179
    %p188 = scmp.eq.s32.totalorder %s21, 0
    %p189 = por %p187, %p188
    %p190 = scmp.ne.s32.totalorder %s178, %s179
    %p191 = scmp.eq.s32.totalorder %s22, 1
    %p192 = por %p190, %p191
    %p194 = scmp.ne.s32.totalorder %s179, %s193
    %p195 = scmp.eq.s32.totalorder %s22, 0
    %p196 = por %p194, %p195
    %s197 = ssub.s32 %s16, %s23
    %p198 = scmp.eq.s32.totalorder %s197, 0
    %s200 = sadd.s32 %s199, 1
    %s201 = scalar_select %p198, %s199, %s200
    %p204 = pneg %p198
    %p205 = scmp.eq.s32.totalorder %s16, 1
    %p206 = por %p204, %p205
    %p207 = scmp.ne.s32.totalorder %s199, %s202
    %p208 = scmp.eq.s32.totalorder %s16, 0
    %p209 = por %p207, %p208
    %p210 = scmp.ne.s32.totalorder %s199, %s202
    %p211 = scmp.eq.s32.totalorder %s21, 1
    %p212 = por %p210, %p211
    %p213 = scmp.ne.s32.totalorder %s202, %s203
    %p214 = scmp.eq.s32.totalorder %s21, 0
    %p215 = por %p213, %p214
    %p216 = scmp.ne.s32.totalorder %s202, %s203
    %p217 = scmp.eq.s32.totalorder %s22, 1
    %p218 = por %p216, %p217
    %p220 = scmp.ne.s32.totalorder %s203, %s219
    %p221 = scmp.eq.s32.totalorder %s22, 0
    %p222 = por %p220, %p221
    %s223 = ssub.s32 %s16, %s23
    %p224 = scmp.eq.s32.totalorder %s223, 0
    %s226 = sadd.s32 %s225, 1
    %s227 = scalar_select %p224, %s225, %s226
    %p230 = pneg %p224
    %p231 = scmp.eq.s32.totalorder %s16, 1
    %p232 = por %p230, %p231
    %p233 = scmp.ne.s32.totalorder %s225, %s228
    %p234 = scmp.eq.s32.totalorder %s16, 0
    %p235 = por %p233, %p234
    %p236 = scmp.ne.s32.totalorder %s225, %s228
    %p237 = scmp.eq.s32.totalorder %s21, 1
    %p238 = por %p236, %p237
    %p239 = scmp.ne.s32.totalorder %s228, %s229
    %p240 = scmp.eq.s32.totalorder %s21, 0
    %p241 = por %p239, %p240
    %p242 = scmp.ne.s32.totalorder %s228, %s229
    %p243 = scmp.eq.s32.totalorder %s22, 1
    %p244 = por %p242, %p243
    %p246 = scmp.ne.s32.totalorder %s229, %s245
    %p247 = scmp.eq.s32.totalorder %s22, 0
    %p248 = por %p246, %p247
    %p249 = scmp.le.s32.totalorder 1, %s16
    %p250 = scmp.lt.s32.totalorder %s16, 3
    %p251 = pnand %p249, %p250
    %p252 = pneg %p251
    // Predicated region
    $region9: #{_recorder_forward.1} parent=5 // pred_check
      _
    $region10: #{_recorder_forward.1} parent=5 // pred_check_branch
      %254 = sbr.rel (%p251) target = $region12
    $region11: #{_recorder_forward.1} parent=5 // pred_region
      %s255 = ssub.s32 %s16, 1
      // Predicated region
      $region13: #{_recorder_forward.1} parent=11 // pred_check
        %p256 = pneg %p63
      $region14: #{_recorder_forward.1} parent=11 // pred_check_branch
        %258 = sbr.rel (%p256) target = $region16
      $region15: #{_recorder_forward.1} parent=11 // pred_region
        _
      $region16: #{_recorder_forward.1} parent=11 // pred_fallthru
        _
      // Predicated region
      $region17: #{_recorder_forward.1} parent=11 // pred_check
        %p259 = pneg %p84
      $region18: #{_recorder_forward.1} parent=11 // pred_check_branch
        %261 = sbr.rel (%p259) target = $region20
      $region19: #{_recorder_forward.1} parent=11 // pred_region
        _
      $region20: #{_recorder_forward.1} parent=11 // pred_fallthru
        _
      // Predicated region
      $region21: #{_recorder_forward.1} parent=11 // pred_check
        %p262 = pneg %p105
      $region22: #{_recorder_forward.1} parent=11 // pred_check_branch
        %264 = sbr.rel (%p262) target = $region24
      $region23: #{_recorder_forward.1} parent=11 // pred_region
        _
      $region24: #{_recorder_forward.1} parent=11 // pred_fallthru
        _
      // Predicated region
      $region25: #{_recorder_forward.1} parent=11 // pred_check
        %p265 = pneg %p126
      $region26: #{_recorder_forward.1} parent=11 // pred_check_branch
        %267 = sbr.rel (%p265) target = $region28
      $region27: #{_recorder_forward.1} parent=11 // pred_region
        _
      $region28: #{_recorder_forward.1} parent=11 // pred_fallthru
        _
      // Predicated region
      $region29: #{_recorder_forward.1} parent=11 // pred_check
        %p268 = pneg %p147
      $region30: #{_recorder_forward.1} parent=11 // pred_check_branch
        %270 = sbr.rel (%p268) target = $region32
      $region31: #{_recorder_forward.1} parent=11 // pred_region
        _
      $region32: #{_recorder_forward.1} parent=11 // pred_fallthru
        _
      // Predicated region
      $region33: #{_recorder_forward.1} parent=11 // pred_check
        %p271 = pneg %p168
      $region34: #{_recorder_forward.1} parent=11 // pred_check_branch
        %273 = sbr.rel (%p271) target = $region36
      $region35: #{_recorder_forward.1} parent=11 // pred_region
        _
      $region36: #{_recorder_forward.1} parent=11 // pred_fallthru
        _
      // Predicated region
      $region37: #{_recorder_forward.1} parent=11 // pred_check
        %p274 = pneg %p189
      $region38: #{_recorder_forward.1} parent=11 // pred_check_branch
        %276 = sbr.rel (%p274) target = $region40
      $region39: #{_recorder_forward.1} parent=11 // pred_region
        _
      $region40: #{_recorder_forward.1} parent=11 // pred_fallthru
        _
    $region12: #{_recorder_forward.1} parent=5 // pred_fallthru
      _
    %p277 = scmp.lt.s32.totalorder %s16, 2
    // Predicated region
    $region41: #{_recorder_forward.1} parent=5 // pred_check
      %p278 = pneg %p277
    $region42: #{_recorder_forward.1} parent=5 // pred_check_branch
      %280 = sbr.rel (%p278) target = $region44
    $region43: #{_recorder_forward.1} parent=5 // pred_region
      // Predicated region
      $region45: #{_recorder_forward.1} parent=43 // pred_check
        %p281 = pneg %p36
      $region46: #{_recorder_forward.1} parent=43 // pred_check_branch
        %283 = sbr.rel (%p281) target = $region48
      $region47: #{_recorder_forward.1} parent=43 // pred_region
        %s284 = smul.u32 3, %s16
        %p285 = scmp.lt.s32.totalorder %s284, 5
        %s286 = scalar_select %p285, %s284, 5
        %s287 = smul.addr %s286, 3
        %s288 = smul.addr %s287, 8
        %s289 = scalar_lea.vmem %s0, %s288
        %s290 = smul.u32 3, %s16
      $region48: #{_recorder_forward.1} parent=43 // pred_fallthru
        _
    $region44: #{_recorder_forward.1} parent=5 // pred_fallthru
      _
    %p291 = scmp.le.s32.totalorder 1, %s16
    %p292 = scmp.lt.s32.totalorder %s16, 3
    %p293 = pnand %p291, %p292
    %p294 = pneg %p293
    // Predicated region
    $region49: #{_recorder_forward.1} parent=5 // pred_check
      _
    $region50: #{_recorder_forward.1} parent=5 // pred_check_branch
      %296 = sbr.rel (%p293) target = $region52
    $region51: #{_recorder_forward.1} parent=5 // pred_region
      %s297 = ssub.s32 %s16, 1
      %s298 = smul.u32 3, %s21
      %p299 = scmp.lt.s32.totalorder %s298, 5
      %s300 = scalar_select %p299, %s298, 5
      %s301 = smul.addr %s300, 3
      %s302 = smul.addr %s301, 8
      %s303 = scalar_lea.vmem %s0, %s302
      %p304 = pneg %p42
      %p305 = pneg %p39
      %p306 = pneg %p63
      %p307 = pneg %p60
      %p308 = pneg %p84
      %p309 = pneg %p81
      %p310 = pneg %p105
      %p311 = pneg %p102
      %p312 = pneg %p126
      %p313 = pneg %p123
      %p314 = pneg %p147
      %p315 = pneg %p144
      %p316 = pneg %p168
      %p317 = pneg %p165
      %p318 = pneg %p189
      %p319 = pneg %p186
      %p320 = pneg %p215
      %p321 = pneg %p212
      %s322 = smul.u32 3, %s21
      %p323 = scmp.lt.s32.totalorder %s322, 5
      %s324 = scalar_select %p323, %s322, 5
      %s325 = scalar_lea.vmem %s8, %s324
      %p326 = pneg %p241
      %p327 = pneg %p238
      %s328 = smul.u32 3, %s21
      %p329 = scmp.lt.s32.totalorder %s328, 5
      %s330 = scalar_select %p329, %s328, 5
      %s331 = smul.addr %s330, 12
      %s332 = smul.addr %s331, 8
      %s333 = scalar_lea.vmem %s9, %s332
      %s334 = smul.u32 3, %s21
      %p335 = scmp.lt.s32.totalorder %s334, 5
      %s336 = scalar_select %p335, %s334, 5
      %s337 = smul.addr %s336, 3
      %s338 = smul.addr %s337, 8
      %s339 = scalar_lea.vmem %s0, %s338
      %s340 = smul.u32 3, %s21
      %s341 = smul.u32 3, %s21
      %p342 = scmp.lt.s32.totalorder %s341, 5
      %s343 = scalar_select %p342, %s341, 5
      %s344 = scalar_lea.vmem %s8, %s343
      %s345 = smul.u32 3, %s21
      %s346 = smul.u32 3, %s21
      %p347 = scmp.lt.s32.totalorder %s346, 5
      %s348 = scalar_select %p347, %s346, 5
      %s349 = smul.addr %s348, 12
      %s350 = smul.addr %s349, 8
      %s351 = scalar_lea.vmem %s9, %s350
      %s352 = smul.u32 3, %s21
      %v353 = vld [vmem:[%s2] sm:$0xff]
      %v354 = vld [vmem:[%s2 + $0x8] sm:$0xff]
      %v355 = vld [vmem:[%s2 + $0x10] sm:$0xff]
      %v356 = vld [vmem:[%s2 + $0x18] sm:$0x1]
      %v357 = vld [vmem:[%s2 + $0x19] sm:$0x1]
      %v358 = vld [vmem:[%s339] sm:$0xff]
      %v359 = vld [vmem:[%s339 + $0x8] sm:$0xff]
      %v360 = vld [vmem:[%s339 + $0x10] sm:$0xff]
      %v361 = vld [vmem:[%s339 + $0x18] sm:$0xff]
      %v362 = vld [vmem:[%s339 + $0x20] sm:$0xff]
      %v363 = vld [vmem:[%s339 + $0x28] sm:$0xff]
      %v364 = vld [vmem:[%s339 + $0x30] sm:$0xff]
      %v365 = vld [vmem:[%s339 + $0x38] sm:$0xff]
      %v366 = vld [vmem:[%s339 + $0x40] sm:$0xff]
      %v367 = vld [vmem:[%s1] sm:$0xff]
      %v368 = vld [vmem:[%s1 + $0x8] sm:$0xff]
      %v369 = vld [vmem:[%s1 + $0x10] sm:$0xff]
      %v370 = vld [vmem:[%s1 + $0x18] sm:$0xff]
      %v371 = vld [vmem:[%s1 + $0x20] sm:$0xff]
      %v372 = vld [vmem:[%s1 + $0x28] sm:$0xff]
      %v373 = vld [vmem:[%s1 + $0x30] sm:$0xff]
      %v374 = vld [vmem:[%s1 + $0x38] sm:$0xff]
      %vm375 = vcmask 523264
      %v377 = vsel %vm375, %v358, 0
      %v380 = vsel %vm375, %v359, 0
      %v383 = vsel %vm375, %v360, 0
      %v386 = vsel %vm375, %v361, 0
      %v389 = vsel %vm375, %v362, 0
      %v392 = vsel %vm375, %v363, 0
      %v395 = vsel %vm375, %v364, 0
      %v398 = vsel %vm375, %v365, 0
      %v401 = vsel %vm375, %v366, 0
      %403 = vmatprep.subr.mxu0 0.0
      %404 = vmatpush1.msra.mxu0 %v367
      %405 = vmatprep.subr.mxu0 0.0
      %406 = vmatpush1.msra.mxu0 %v368
      %407 = vmatprep.subr.mxu0 0.0
      %408 = vmatpush1.msra.mxu0 %v369
      %409 = vmatprep.subr.mxu0 0.0
      %410 = vmatpush1.msra.mxu0 %v370
      %411 = vmatprep.subr.mxu0 0.0
      %412 = vmatpush1.msra.mxu0 %v371
      %413 = vmatprep.subr.mxu0 0.0
      %414 = vmatpush1.msra.mxu0 %v372
      %415 = vmatprep.subr.mxu0 0.0
      %416 = vmatpush1.msra.mxu0 %v373
      %417 = vmatprep.subr.mxu0 0.0
      %418 = vmatpush1.msra.mxu0 %v374
      %419 = vmatprep.subr.mxu0 0.0
      %420 = vmatpush1.msra.mxu0 0.0
      %421 = vmatprep.subr.mxu0 0.0
      %422 = vmatpush1.msra.mxu0 0.0
      %423 = vmatprep.subr.mxu0 0.0
      %424 = vmatpush1.msra.mxu0 0.0
      %425 = vmatprep.subr.mxu0 0.0
      %426 = vmatpush1.msra.mxu0 0.0
      %427 = vmatprep.subr.mxu0 0.0
      %428 = vmatpush1.msra.mxu0 0.0
      %429 = vmatprep.subr.mxu0 0.0
      %430 = vmatpush1.msra.mxu0 0.0
      %431 = vmatprep.subr.mxu0 0.0
      %432 = vmatpush1.msra.mxu0 0.0
      %433 = vmatprep.subr.mxu0 0.0
      %434 = vmatpush1.msra.mxu0 0.0
      %435 = vmatprep.subr.mxu0 0.0
      %436 = vmatpush1.msra.mxu0 0.0
      %437 = vmatprep.subr.mxu0 0.0
      %438 = vmatpush1.msra.mxu0 0.0
      %439 = vmatprep.subr.mxu0 0.0
      %440 = vmatpush1.msra.mxu0 0.0
      %441 = vmatprep.subr.mxu0 0.0
      %442 = vmatpush1.msra.mxu0 0.0
      %443 = vmatprep.subr.mxu0 0.0
      %444 = vmatpush1.msra.mxu0 0.0
      %445 = vmatprep.subr.mxu0 0.0
      %446 = vmatpush1.msra.mxu0 0.0
      %447 = vmatprep.subr.mxu0 0.0
      %448 = vmatpush1.msra.mxu0 0.0
      %449 = vmatprep.subr.mxu0 0.0
      %450 = vmatpush1.msra.mxu0 0.0
      %451 = vmatprep.subr.mxu0 0.0
      %452 = vmatpush1.msra.mxu0 0.0
      %453 = vmatprep.subr.mxu0 0.0
      %454 = vmatpush1.msra.mxu0 0.0
      %455 = vmatprep.subr.mxu0 0.0
      %456 = vmatpush1.msra.mxu0 0.0
      %457 = vmatprep.subr.mxu0 0.0
      %458 = vmatpush1.msra.mxu0 0.0
      %459 = vmatprep.subr.mxu0 0.0
      %460 = vmatpush1.msra.mxu0 0.0
      %461 = vmatprep.subr.mxu0 0.0
      %462 = vmatpush1.msra.mxu0 0.0
      %463 = vmatprep.subr.mxu0 0.0
      %464 = vmatpush1.msra.mxu0 0.0
      %465 = vmatprep.subr.mxu0 0.0
      %466 = vmatpush1.msra.mxu0 0.0
      %467 = vmatprep.mubr.f32.mxu0 0.0
      %468 = vmatmul.mubr.f32.gmra.mrb[0].mxu0 %v377
      %v469 = vpop.f32.mrb[0].mxu0
      %v470 = vadd.f32 0.0, %v469
      %v471 = vpop.f32.mrb[0].mxu0
      %472 = vmatprep.mubr.f32.mxu0 0.0
      %473 = vmatmul.mubr.f32.gmra.mrb[0].mxu0 %v380
      %v474 = vpop.f32.mrb[0].mxu0
      %v475 = vadd.f32 0.0, %v474
      %v476 = vpop.f32.mrb[0].mxu0
      %477 = vmatprep.mubr.f32.mxu0 0.0
      %478 = vmatmul.mubr.f32.gmra.mrb[0].mxu0 %v383
      %v479 = vpop.f32.mrb[0].mxu0
      %v480 = vadd.f32 0.0, %v479
      %v481 = vpop.f32.mrb[0].mxu0
      %482 = vmatprep.mubr.f32.mxu0 0.0
      %483 = vmatmul.mubr.f32.gmra.mrb[0].mxu0 %v386
      %v484 = vpop.f32.mrb[0].mxu0
      %v485 = vadd.f32 0.0, %v484
      %v486 = vpop.f32.mrb[0].mxu0
      %487 = vmatprep.mubr.f32.mxu0 0.0
      %488 = vmatmul.mubr.f32.gmra.mrb[0].mxu0 %v389
      %v489 = vpop.f32.mrb[0].mxu0
      %v490 = vadd.f32 0.0, %v489
      %v491 = vpop.f32.mrb[0].mxu0
      %492 = vmatprep.mubr.f32.mxu0 0.0
      %493 = vmatmul.mubr.f32.gmra.mrb[0].mxu0 %v392
      %v494 = vpop.f32.mrb[0].mxu0
      %v495 = vadd.f32 0.0, %v494
      %v496 = vpop.f32.mrb[0].mxu0
      %497 = vmatprep.mubr.f32.mxu0 0.0
      %498 = vmatmul.mubr.f32.gmra.mrb[0].mxu0 %v395
      %v499 = vpop.f32.mrb[0].mxu0
      %v500 = vadd.f32 0.0, %v499
      %v501 = vpop.f32.mrb[0].mxu0
      %502 = vmatprep.mubr.f32.mxu0 0.0
      %503 = vmatmul.mubr.f32.gmra.mrb[0].mxu0 %v398
      %v504 = vpop.f32.mrb[0].mxu0
      %v505 = vadd.f32 0.0, %v504
      %v506 = vpop.f32.mrb[0].mxu0
      %507 = vmatprep.mubr.f32.mxu0 0.0
      %508 = vmatmul.mubr.f32.gmra.mrb[0].mxu0 %v401
      %v509 = vpop.f32.mrb[0].mxu0
      %v510 = vadd.f32 0.0, %v509
      %v511 = vpop.f32.mrb[0].mxu0
      %512 = vdwg.mxu0
      %v513 = vadd.f32 %v470, %v353
      %v514 = vadd.f32 %v475, %v354
      %v515 = vadd.f32 %v480, %v355
      %v516 = vadd.f32 %v485, %v353
      %v517 = vadd.f32 %v490, %v354
      %v518 = vadd.f32 %v495, %v355
      %v519 = vadd.f32 %v500, %v353
      %v520 = vadd.f32 %v505, %v354
      %v521 = vadd.f32 %v510, %v355
      %v522 = vlaneseq
      %v523 = vand.u32 %v522, 127
      %vm524 = vcmp.lt.s32.totalorder %v523, 17
      %v525 = vld [vmem:[%s3] sm:$0x1]
      %v526 = vld [vmem:[%s3 + $0x1] sm:$0x1]
      %v527 = vld [vmem:[%s3 + $0x2] sm:$0x1]
      %v528 = vld [vmem:[%s3 + $0x3] sm:$0x1]
      %v529 = vld [vmem:[%s3 + $0x4] sm:$0x1]
      %v530 = vld [vmem:[%s3 + $0x5] sm:$0x1]
      %v531 = vld [vmem:[%s3 + $0x6] sm:$0x1]
      %v532 = vld [vmem:[%s3 + $0x7] sm:$0x1]
      %vm533 = vcmask 261120
      %v534 = vsel %vm533, %v513, 0.0
      %535 = vadd.xlane.f32.xlu0 %v534
      %v536 = vpop.xlane.xlu0 %535
      %v537 = vsel %vm533, %v514, 0.0
      %538 = vadd.xlane.f32.xlu0 %v537
      %v539 = vpop.xlane.xlu0 %538
      %v540 = vsel %vm533, %v515, 0.0
      %541 = vadd.xlane.f32.xlu0 %v540
      %v542 = vpop.xlane.xlu0 %541
      %v543 = vsel %vm533, %v516, 0.0
      %544 = vadd.xlane.f32.xlu0 %v543
      %v545 = vpop.xlane.xlu0 %544
      %v546 = vsel %vm533, %v517, 0.0
      %547 = vadd.xlane.f32.xlu0 %v546
      %v548 = vpop.xlane.xlu0 %547
      %v549 = vsel %vm533, %v518, 0.0
      %550 = vadd.xlane.f32.xlu0 %v549
      %v551 = vpop.xlane.xlu0 %550
      %v552 = vsel %vm533, %v519, 0.0
      %553 = vadd.xlane.f32.xlu0 %v552
      %v554 = vpop.xlane.xlu0 %553
      %v555 = vsel %vm533, %v520, 0.0
      %556 = vadd.xlane.f32.xlu0 %v555
      %v557 = vpop.xlane.xlu0 %556
      %v558 = vsel %vm533, %v521, 0.0
      %559 = vadd.xlane.f32.xlu0 %v558
      %v560 = vpop.xlane.xlu0 %559
      %v561 = vrcp.pop 32.0
      %v562 = vmul.f32 %v536, %v561
      %v563 = vmul.f32 %v539, %v561
      %v564 = vmul.f32 %v542, %v561
      %v565 = vmul.f32 %v545, %v561
      %v566 = vmul.f32 %v548, %v561
      %v567 = vmul.f32 %v551, %v561
      %v568 = vmul.f32 %v554, %v561
      %v569 = vmul.f32 %v557, %v561
      %v570 = vmul.f32 %v560, %v561
      %v571 = vsub.f32 %v513, %v562
      %v572 = vsub.f32 %v514, %v563
      %v573 = vsub.f32 %v515, %v564
      %v574 = vsub.f32 %v516, %v565
      %v575 = vsub.f32 %v517, %v566
      %v576 = vsub.f32 %v518, %v567
      %v577 = vsub.f32 %v519, %v568
      %v578 = vsub.f32 %v520, %v569
      %v579 = vsub.f32 %v521, %v570
      %v580 = vmul.f32 %v571, %v571
      %v581 = vmul.f32 %v572, %v572
      %v582 = vmul.f32 %v573, %v573
      %v583 = vmul.f32 %v574, %v574
      %v584 = vmul.f32 %v575, %v575
      %v585 = vmul.f32 %v576, %v576
      %v586 = vmul.f32 %v577, %v577
      %v587 = vmul.f32 %v578, %v578
      %v588 = vmul.f32 %v579, %v579
      %v589 = vsel %vm533, %v580, 0.0
      %590 = vadd.xlane.f32.xlu0 %v589
      %v591 = vpop.xlane.xlu0 %590
      %v592 = vsel %vm533, %v581, 0.0
      %593 = vadd.xlane.f32.xlu0 %v592
      %v594 = vpop.xlane.xlu0 %593
      %v595 = vsel %vm533, %v582, 0.0
      %596 = vadd.xlane.f32.xlu0 %v595
      %v597 = vpop.xlane.xlu0 %596
      %v598 = vsel %vm533, %v583, 0.0
      %599 = vadd.xlane.f32.xlu0 %v598
      %v600 = vpop.xlane.xlu0 %599
      %v601 = vsel %vm533, %v584, 0.0
      %602 = vadd.xlane.f32.xlu0 %v601
      %v603 = vpop.xlane.xlu0 %602
      %v604 = vsel %vm533, %v585, 0.0
      %605 = vadd.xlane.f32.xlu0 %v604
      %v606 = vpop.xlane.xlu0 %605
      %v607 = vsel %vm533, %v586, 0.0
      %608 = vadd.xlane.f32.xlu0 %v607
      %v609 = vpop.xlane.xlu0 %608
      %v610 = vsel %vm533, %v587, 0.0
      %611 = vadd.xlane.f32.xlu0 %v610
      %v612 = vpop.xlane.xlu0 %611
      %v613 = vsel %vm533, %v588, 0.0
      %614 = vadd.xlane.f32.xlu0 %v613
      %v615 = vpop.xlane.xlu0 %614
      %v616 = vmul.f32 %v591, %v561
      %v617 = vmul.f32 %v594, %v561
      %v618 = vmul.f32 %v597, %v561
      %v619 = vmul.f32 %v600, %v561
      %v620 = vmul.f32 %v603, %v561
      %v621 = vmul.f32 %v606, %v561
      %v622 = vmul.f32 %v609, %v561
      %v623 = vmul.f32 %v612, %v561
      %v624 = vmul.f32 %v615, %v561
      %v625 = vadd.f32 %v616, 1e-05
      %v626 = vadd.f32 %v617, 1e-05
      %v627 = vadd.f32 %v618, 1e-05
      %v628 = vadd.f32 %v619, 1e-05
      %v629 = vadd.f32 %v620, 1e-05
      %v630 = vadd.f32 %v621, 1e-05
      %v631 = vadd.f32 %v622, 1e-05
      %v632 = vadd.f32 %v623, 1e-05
      %v633 = vadd.f32 %v624, 1e-05
      %v634 = vrsqrt.pop %v625
      %v635 = vrsqrt.pop %v626
      %v636 = vrsqrt.pop %v627
      %v637 = vrsqrt.pop %v628
      %v638 = vrsqrt.pop %v629
      %v639 = vrsqrt.pop %v630
      %v640 = vrsqrt.pop %v631
      %v641 = vrsqrt.pop %v632
      %v642 = vrsqrt.pop %v633
      %v643 = vmul.f32 %v571, %v634
      %v644 = vmul.f32 %v572, %v635
      %v645 = vmul.f32 %v573, %v636
      %v646 = vmul.f32 %v574, %v637
      %v647 = vmul.f32 %v575, %v638
      %v648 = vmul.f32 %v576, %v639
      %v649 = vmul.f32 %v577, %v640
      %v650 = vmul.f32 %v578, %v641
      %v651 = vmul.f32 %v579, %v642
      %v652 = vlaneseq
      %v653 = vshrl.u32 %v652, 7
      %v654 = vsub.s32 0, %v653
      %v655 = vrot.slane %v525, %v654
      %v656 = vmul.f32 %v643, %v655
      %v657 = vmul.f32 %v644, %v655
      %v658 = vmul.f32 %v645, %v655
      %v659 = vmul.f32 %v646, %v655
      %v660 = vmul.f32 %v647, %v655
      %v661 = vmul.f32 %v648, %v655
      %v662 = vmul.f32 %v649, %v655
      %v663 = vmul.f32 %v650, %v655
      %v664 = vmul.f32 %v651, %v655
      %v665 = vlaneseq
      %v666 = vshrl.u32 %v665, 7
      %v667 = vsub.s32 0, %v666
      %v668 = vrot.slane %v526, %v667
      %v669 = vadd.f32 %v656, %v668
      %v670 = vadd.f32 %v657, %v668
      %v671 = vadd.f32 %v658, %v668
      %v672 = vadd.f32 %v659, %v668
      %v673 = vadd.f32 %v660, %v668
      %v674 = vadd.f32 %v661, %v668
      %v675 = vadd.f32 %v662, %v668
      %v676 = vadd.f32 %v663, %v668
      %v677 = vadd.f32 %v664, %v668
      %v678 = vld [vmem:[%s4] sm:$0xff]
      %v679 = vld [vmem:[%s4 + $0x8] sm:$0xff]
      %v680 = vld [vmem:[%s4 + $0x10] sm:$0xff]
      %v681 = vld [vmem:[%s4 + $0x18] sm:$0xff]
      %v682 = vlaneseq
      %v683 = vshrl.u32 %v682, 7
      %v684 = vsub.s32 0, %v683
      %v685 = vrot.slane %v527, %v684
      %v687 = vsel %vm533, %v669, 0
      %v690 = vsel %vm533, %v670, 0
      %v693 = vsel %vm533, %v671, 0
      %v696 = vsel %vm533, %v672, 0
      %v699 = vsel %vm533, %v673, 0
      %v702 = vsel %vm533, %v674, 0
      %v705 = vsel %vm533, %v675, 0
      %v708 = vsel %vm533, %v676, 0
      %v711 = vsel %vm533, %v677, 0
      %713 = vmatprep.subr.mxu0 0.0
      %714 = vmatpush1.msra.mxu0 %v678
      %715 = vmatprep.subr.mxu0 0.0
      %716 = vmatpush1.msra.mxu0 %v679
      %717 = vmatprep.subr.mxu0 0.0
      %718 = vmatpush1.msra.mxu0 %v680
      %719 = vmatprep.subr.mxu0 0.0
      %720 = vmatpush1.msra.mxu0 %v681
      %721 = vmatprep.subr.mxu0 0.0
      %722 = vmatpush1.msra.mxu0 0.0
      %723 = vmatprep.subr.mxu0 0.0
      %724 = vmatpush1.msra.mxu0 0.0
      %725 = vmatprep.subr.mxu0 0.0
      %726 = vmatpush1.msra.mxu0 0.0
      %727 = vmatprep.subr.mxu0 0.0
      %728 = vmatpush1.msra.mxu0 0.0
      %729 = vmatprep.subr.mxu0 0.0
      %730 = vmatpush1.msra.mxu0 0.0
      %731 = vmatprep.subr.mxu0 0.0
      %732 = vmatpush1.msra.mxu0 0.0
      %733 = vmatprep.subr.mxu0 0.0
      %734 = vmatpush1.msra.mxu0 0.0
      %735 = vmatprep.subr.mxu0 0.0
      %736 = vmatpush1.msra.mxu0 0.0
      %737 = vmatprep.subr.mxu0 0.0
      %738 = vmatpush1.msra.mxu0 0.0
      %739 = vmatprep.subr.mxu0 0.0
      %740 = vmatpush1.msra.mxu0 0.0
      %741 = vmatprep.subr.mxu0 0.0
      %742 = vmatpush1.msra.mxu0 0.0
      %743 = vmatprep.subr.mxu0 0.0
      %744 = vmatpush1.msra.mxu0 0.0
      %745 = vmatprep.subr.mxu0 0.0
      %746 = vmatpush1.msra.mxu0 0.0
      %747 = vmatprep.subr.mxu0 0.0
      %748 = vmatpush1.msra.mxu0 0.0
      %749 = vmatprep.subr.mxu0 0.0
      %750 = vmatpush1.msra.mxu0 0.0
      %751 = vmatprep.subr.mxu0 0.0
      %752 = vmatpush1.msra.mxu0 0.0
      %753 = vmatprep.subr.mxu0 0.0
      %754 = vmatpush1.msra.mxu0 0.0
      %755 = vmatprep.subr.mxu0 0.0
      %756 = vmatpush1.msra.mxu0 0.0
      %757 = vmatprep.subr.mxu0 0.0
      %758 = vmatpush1.msra.mxu0 0.0
      %759 = vmatprep.subr.mxu0 0.0
      %760 = vmatpush1.msra.mxu0 0.0
      %761 = vmatprep.subr.mxu0 0.0
      %762 = vmatpush1.msra.mxu0 0.0
      %763 = vmatprep.subr.mxu0 0.0
      %764 = vmatpush1.msra.mxu0 0.0
      %765 = vmatprep.subr.mxu0 0.0
      %766 = vmatpush1.msra.mxu0 0.0
      %767 = vmatprep.subr.mxu0 0.0
      %768 = vmatpush1.msra.mxu0 0.0
      %769 = vmatprep.subr.mxu0 0.0
      %770 = vmatpush1.msra.mxu0 0.0
      %771 = vmatprep.subr.mxu0 0.0
      %772 = vmatpush1.msra.mxu0 0.0
      %773 = vmatprep.subr.mxu0 0.0
      %774 = vmatpush1.msra.mxu0 0.0
      %775 = vmatprep.subr.mxu0 0.0
      %776 = vmatpush1.msra.mxu0 0.0
      %777 = vmatprep.mubr.f32.mxu0 0.0
      %778 = vmatmul.mubr.f32.gmra.mrb[0].mxu0 %v687
      %v779 = vpop.f32.mrb[0].mxu0
      %v780 = vadd.f32 %v685, %v779
      %v781 = vpop.f32.mrb[0].mxu0
      %782 = vmatprep.mubr.f32.mxu0 0.0
      %783 = vmatmul.mubr.f32.gmra.mrb[0].mxu0 %v690
      %v784 = vpop.f32.mrb[0].mxu0
      %v785 = vadd.f32 %v685, %v784
      %v786 = vpop.f32.mrb[0].mxu0
      %787 = vmatprep.mubr.f32.mxu0 0.0
      %788 = vmatmul.mubr.f32.gmra.mrb[0].mxu0 %v693
      %v789 = vpop.f32.mrb[0].mxu0
      %v790 = vadd.f32 %v685, %v789
      %v791 = vpop.f32.mrb[0].mxu0
      %792 = vmatprep.mubr.f32.mxu0 0.0
      %793 = vmatmul.mubr.f32.gmra.mrb[0].mxu0 %v696
      %v794 = vpop.f32.mrb[0].mxu0
      %v795 = vadd.f32 %v685, %v794
      %v796 = vpop.f32.mrb[0].mxu0
      %797 = vmatprep.mubr.f32.mxu0 0.0
      %798 = vmatmul.mubr.f32.gmra.mrb[0].mxu0 %v699
      %v799 = vpop.f32.mrb[0].mxu0
      %v800 = vadd.f32 %v685, %v799
      %v801 = vpop.f32.mrb[0].mxu0
      %802 = vmatprep.mubr.f32.mxu0 0.0
      %803 = vmatmul.mubr.f32.gmra.mrb[0].mxu0 %v702
      %v804 = vpop.f32.mrb[0].mxu0
      %v805 = vadd.f32 %v685, %v804
      %v806 = vpop.f32.mrb[0].mxu0
      %807 = vmatprep.mubr.f32.mxu0 0.0
      %808 = vmatmul.mubr.f32.gmra.mrb[0].mxu0 %v705
      %v809 = vpop.f32.mrb[0].mxu0
      %v810 = vadd.f32 %v685, %v809
      %v811 = vpop.f32.mrb[0].mxu0
      %812 = vmatprep.mubr.f32.mxu0 0.0
      %813 = vmatmul.mubr.f32.gmra.mrb[0].mxu0 %v708
      %v814 = vpop.f32.mrb[0].mxu0
      %v815 = vadd.f32 %v685, %v814
      %v816 = vpop.f32.mrb[0].mxu0
      %817 = vmatprep.mubr.f32.mxu0 0.0
      %818 = vmatmul.mubr.f32.gmra.mrb[0].mxu0 %v711
      %v819 = vpop.f32.mrb[0].mxu0
      %v820 = vadd.f32 %v685, %v819
      %v821 = vpop.f32.mrb[0].mxu0
      %822 = vdwg.mxu0
      %826 = vrot.lane.b32.xlu0 %v780, 96
      %v827 = vpop.permute.xlu0 %826
      %828 = vrot.lane.b32.xlu0 %v785, 96
      %v829 = vpop.permute.xlu0 %828
      %830 = vrot.lane.b32.xlu0 %v790, 96
      %v831 = vpop.permute.xlu0 %830
      %vm832 = vcmask 130048
      %v833 = vsel %vm832, %v780, 0
      %v835 = vsel %vm832, %v785, 0
      %v837 = vsel %vm832, %v790, 0
      %v839 = vsel %vm832, %v827, 0
      %v841 = vsel %vm832, %v829, 0
      %v843 = vsel %vm832, %v831, 0
      %845 = vmatprep.subr.mxu0 0.0
      %846 = vmatpush1.xpose.msra.mxu0 %v839
      %847 = vmatprep.subr.mxu0 0.0
      %848 = vmatpush1.xpose.msra.mxu0 %v841
      %849 = vmatprep.subr.mxu0 0.0
      %850 = vmatpush1.xpose.msra.mxu0 %v843
      %851 = vmatprep.subr.mxu0 0.0
      %852 = vmatpush1.xpose.msra.mxu0 0.0
      %853 = vmatprep.subr.mxu0 0.0
      %854 = vmatpush1.xpose.msra.mxu0 0.0
      %855 = vmatprep.subr.mxu0 0.0
      %856 = vmatpush1.xpose.msra.mxu0 0.0
      %857 = vmatprep.subr.mxu0 0.0
      %858 = vmatpush1.xpose.msra.mxu0 0.0
      %859 = vmatprep.subr.mxu0 0.0
      %860 = vmatpush1.xpose.msra.mxu0 0.0
      %861 = vmatprep.subr.mxu0 0.0
      %862 = vmatpush1.xpose.msra.mxu0 0.0
      %863 = vmatprep.subr.mxu0 0.0
      %864 = vmatpush1.xpose.msra.mxu0 0.0
      %865 = vmatprep.subr.mxu0 0.0
      %866 = vmatpush1.xpose.msra.mxu0 0.0
      %867 = vmatprep.subr.mxu0 0.0
      %868 = vmatpush1.xpose.msra.mxu0 0.0
      %869 = vmatprep.subr.mxu0 0.0
      %870 = vmatpush1.xpose.msra.mxu0 0.0
      %871 = vmatprep.subr.mxu0 0.0
      %872 = vmatpush1.xpose.msra.mxu0 0.0
      %873 = vmatprep.subr.mxu0 0.0
      %874 = vmatpush1.xpose.msra.mxu0 0.0
      %875 = vmatprep.subr.mxu0 0.0
      %876 = vmatpush1.xpose.msra.mxu0 0.0
      %877 = vmatprep.subr.mxu0 0.0
      %878 = vmatpush1.xpose.msra.mxu0 0.0
      %879 = vmatprep.subr.mxu0 0.0
      %880 = vmatpush1.xpose.msra.mxu0 0.0
      %881 = vmatprep.subr.mxu0 0.0
      %882 = vmatpush1.xpose.msra.mxu0 0.0
      %883 = vmatprep.subr.mxu0 0.0
      %884 = vmatpush1.xpose.msra.mxu0 0.0
      %885 = vmatprep.subr.mxu0 0.0
      %886 = vmatpush1.xpose.msra.mxu0 0.0
      %887 = vmatprep.subr.mxu0 0.0
      %888 = vmatpush1.xpose.msra.mxu0 0.0
      %889 = vmatprep.subr.mxu0 0.0
      %890 = vmatpush1.xpose.msra.mxu0 0.0
      %891 = vmatprep.subr.mxu0 0.0
      %892 = vmatpush1.xpose.msra.mxu0 0.0
      %893 = vmatprep.subr.mxu0 0.0
      %894 = vmatpush1.xpose.msra.mxu0 0.0
      %895 = vmatprep.subr.mxu0 0.0
      %896 = vmatpush1.xpose.msra.mxu0 0.0
      %897 = vmatprep.subr.mxu0 0.0
      %898 = vmatpush1.xpose.msra.mxu0 0.0
      %899 = vmatprep.subr.mxu0 0.0
      %900 = vmatpush1.xpose.msra.mxu0 0.0
      %901 = vmatprep.subr.mxu0 0.0
      %902 = vmatpush1.xpose.msra.mxu0 0.0
      %903 = vmatprep.subr.mxu0 0.0
      %904 = vmatpush1.xpose.msra.mxu0 0.0
      %905 = vmatprep.subr.mxu0 0.0
      %906 = vmatpush1.xpose.msra.mxu0 0.0
      %907 = vmatprep.subr.mxu0 0.0
      %908 = vmatpush1.xpose.msra.mxu0 0.0
      %909 = vmatprep.mubr.f32.mxu0 0.0
      %910 = vmatmul.mubr.f32.gmra.mrb[0].mxu0 %v833
      %v911 = vpop.f32.mrb[0].mxu0
      %v912 = vadd.f32 0.0, %v911
      %v913 = vpop.f32.mrb[0].mxu0
      %914 = vmatprep.mubr.f32.mxu0 0.0
      %915 = vmatmul.mubr.f32.gmra.mrb[0].mxu0 %v835
      %v916 = vpop.f32.mrb[0].mxu0
      %v917 = vadd.f32 0.0, %v916
      %v918 = vpop.f32.mrb[0].mxu0
      %919 = vmatprep.mubr.f32.mxu0 0.0
      %920 = vmatmul.mubr.f32.gmra.mrb[0].mxu0 %v837
      %v921 = vpop.f32.mrb[0].mxu0
      %v922 = vadd.f32 0.0, %v921
      %v923 = vpop.f32.mrb[0].mxu0
      %924 = vdwg.mxu0
      %928 = vrot.lane.b32.xlu0 %v795, 96
      %v929 = vpop.permute.xlu0 %928
      %930 = vrot.lane.b32.xlu0 %v800, 96
      %v931 = vpop.permute.xlu0 %930
      %932 = vrot.lane.b32.xlu0 %v805, 96
      %v933 = vpop.permute.xlu0 %932
      %v934 = vsel %vm832, %v795, 0
      %v936 = vsel %vm832, %v800, 0
      %v938 = vsel %vm832, %v805, 0
      %v940 = vsel %vm832, %v929, 0
      %v942 = vsel %vm832, %v931, 0
      %v944 = vsel %vm832, %v933, 0
      %946 = vmatprep.subr.mxu0 0.0
      %947 = vmatpush1.xpose.msra.mxu0 %v940
      %948 = vmatprep.subr.mxu0 0.0
      %949 = vmatpush1.xpose.msra.mxu0 %v942
      %950 = vmatprep.subr.mxu0 0.0
      %951 = vmatpush1.xpose.msra.mxu0 %v944
      %952 = vmatprep.subr.mxu0 0.0
      %953 = vmatpush1.xpose.msra.mxu0 0.0
      %954 = vmatprep.subr.mxu0 0.0
      %955 = vmatpush1.xpose.msra.mxu0 0.0
      %956 = vmatprep.subr.mxu0 0.0
      %957 = vmatpush1.xpose.msra.mxu0 0.0
      %958 = vmatprep.subr.mxu0 0.0
      %959 = vmatpush1.xpose.msra.mxu0 0.0
      %960 = vmatprep.subr.mxu0 0.0
      %961 = vmatpush1.xpose.msra.mxu0 0.0
      %962 = vmatprep.subr.mxu0 0.0
      %963 = vmatpush1.xpose.msra.mxu0 0.0
      %964 = vmatprep.subr.mxu0 0.0
      %965 = vmatpush1.xpose.msra.mxu0 0.0
      %966 = vmatprep.subr.mxu0 0.0
      %967 = vmatpush1.xpose.msra.mxu0 0.0
      %968 = vmatprep.subr.mxu0 0.0
      %969 = vmatpush1.xpose.msra.mxu0 0.0
      %970 = vmatprep.subr.mxu0 0.0
      %971 = vmatpush1.xpose.msra.mxu0 0.0
      %972 = vmatprep.subr.mxu0 0.0
      %973 = vmatpush1.xpose.msra.mxu0 0.0
      %974 = vmatprep.subr.mxu0 0.0
      %975 = vmatpush1.xpose.msra.mxu0 0.0
      %976 = vmatprep.subr.mxu0 0.0
      %977 = vmatpush1.xpose.msra.mxu0 0.0
      %978 = vmatprep.subr.mxu0 0.0
      %979 = vmatpush1.xpose.msra.mxu0 0.0
      %980 = vmatprep.subr.mxu0 0.0
      %981 = vmatpush1.xpose.msra.mxu0 0.0
      %982 = vmatprep.subr.mxu0 0.0
      %983 = vmatpush1.xpose.msra.mxu0 0.0
      %984 = vmatprep.subr.mxu0 0.0
      %985 = vmatpush1.xpose.msra.mxu0 0.0
      %986 = vmatprep.subr.mxu0 0.0
      %987 = vmatpush1.xpose.msra.mxu0 0.0
      %988 = vmatprep.subr.mxu0 0.0
      %989 = vmatpush1.xpose.msra.mxu0 0.0
      %990 = vmatprep.subr.mxu0 0.0
      %991 = vmatpush1.xpose.msra.mxu0 0.0
      %992 = vmatprep.subr.mxu0 0.0
      %993 = vmatpush1.xpose.msra.mxu0 0.0
      %994 = vmatprep.subr.mxu0 0.0
      %995 = vmatpush1.xpose.msra.mxu0 0.0
      %996 = vmatprep.subr.mxu0 0.0
      %997 = vmatpush1.xpose.msra.mxu0 0.0
      %998 = vmatprep.subr.mxu0 0.0
      %999 = vmatpush1.xpose.msra.mxu0 0.0
      %1000 = vmatprep.subr.mxu0 0.0
      %1001 = vmatpush1.xpose.msra.mxu0 0.0
      %1002 = vmatprep.subr.mxu0 0.0
      %1003 = vmatpush1.xpose.msra.mxu0 0.0
      %1004 = vmatprep.subr.mxu0 0.0
      %1005 = vmatpush1.xpose.msra.mxu0 0.0
      %1006 = vmatprep.subr.mxu0 0.0
      %1007 = vmatpush1.xpose.msra.mxu0 0.0
      %1008 = vmatprep.subr.mxu0 0.0
      %1009 = vmatpush1.xpose.msra.mxu0 0.0
      %1010 = vmatprep.mubr.f32.mxu0 0.0
      %1011 = vmatmul.mubr.f32.gmra.mrb[0].mxu0 %v934
      %v1012 = vpop.f32.mrb[0].mxu0
      %v1013 = vadd.f32 0.0, %v1012
      %v1014 = vpop.f32.mrb[0].mxu0
      %1015 = vmatprep.mubr.f32.mxu0 0.0
      %1016 = vmatmul.mubr.f32.gmra.mrb[0].mxu0 %v936
      %v1017 = vpop.f32.mrb[0].mxu0
      %v1018 = vadd.f32 0.0, %v1017
      %v1019 = vpop.f32.mrb[0].mxu0
      %1020 = vmatprep.mubr.f32.mxu0 0.0
      %1021 = vmatmul.mubr.f32.gmra.mrb[0].mxu0 %v938
      %v1022 = vpop.f32.mrb[0].mxu0
      %v1023 = vadd.f32 0.0, %v1022
      %v1024 = vpop.f32.mrb[0].mxu0
      %1025 = vdwg.mxu0
      %1029 = vrot.lane.b32.xlu0 %v810, 96
      %v1030 = vpop.permute.xlu0 %1029
      %1031 = vrot.lane.b32.xlu0 %v815, 96
      %v1032 = vpop.permute.xlu0 %1031
      %1033 = vrot.lane.b32.xlu0 %v820, 96
      %v1034 = vpop.permute.xlu0 %1033
      %v1035 = vsel %vm832, %v810, 0
      %v1037 = vsel %vm832, %v815, 0
      %v1039 = vsel %vm832, %v820, 0
      %v1041 = vsel %vm832, %v1030, 0
      %v1043 = vsel %vm832, %v1032, 0
      %v1045 = vsel %vm832, %v1034, 0
      %1047 = vmatprep.subr.mxu0 0.0
      %1048 = vmatpush1.xpose.msra.mxu0 %v1041
      %1049 = vmatprep.subr.mxu0 0.0
      %1050 = vmatpush1.xpose.msra.mxu0 %v1043
      %1051 = vmatprep.subr.mxu0 0.0
      %1052 = vmatpush1.xpose.msra.mxu0 %v1045
      %1053 = vmatprep.subr.mxu0 0.0
      %1054 = vmatpush1.xpose.msra.mxu0 0.0
      %1055 = vmatprep.subr.mxu0 0.0
      %1056 = vmatpush1.xpose.msra.mxu0 0.0
      %1057 = vmatprep.subr.mxu0 0.0
      %1058 = vmatpush1.xpose.msra.mxu0 0.0
      %1059 = vmatprep.subr.mxu0 0.0
      %1060 = vmatpush1.xpose.msra.mxu0 0.0
      %1061 = vmatprep.subr.mxu0 0.0
      %1062 = vmatpush1.xpose.msra.mxu0 0.0
      %1063 = vmatprep.subr.mxu0 0.0
      %1064 = vmatpush1.xpose.msra.mxu0 0.0
      %1065 = vmatprep.subr.mxu0 0.0
      %1066 = vmatpush1.xpose.msra.mxu0 0.0
      %1067 = vmatprep.subr.mxu0 0.0
      %1068 = vmatpush1.xpose.msra.mxu0 0.0
      %1069 = vmatprep.subr.mxu0 0.0
      %1070 = vmatpush1.xpose.msra.mxu0 0.0
      %1071 = vmatprep.subr.mxu0 0.0
      %1072 = vmatpush1.xpose.msra.mxu0 0.0
      %1073 = vmatprep.subr.mxu0 0.0
      %1074 = vmatpush1.xpose.msra.mxu0 0.0
      %1075 = vmatprep.subr.mxu0 0.0
      %1076 = vmatpush1.xpose.msra.mxu0 0.0
      %1077 = vmatprep.subr.mxu0 0.0
      %1078 = vmatpush1.xpose.msra.mxu0 0.0
      %1079 = vmatprep.subr.mxu0 0.0
      %1080 = vmatpush1.xpose.msra.mxu0 0.0
      %1081 = vmatprep.subr.mxu0 0.0
      %1082 = vmatpush1.xpose.msra.mxu0 0.0
      %1083 = vmatprep.subr.mxu0 0.0
      %1084 = vmatpush1.xpose.msra.mxu0 0.0
      %1085 = vmatprep.subr.mxu0 0.0
      %1086 = vmatpush1.xpose.msra.mxu0 0.0
      %1087 = vmatprep.subr.mxu0 0.0
      %1088 = vmatpush1.xpose.msra.mxu0 0.0
      %1089 = vmatprep.subr.mxu0 0.0
      %1090 = vmatpush1.xpose.msra.mxu0 0.0
      %1091 = vmatprep.subr.mxu0 0.0
      %1092 = vmatpush1.xpose.msra.mxu0 0.0
      %1093 = vmatprep.subr.mxu0 0.0
      %1094 = vmatpush1.xpose.msra.mxu0 0.0
      %1095 = vmatprep.subr.mxu0 0.0
      %1096 = vmatpush1.xpose.msra.mxu0 0.0
      %1097 = vmatprep.subr.mxu0 0.0
      %1098 = vmatpush1.xpose.msra.mxu0 0.0
      %1099 = vmatprep.subr.mxu0 0.0
      %1100 = vmatpush1.xpose.msra.mxu0 0.0
      %1101 = vmatprep.subr.mxu0 0.0
      %1102 = vmatpush1.xpose.msra.mxu0 0.0
      %1103 = vmatprep.subr.mxu0 0.0
      %1104 = vmatpush1.xpose.msra.mxu0 0.0
      %1105 = vmatprep.subr.mxu0 0.0
      %1106 = vmatpush1.xpose.msra.mxu0 0.0
      %1107 = vmatprep.subr.mxu0 0.0
      %1108 = vmatpush1.xpose.msra.mxu0 0.0
      %1109 = vmatprep.subr.mxu0 0.0
      %1110 = vmatpush1.xpose.msra.mxu0 0.0
      %1111 = vmatprep.mubr.f32.mxu0 0.0
      %1112 = vmatmul.mubr.f32.gmra.mrb[0].mxu0 %v1035
      %v1113 = vpop.f32.mrb[0].mxu0
      %v1114 = vadd.f32 0.0, %v1113
      %v1115 = vpop.f32.mrb[0].mxu0
      %1116 = vmatprep.mubr.f32.mxu0 0.0
      %1117 = vmatmul.mubr.f32.gmra.mrb[0].mxu0 %v1037
      %v1118 = vpop.f32.mrb[0].mxu0
      %v1119 = vadd.f32 0.0, %v1118
      %v1120 = vpop.f32.mrb[0].mxu0
      %1121 = vmatprep.mubr.f32.mxu0 0.0
      %1122 = vmatmul.mubr.f32.gmra.mrb[0].mxu0 %v1039
      %v1123 = vpop.f32.mrb[0].mxu0
      %v1124 = vadd.f32 0.0, %v1123
      %v1125 = vpop.f32.mrb[0].mxu0
      %1126 = vdwg.mxu0
      %v1127 = vmul.f32 %v912, 0.25
      %v1128 = vmul.f32 %v917, 0.25
      %v1129 = vmul.f32 %v922, 0.25
      %v1130 = vmul.f32 %v1013, 0.25
      %v1131 = vmul.f32 %v1018, 0.25
      %v1132 = vmul.f32 %v1023, 0.25
      %v1133 = vmul.f32 %v1114, 0.25
      %v1134 = vmul.f32 %v1119, 0.25
      %v1135 = vmul.f32 %v1124, 0.25
      %v1136 = vsel %vm524, %v1127, -1e+30
      %v1137 = vsel %vm524, %v1128, -1e+30
      %v1138 = vsel %vm524, %v1129, -1e+30
      %v1139 = vsel %vm524, %v1130, -1e+30
      %v1140 = vsel %vm524, %v1131, -1e+30
      %v1141 = vsel %vm524, %v1132, -1e+30
      %v1142 = vsel %vm524, %v1133, -1e+30
      %v1143 = vsel %vm524, %v1134, -1e+30
      %v1144 = vsel %vm524, %v1135, -1e+30
      %vm1145 = vcmask 195584
      %v1146 = vsel %vm1145, %v1136, -inf
      %1147 = vmax.xlane.f32.xlu0 %v1146
      %v1148 = vpop.xlane.xlu0 %1147
      %v1149 = vsel %vm1145, %v1137, -inf
      %1150 = vmax.xlane.f32.xlu0 %v1149
      %v1151 = vpop.xlane.xlu0 %1150
      %v1152 = vsel %vm1145, %v1138, -inf
      %1153 = vmax.xlane.f32.xlu0 %v1152
      %v1154 = vpop.xlane.xlu0 %1153
      %v1155 = vsel %vm1145, %v1139, -inf
      %1156 = vmax.xlane.f32.xlu0 %v1155
      %v1157 = vpop.xlane.xlu0 %1156
      %v1158 = vsel %vm1145, %v1140, -inf
      %1159 = vmax.xlane.f32.xlu0 %v1158
      %v1160 = vpop.xlane.xlu0 %1159
      %v1161 = vsel %vm1145, %v1141, -inf
      %1162 = vmax.xlane.f32.xlu0 %v1161
      %v1163 = vpop.xlane.xlu0 %1162
      %v1164 = vsel %vm1145, %v1142, -inf
      %1165 = vmax.xlane.f32.xlu0 %v1164
      %v1166 = vpop.xlane.xlu0 %1165
      %v1167 = vsel %vm1145, %v1143, -inf
      %1168 = vmax.xlane.f32.xlu0 %v1167
      %v1169 = vpop.xlane.xlu0 %1168
      %v1170 = vsel %vm1145, %v1144, -inf
      %1171 = vmax.xlane.f32.xlu0 %v1170
      %v1172 = vpop.xlane.xlu0 %1171
      %v1173 = vsub.f32 %v1136, %v1148
      %v1174 = vsub.f32 %v1137, %v1151
      %v1175 = vsub.f32 %v1138, %v1154
      %v1176 = vsub.f32 %v1139, %v1157
      %v1177 = vsub.f32 %v1140, %v1160
      %v1178 = vsub.f32 %v1141, %v1163
      %v1179 = vsub.f32 %v1142, %v1166
      %v1180 = vsub.f32 %v1143, %v1169
      %v1181 = vsub.f32 %v1144, %v1172
      %v1182 = vmul.f32 %v1173, 1.442695
      %v1183 = vpow.pop %v1182
      %v1184 = vmul.f32 %v1174, 1.442695
      %v1185 = vpow.pop %v1184
      %v1186 = vmul.f32 %v1175, 1.442695
      %v1187 = vpow.pop %v1186
      %v1188 = vmul.f32 %v1176, 1.442695
      %v1189 = vpow.pop %v1188
      %v1190 = vmul.f32 %v1177, 1.442695
      %v1191 = vpow.pop %v1190
      %v1192 = vmul.f32 %v1178, 1.442695
      %v1193 = vpow.pop %v1192
      %v1194 = vmul.f32 %v1179, 1.442695
      %v1195 = vpow.pop %v1194
      %v1196 = vmul.f32 %v1180, 1.442695
      %v1197 = vpow.pop %v1196
      %v1198 = vmul.f32 %v1181, 1.442695
      %v1199 = vpow.pop %v1198
      %v1200 = vsel %vm1145, %v1183, 0.0
      %1201 = vadd.xlane.f32.xlu0 %v1200
      %v1202 = vpop.xlane.xlu0 %1201
      %v1203 = vsel %vm1145, %v1185, 0.0
      %1204 = vadd.xlane.f32.xlu0 %v1203
      %v1205 = vpop.xlane.xlu0 %1204
      %v1206 = vsel %vm1145, %v1187, 0.0
      %1207 = vadd.xlane.f32.xlu0 %v1206
      %v1208 = vpop.xlane.xlu0 %1207
      %v1209 = vsel %vm1145, %v1189, 0.0
      %1210 = vadd.xlane.f32.xlu0 %v1209
      %v1211 = vpop.xlane.xlu0 %1210
      %v1212 = vsel %vm1145, %v1191, 0.0
      %1213 = vadd.xlane.f32.xlu0 %v1212
      %v1214 = vpop.xlane.xlu0 %1213
      %v1215 = vsel %vm1145, %v1193, 0.0
      %1216 = vadd.xlane.f32.xlu0 %v1215
      %v1217 = vpop.xlane.xlu0 %1216
      %v1218 = vsel %vm1145, %v1195, 0.0
      %1219 = vadd.xlane.f32.xlu0 %v1218
      %v1220 = vpop.xlane.xlu0 %1219
      %v1221 = vsel %vm1145, %v1197, 0.0
      %1222 = vadd.xlane.f32.xlu0 %v1221
      %v1223 = vpop.xlane.xlu0 %1222
      %v1224 = vsel %vm1145, %v1199, 0.0
      %1225 = vadd.xlane.f32.xlu0 %v1224
      %v1226 = vpop.xlane.xlu0 %1225
      %v1227 = vrcp.pop %v1202
      %v1228 = vmul.f32 1.0, %v1227
      %v1229 = vrcp.pop %v1205
      %v1230 = vmul.f32 1.0, %v1229
      %v1231 = vrcp.pop %v1208
      %v1232 = vmul.f32 1.0, %v1231
      %v1233 = vrcp.pop %v1211
      %v1234 = vmul.f32 1.0, %v1233
      %v1235 = vrcp.pop %v1214
      %v1236 = vmul.f32 1.0, %v1235
      %v1237 = vrcp.pop %v1217
      %v1238 = vmul.f32 1.0, %v1237
      %v1239 = vrcp.pop %v1220
      %v1240 = vmul.f32 1.0, %v1239
      %v1241 = vrcp.pop %v1223
      %v1242 = vmul.f32 1.0, %v1241
      %v1243 = vrcp.pop %v1226
      %v1244 = vmul.f32 1.0, %v1243
      %v1245 = vmul.f32 %v1183, %v1228
      %v1246 = vmul.f32 %v1185, %v1230
      %v1247 = vmul.f32 %v1187, %v1232
      %v1248 = vmul.f32 %v1189, %v1234
      %v1249 = vmul.f32 %v1191, %v1236
      %v1250 = vmul.f32 %v1193, %v1238
      %v1251 = vmul.f32 %v1195, %v1240
      %v1252 = vmul.f32 %v1197, %v1242
      %v1253 = vmul.f32 %v1199, %v1244
      %vm1254 = vcmask 138240
      %1255 = vst.msk [vmem:[%s351] sm:$0xff] %vm1254, %v1245
      %1256 = vst.msk [vmem:[%s351 + $0x8] sm:$0xff] %vm1254, %v1246
      %vm1257 = vcmask 131072
      %1258 = vst.msk [vmem:[%s351 + $0x10] sm:$0x1] %vm1257, %v1247
      %1259 = vst.msk [vmem:[%s351 + $0x60] sm:$0xff] %vm1254, %v1248
      %1260 = vst.msk [vmem:[%s351 + $0x68] sm:$0xff] %vm1254, %v1249
      %1261 = vst.msk [vmem:[%s351 + $0x70] sm:$0x1] %vm1257, %v1250
      %1262 = vst.msk [vmem:[%s351 + $0xc0] sm:$0xff] %vm1254, %v1251
      %1263 = vst.msk [vmem:[%s351 + $0xc8] sm:$0xff] %vm1254, %v1252
      %1264 = vst.msk [vmem:[%s351 + $0xd0] sm:$0x1] %vm1257, %v1253
      %1265 = vrot.lane.b32.xlu0 %v780, 64
      %v1266 = vpop.permute.xlu0 %1265
      %1267 = vrot.lane.b32.xlu0 %v785, 64
      %v1268 = vpop.permute.xlu0 %1267
      %1269 = vrot.lane.b32.xlu0 %v790, 64
      %v1270 = vpop.permute.xlu0 %1269
      %v1275 = vsel %vm1145, %v1245, 0
      %v1278 = vsel %vm1145, %v1246, 0
      %v1281 = vsel %vm1145, %v1247, 0
      %1283 = vmatprep.subr.mxu0 0.0
      %1284 = vmatpush1.msra.mxu0 %v1266
      %1285 = vmatprep.subr.mxu0 0.0
      %1286 = vmatpush1.msra.mxu0 %v1268
      %1287 = vmatprep.subr.mxu0 0.0
      %1288 = vmatpush1.msra.mxu0 %v1270
      %1289 = vmatprep.subr.mxu0 0.0
      %1290 = vmatpush1.msra.mxu0 0.0
      %1291 = vmatprep.subr.mxu0 0.0
      %1292 = vmatpush1.msra.mxu0 0.0
      %1293 = vmatprep.subr.mxu0 0.0
      %1294 = vmatpush1.msra.mxu0 0.0
      %1295 = vmatprep.subr.mxu0 0.0
      %1296 = vmatpush1.msra.mxu0 0.0
      %1297 = vmatprep.subr.mxu0 0.0
      %1298 = vmatpush1.msra.mxu0 0.0
      %1299 = vmatprep.subr.mxu0 0.0
      %1300 = vmatpush1.msra.mxu0 0.0
      %1301 = vmatprep.subr.mxu0 0.0
      %1302 = vmatpush1.msra.mxu0 0.0
      %1303 = vmatprep.subr.mxu0 0.0
      %1304 = vmatpush1.msra.mxu0 0.0
      %1305 = vmatprep.subr.mxu0 0.0
      %1306 = vmatpush1.msra.mxu0 0.0
      %1307 = vmatprep.subr.mxu0 0.0
      %1308 = vmatpush1.msra.mxu0 0.0
      %1309 = vmatprep.subr.mxu0 0.0
      %1310 = vmatpush1.msra.mxu0 0.0
      %1311 = vmatprep.subr.mxu0 0.0
      %1312 = vmatpush1.msra.mxu0 0.0
      %1313 = vmatprep.subr.mxu0 0.0
      %1314 = vmatpush1.msra.mxu0 0.0
      %1315 = vmatprep.subr.mxu0 0.0
      %1316 = vmatpush1.msra.mxu0 0.0
      %1317 = vmatprep.subr.mxu0 0.0
      %1318 = vmatpush1.msra.mxu0 0.0
      %1319 = vmatprep.subr.mxu0 0.0
      %1320 = vmatpush1.msra.mxu0 0.0
      %1321 = vmatprep.subr.mxu0 0.0
      %1322 = vmatpush1.msra.mxu0 0.0
      %1323 = vmatprep.subr.mxu0 0.0
      %1324 = vmatpush1.msra.mxu0 0.0
      %1325 = vmatprep.subr.mxu0 0.0
      %1326 = vmatpush1.msra.mxu0 0.0
      %1327 = vmatprep.subr.mxu0 0.0
      %1328 = vmatpush1.msra.mxu0 0.0
      %1329 = vmatprep.subr.mxu0 0.0
      %1330 = vmatpush1.msra.mxu0 0.0
      %1331 = vmatprep.subr.mxu0 0.0
      %1332 = vmatpush1.msra.mxu0 0.0
      %1333 = vmatprep.subr.mxu0 0.0
      %1334 = vmatpush1.msra.mxu0 0.0
      %1335 = vmatprep.subr.mxu0 0.0
      %1336 = vmatpush1.msra.mxu0 0.0
      %1337 = vmatprep.subr.mxu0 0.0
      %1338 = vmatpush1.msra.mxu0 0.0
      %1339 = vmatprep.subr.mxu0 0.0
      %1340 = vmatpush1.msra.mxu0 0.0
      %1341 = vmatprep.subr.mxu0 0.0
      %1342 = vmatpush1.msra.mxu0 0.0
      %1343 = vmatprep.subr.mxu0 0.0
      %1344 = vmatpush1.msra.mxu0 0.0
      %1345 = vmatprep.subr.mxu0 0.0
      %1346 = vmatpush1.msra.mxu0 0.0
      %1347 = vmatprep.mubr.f32.mxu0 0.0
      %1348 = vmatmul.mubr.f32.gmra.mrb[0].mxu0 %v1275
      %v1349 = vpop.f32.mrb[0].mxu0
      %v1350 = vadd.f32 0.0, %v1349
      %v1351 = vpop.f32.mrb[0].mxu0
      %1352 = vmatprep.mubr.f32.mxu0 0.0
      %1353 = vmatmul.mubr.f32.gmra.mrb[0].mxu0 %v1278
      %v1354 = vpop.f32.mrb[0].mxu0
      %v1355 = vadd.f32 0.0, %v1354
      %v1356 = vpop.f32.mrb[0].mxu0
      %1357 = vmatprep.mubr.f32.mxu0 0.0
      %1358 = vmatmul.mubr.f32.gmra.mrb[0].mxu0 %v1281
      %v1359 = vpop.f32.mrb[0].mxu0
      %v1360 = vadd.f32 0.0, %v1359
      %v1361 = vpop.f32.mrb[0].mxu0
      %1362 = vdwg.mxu0
      %1363 = vrot.lane.b32.xlu0 %v795, 64
      %v1364 = vpop.permute.xlu0 %1363
      %1365 = vrot.lane.b32.xlu0 %v800, 64
      %v1366 = vpop.permute.xlu0 %1365
      %1367 = vrot.lane.b32.xlu0 %v805, 64
      %v1368 = vpop.permute.xlu0 %1367
      %v1373 = vsel %vm1145, %v1248, 0
      %v1376 = vsel %vm1145, %v1249, 0
      %v1379 = vsel %vm1145, %v1250, 0
      %1381 = vmatprep.subr.mxu0 0.0
      %1382 = vmatpush1.msra.mxu0 %v1364
      %1383 = vmatprep.subr.mxu0 0.0
      %1384 = vmatpush1.msra.mxu0 %v1366
      %1385 = vmatprep.subr.mxu0 0.0
      %1386 = vmatpush1.msra.mxu0 %v1368
      %1387 = vmatprep.subr.mxu0 0.0
      %1388 = vmatpush1.msra.mxu0 0.0
      %1389 = vmatprep.subr.mxu0 0.0
      %1390 = vmatpush1.msra.mxu0 0.0
      %1391 = vmatprep.subr.mxu0 0.0
      %1392 = vmatpush1.msra.mxu0 0.0
      %1393 = vmatprep.subr.mxu0 0.0
      %1394 = vmatpush1.msra.mxu0 0.0
      %1395 = vmatprep.subr.mxu0 0.0
      %1396 = vmatpush1.msra.mxu0 0.0
      %1397 = vmatprep.subr.mxu0 0.0
      %1398 = vmatpush1.msra.mxu0 0.0
      %1399 = vmatprep.subr.mxu0 0.0
      %1400 = vmatpush1.msra.mxu0 0.0
      %1401 = vmatprep.subr.mxu0 0.0
      %1402 = vmatpush1.msra.mxu0 0.0
      %1403 = vmatprep.subr.mxu0 0.0
      %1404 = vmatpush1.msra.mxu0 0.0
      %1405 = vmatprep.subr.mxu0 0.0
      %1406 = vmatpush1.msra.mxu0 0.0
      %1407 = vmatprep.subr.mxu0 0.0
      %1408 = vmatpush1.msra.mxu0 0.0
      %1409 = vmatprep.subr.mxu0 0.0
      %1410 = vmatpush1.msra.mxu0 0.0
      %1411 = vmatprep.subr.mxu0 0.0
      %1412 = vmatpush1.msra.mxu0 0.0
      %1413 = vmatprep.subr.mxu0 0.0
      %1414 = vmatpush1.msra.mxu0 0.0
      %1415 = vmatprep.subr.mxu0 0.0
      %1416 = vmatpush1.msra.mxu0 0.0
      %1417 = vmatprep.subr.mxu0 0.0
      %1418 = vmatpush1.msra.mxu0 0.0
      %1419 = vmatprep.subr.mxu0 0.0
      %1420 = vmatpush1.msra.mxu0 0.0
      %1421 = vmatprep.subr.mxu0 0.0
      %1422 = vmatpush1.msra.mxu0 0.0
      %1423 = vmatprep.subr.mxu0 0.0
      %1424 = vmatpush1.msra.mxu0 0.0
      %1425 = vmatprep.subr.mxu0 0.0
      %1426 = vmatpush1.msra.mxu0 0.0
      %1427 = vmatprep.subr.mxu0 0.0
      %1428 = vmatpush1.msra.mxu0 0.0
      %1429 = vmatprep.subr.mxu0 0.0
      %1430 = vmatpush1.msra.mxu0 0.0
      %1431 = vmatprep.subr.mxu0 0.0
      %1432 = vmatpush1.msra.mxu0 0.0
      %1433 = vmatprep.subr.mxu0 0.0
      %1434 = vmatpush1.msra.mxu0 0.0
      %1435 = vmatprep.subr.mxu0 0.0
      %1436 = vmatpush1.msra.mxu0 0.0
      %1437 = vmatprep.subr.mxu0 0.0
      %1438 = vmatpush1.msra.mxu0 0.0
      %1439 = vmatprep.subr.mxu0 0.0
      %1440 = vmatpush1.msra.mxu0 0.0
      %1441 = vmatprep.subr.mxu0 0.0
      %1442 = vmatpush1.msra.mxu0 0.0
      %1443 = vmatprep.subr.mxu0 0.0
      %1444 = vmatpush1.msra.mxu0 0.0
      %1445 = vmatprep.mubr.f32.mxu0 0.0
      %1446 = vmatmul.mubr.f32.gmra.mrb[0].mxu0 %v1373
      %v1447 = vpop.f32.mrb[0].mxu0
      %v1448 = vadd.f32 0.0, %v1447
      %v1449 = vpop.f32.mrb[0].mxu0
      %1450 = vmatprep.mubr.f32.mxu0 0.0
      %1451 = vmatmul.mubr.f32.gmra.mrb[0].mxu0 %v1376
      %v1452 = vpop.f32.mrb[0].mxu0
      %v1453 = vadd.f32 0.0, %v1452
      %v1454 = vpop.f32.mrb[0].mxu0
      %1455 = vmatprep.mubr.f32.mxu0 0.0
      %1456 = vmatmul.mubr.f32.gmra.mrb[0].mxu0 %v1379
      %v1457 = vpop.f32.mrb[0].mxu0
      %v1458 = vadd.f32 0.0, %v1457
      %v1459 = vpop.f32.mrb[0].mxu0
      %1460 = vdwg.mxu0
      %1461 = vrot.lane.b32.xlu0 %v810, 64
      %v1462 = vpop.permute.xlu0 %1461
      %1463 = vrot.lane.b32.xlu0 %v815, 64
      %v1464 = vpop.permute.xlu0 %1463
      %1465 = vrot.lane.b32.xlu0 %v820, 64
      %v1466 = vpop.permute.xlu0 %1465
      %v1471 = vsel %vm1145, %v1251, 0
      %v1474 = vsel %vm1145, %v1252, 0
      %v1477 = vsel %vm1145, %v1253, 0
      %1479 = vmatprep.subr.mxu0 0.0
      %1480 = vmatpush1.msra.mxu0 %v1462
      %1481 = vmatprep.subr.mxu0 0.0
      %1482 = vmatpush1.msra.mxu0 %v1464
      %1483 = vmatprep.subr.mxu0 0.0
      %1484 = vmatpush1.msra.mxu0 %v1466
      %1485 = vmatprep.subr.mxu0 0.0
      %1486 = vmatpush1.msra.mxu0 0.0
      %1487 = vmatprep.subr.mxu0 0.0
      %1488 = vmatpush1.msra.mxu0 0.0
      %1489 = vmatprep.subr.mxu0 0.0
      %1490 = vmatpush1.msra.mxu0 0.0
      %1491 = vmatprep.subr.mxu0 0.0
      %1492 = vmatpush1.msra.mxu0 0.0
      %1493 = vmatprep.subr.mxu0 0.0
      %1494 = vmatpush1.msra.mxu0 0.0
      %1495 = vmatprep.subr.mxu0 0.0
      %1496 = vmatpush1.msra.mxu0 0.0
      %1497 = vmatprep.subr.mxu0 0.0
      %1498 = vmatpush1.msra.mxu0 0.0
      %1499 = vmatprep.subr.mxu0 0.0
      %1500 = vmatpush1.msra.mxu0 0.0
      %1501 = vmatprep.subr.mxu0 0.0
      %1502 = vmatpush1.msra.mxu0 0.0
      %1503 = vmatprep.subr.mxu0 0.0
      %1504 = vmatpush1.msra.mxu0 0.0
      %1505 = vmatprep.subr.mxu0 0.0
      %1506 = vmatpush1.msra.mxu0 0.0
      %1507 = vmatprep.subr.mxu0 0.0
      %1508 = vmatpush1.msra.mxu0 0.0
      %1509 = vmatprep.subr.mxu0 0.0
      %1510 = vmatpush1.msra.mxu0 0.0
      %1511 = vmatprep.subr.mxu0 0.0
      %1512 = vmatpush1.msra.mxu0 0.0
      %1513 = vmatprep.subr.mxu0 0.0
      %1514 = vmatpush1.msra.mxu0 0.0
      %1515 = vmatprep.subr.mxu0 0.0
      %1516 = vmatpush1.msra.mxu0 0.0
      %1517 = vmatprep.subr.mxu0 0.0
      %1518 = vmatpush1.msra.mxu0 0.0
      %1519 = vmatprep.subr.mxu0 0.0
      %1520 = vmatpush1.msra.mxu0 0.0
      %1521 = vmatprep.subr.mxu0 0.0
      %1522 = vmatpush1.msra.mxu0 0.0
      %1523 = vmatprep.subr.mxu0 0.0
      %1524 = vmatpush1.msra.mxu0 0.0
      %1525 = vmatprep.subr.mxu0 0.0
      %1526 = vmatpush1.msra.mxu0 0.0
      %1527 = vmatprep.subr.mxu0 0.0
      %1528 = vmatpush1.msra.mxu0 0.0
      %1529 = vmatprep.subr.mxu0 0.0
      %1530 = vmatpush1.msra.mxu0 0.0
      %1531 = vmatprep.subr.mxu0 0.0
      %1532 = vmatpush1.msra.mxu0 0.0
      %1533 = vmatprep.subr.mxu0 0.0
      %1534 = vmatpush1.msra.mxu0 0.0
      %1535 = vmatprep.subr.mxu0 0.0
      %1536 = vmatpush1.msra.mxu0 0.0
      %1537 = vmatprep.subr.mxu0 0.0
      %1538 = vmatpush1.msra.mxu0 0.0
      %1539 = vmatprep.subr.mxu0 0.0
      %1540 = vmatpush1.msra.mxu0 0.0
      %1541 = vmatprep.subr.mxu0 0.0
      %1542 = vmatpush1.msra.mxu0 0.0
      %1543 = vmatprep.mubr.f32.mxu0 0.0
      %1544 = vmatmul.mubr.f32.gmra.mrb[0].mxu0 %v1471
      %v1545 = vpop.f32.mrb[0].mxu0
      %v1546 = vadd.f32 0.0, %v1545
      %v1547 = vpop.f32.mrb[0].mxu0
      %1548 = vmatprep.mubr.f32.mxu0 0.0
      %1549 = vmatmul.mubr.f32.gmra.mrb[0].mxu0 %v1474
      %v1550 = vpop.f32.mrb[0].mxu0
      %v1551 = vadd.f32 0.0, %v1550
      %v1552 = vpop.f32.mrb[0].mxu0
      %1553 = vmatprep.mubr.f32.mxu0 0.0
      %1554 = vmatmul.mubr.f32.gmra.mrb[0].mxu0 %v1477
      %v1555 = vpop.f32.mrb[0].mxu0
      %v1556 = vadd.f32 0.0, %v1555
      %v1557 = vpop.f32.mrb[0].mxu0
      %1558 = vdwg.mxu0
      %1559 = vrot.lane.b32.xlu0 %v780, 112
      %v1560 = vpop.permute.xlu0 %1559
      %1561 = vrot.lane.b32.xlu0 %v785, 112
      %v1562 = vpop.permute.xlu0 %1561
      %1563 = vrot.lane.b32.xlu0 %v790, 112
      %v1564 = vpop.permute.xlu0 %1563
      %1565 = vrot.lane.b32.xlu0 %v780, 80
      %v1566 = vpop.permute.xlu0 %1565
      %1567 = vrot.lane.b32.xlu0 %v785, 80
      %v1568 = vpop.permute.xlu0 %1567
      %1569 = vrot.lane.b32.xlu0 %v790, 80
      %v1570 = vpop.permute.xlu0 %1569
      %v1571 = vsel %vm832, %v1560, 0
      %v1573 = vsel %vm832, %v1562, 0
      %v1575 = vsel %vm832, %v1564, 0
      %v1577 = vsel %vm832, %v1566, 0
      %v1579 = vsel %vm832, %v1568, 0
      %v1581 = vsel %vm832, %v1570, 0
      %1583 = vmatprep.subr.mxu0 0.0
      %1584 = vmatpush1.xpose.msra.mxu0 %v1577
      %1585 = vmatprep.subr.mxu0 0.0
      %1586 = vmatpush1.xpose.msra.mxu0 %v1579
      %1587 = vmatprep.subr.mxu0 0.0
      %1588 = vmatpush1.xpose.msra.mxu0 %v1581
      %1589 = vmatprep.subr.mxu0 0.0
      %1590 = vmatpush1.xpose.msra.mxu0 0.0
      %1591 = vmatprep.subr.mxu0 0.0
      %1592 = vmatpush1.xpose.msra.mxu0 0.0
      %1593 = vmatprep.subr.mxu0 0.0
      %1594 = vmatpush1.xpose.msra.mxu0 0.0
      %1595 = vmatprep.subr.mxu0 0.0
      %1596 = vmatpush1.xpose.msra.mxu0 0.0
      %1597 = vmatprep.subr.mxu0 0.0
      %1598 = vmatpush1.xpose.msra.mxu0 0.0
      %1599 = vmatprep.subr.mxu0 0.0
      %1600 = vmatpush1.xpose.msra.mxu0 0.0
      %1601 = vmatprep.subr.mxu0 0.0
      %1602 = vmatpush1.xpose.msra.mxu0 0.0
      %1603 = vmatprep.subr.mxu0 0.0
      %1604 = vmatpush1.xpose.msra.mxu0 0.0
      %1605 = vmatprep.subr.mxu0 0.0
      %1606 = vmatpush1.xpose.msra.mxu0 0.0
      %1607 = vmatprep.subr.mxu0 0.0
      %1608 = vmatpush1.xpose.msra.mxu0 0.0
      %1609 = vmatprep.subr.mxu0 0.0
      %1610 = vmatpush1.xpose.msra.mxu0 0.0
      %1611 = vmatprep.subr.mxu0 0.0
      %1612 = vmatpush1.xpose.msra.mxu0 0.0
      %1613 = vmatprep.subr.mxu0 0.0
      %1614 = vmatpush1.xpose.msra.mxu0 0.0
      %1615 = vmatprep.subr.mxu0 0.0
      %1616 = vmatpush1.xpose.msra.mxu0 0.0
      %1617 = vmatprep.subr.mxu0 0.0
      %1618 = vmatpush1.xpose.msra.mxu0 0.0
      %1619 = vmatprep.subr.mxu0 0.0
      %1620 = vmatpush1.xpose.msra.mxu0 0.0
      %1621 = vmatprep.subr.mxu0 0.0
      %1622 = vmatpush1.xpose.msra.mxu0 0.0
      %1623 = vmatprep.subr.mxu0 0.0
      %1624 = vmatpush1.xpose.msra.mxu0 0.0
      %1625 = vmatprep.subr.mxu0 0.0
      %1626 = vmatpush1.xpose.msra.mxu0 0.0
      %1627 = vmatprep.subr.mxu0 0.0
      %1628 = vmatpush1.xpose.msra.mxu0 0.0
      %1629 = vmatprep.subr.mxu0 0.0
      %1630 = vmatpush1.xpose.msra.mxu0 0.0
      %1631 = vmatprep.subr.mxu0 0.0
      %1632 = vmatpush1.xpose.msra.mxu0 0.0
      %1633 = vmatprep.subr.mxu0 0.0
      %1634 = vmatpush1.xpose.msra.mxu0 0.0
      %1635 = vmatprep.subr.mxu0 0.0
      %1636 = vmatpush1.xpose.msra.mxu0 0.0
      %1637 = vmatprep.subr.mxu0 0.0
      %1638 = vmatpush1.xpose.msra.mxu0 0.0
      %1639 = vmatprep.subr.mxu0 0.0
      %1640 = vmatpush1.xpose.msra.mxu0 0.0
      %1641 = vmatprep.subr.mxu0 0.0
      %1642 = vmatpush1.xpose.msra.mxu0 0.0
      %1643 = vmatprep.subr.mxu0 0.0
      %1644 = vmatpush1.xpose.msra.mxu0 0.0
      %1645 = vmatprep.subr.mxu0 0.0
      %1646 = vmatpush1.xpose.msra.mxu0 0.0
      %1647 = vmatprep.mubr.f32.mxu0 0.0
      %1648 = vmatmul.mubr.f32.gmra.mrb[0].mxu0 %v1571
      %v1649 = vpop.f32.mrb[0].mxu0
      %v1650 = vadd.f32 0.0, %v1649
      %v1651 = vpop.f32.mrb[0].mxu0
      %1652 = vmatprep.mubr.f32.mxu0 0.0
      %1653 = vmatmul.mubr.f32.gmra.mrb[0].mxu0 %v1573
      %v1654 = vpop.f32.mrb[0].mxu0
      %v1655 = vadd.f32 0.0, %v1654
      %v1656 = vpop.f32.mrb[0].mxu0
      %1657 = vmatprep.mubr.f32.mxu0 0.0
      %1658 = vmatmul.mubr.f32.gmra.mrb[0].mxu0 %v1575
      %v1659 = vpop.f32.mrb[0].mxu0
      %v1660 = vadd.f32 0.0, %v1659
      %v1661 = vpop.f32.mrb[0].mxu0
      %1662 = vdwg.mxu0
      %1663 = vrot.lane.b32.xlu0 %v795, 112
      %v1664 = vpop.permute.xlu0 %1663
      %1665 = vrot.lane.b32.xlu0 %v800, 112
      %v1666 = vpop.permute.xlu0 %1665
      %1667 = vrot.lane.b32.xlu0 %v805, 112
      %v1668 = vpop.permute.xlu0 %1667
      %1669 = vrot.lane.b32.xlu0 %v795, 80
      %v1670 = vpop.permute.xlu0 %1669
      %1671 = vrot.lane.b32.xlu0 %v800, 80
      %v1672 = vpop.permute.xlu0 %1671
      %1673 = vrot.lane.b32.xlu0 %v805, 80
      %v1674 = vpop.permute.xlu0 %1673
      %v1675 = vsel %vm832, %v1664, 0
      %v1677 = vsel %vm832, %v1666, 0
      %v1679 = vsel %vm832, %v1668, 0
      %v1681 = vsel %vm832, %v1670, 0
      %v1683 = vsel %vm832, %v1672, 0
      %v1685 = vsel %vm832, %v1674, 0
      %1687 = vmatprep.subr.mxu0 0.0
      %1688 = vmatpush1.xpose.msra.mxu0 %v1681
      %1689 = vmatprep.subr.mxu0 0.0
      %1690 = vmatpush1.xpose.msra.mxu0 %v1683
      %1691 = vmatprep.subr.mxu0 0.0
      %1692 = vmatpush1.xpose.msra.mxu0 %v1685
      %1693 = vmatprep.subr.mxu0 0.0
      %1694 = vmatpush1.xpose.msra.mxu0 0.0
      %1695 = vmatprep.subr.mxu0 0.0
      %1696 = vmatpush1.xpose.msra.mxu0 0.0
      %1697 = vmatprep.subr.mxu0 0.0
      %1698 = vmatpush1.xpose.msra.mxu0 0.0
      %1699 = vmatprep.subr.mxu0 0.0
      %1700 = vmatpush1.xpose.msra.mxu0 0.0
      %1701 = vmatprep.subr.mxu0 0.0
      %1702 = vmatpush1.xpose.msra.mxu0 0.0
      %1703 = vmatprep.subr.mxu0 0.0
      %1704 = vmatpush1.xpose.msra.mxu0 0.0
      %1705 = vmatprep.subr.mxu0 0.0
      %1706 = vmatpush1.xpose.msra.mxu0 0.0
      %1707 = vmatprep.subr.mxu0 0.0
      %1708 = vmatpush1.xpose.msra.mxu0 0.0
      %1709 = vmatprep.subr.mxu0 0.0
      %1710 = vmatpush1.xpose.msra.mxu0 0.0
      %1711 = vmatprep.subr.mxu0 0.0
      %1712 = vmatpush1.xpose.msra.mxu0 0.0
      %1713 = vmatprep.subr.mxu0 0.0
      %1714 = vmatpush1.xpose.msra.mxu0 0.0
      %1715 = vmatprep.subr.mxu0 0.0
      %1716 = vmatpush1.xpose.msra.mxu0 0.0
      %1717 = vmatprep.subr.mxu0 0.0
      %1718 = vmatpush1.xpose.msra.mxu0 0.0
      %1719 = vmatprep.subr.mxu0 0.0
      %1720 = vmatpush1.xpose.msra.mxu0 0.0
      %1721 = vmatprep.subr.mxu0 0.0
      %1722 = vmatpush1.xpose.msra.mxu0 0.0
      %1723 = vmatprep.subr.mxu0 0.0
      %1724 = vmatpush1.xpose.msra.mxu0 0.0
      %1725 = vmatprep.subr.mxu0 0.0
      %1726 = vmatpush1.xpose.msra.mxu0 0.0
      %1727 = vmatprep.subr.mxu0 0.0
      %1728 = vmatpush1.xpose.msra.mxu0 0.0
      %1729 = vmatprep.subr.mxu0 0.0
      %1730 = vmatpush1.xpose.msra.mxu0 0.0
      %1731 = vmatprep.subr.mxu0 0.0
      %1732 = vmatpush1.xpose.msra.mxu0 0.0
      %1733 = vmatprep.subr.mxu0 0.0
      %1734 = vmatpush1.xpose.msra.mxu0 0.0
      %1735 = vmatprep.subr.mxu0 0.0
      %1736 = vmatpush1.xpose.msra.mxu0 0.0
      %1737 = vmatprep.subr.mxu0 0.0
      %1738 = vmatpush1.xpose.msra.mxu0 0.0
      %1739 = vmatprep.subr.mxu0 0.0
      %1740 = vmatpush1.xpose.msra.mxu0 0.0
      %1741 = vmatprep.subr.mxu0 0.0
      %1742 = vmatpush1.xpose.msra.mxu0 0.0
      %1743 = vmatprep.subr.mxu0 0.0
      %1744 = vmatpush1.xpose.msra.mxu0 0.0
      %1745 = vmatprep.subr.mxu0 0.0
      %1746 = vmatpush1.xpose.msra.mxu0 0.0
      %1747 = vmatprep.subr.mxu0 0.0
      %1748 = vmatpush1.xpose.msra.mxu0 0.0
      %1749 = vmatprep.subr.mxu0 0.0
      %1750 = vmatpush1.xpose.msra.mxu0 0.0
      %1751 = vmatprep.mubr.f32.mxu0 0.0
      %1752 = vmatmul.mubr.f32.gmra.mrb[0].mxu0 %v1675
      %v1753 = vpop.f32.mrb[0].mxu0
      %v1754 = vadd.f32 0.0, %v1753
      %v1755 = vpop.f32.mrb[0].mxu0
      %1756 = vmatprep.mubr.f32.mxu0 0.0
      %1757 = vmatmul.mubr.f32.gmra.mrb[0].mxu0 %v1677
      %v1758 = vpop.f32.mrb[0].mxu0
      %v1759 = vadd.f32 0.0, %v1758
      %v1760 = vpop.f32.mrb[0].mxu0
      %1761 = vmatprep.mubr.f32.mxu0 0.0
      %1762 = vmatmul.mubr.f32.gmra.mrb[0].mxu0 %v1679
      %v1763 = vpop.f32.mrb[0].mxu0
      %v1764 = vadd.f32 0.0, %v1763
      %v1765 = vpop.f32.mrb[0].mxu0
      %1766 = vdwg.mxu0
      %1767 = vrot.lane.b32.xlu0 %v810, 112
      %v1768 = vpop.permute.xlu0 %1767
      %1769 = vrot.lane.b32.xlu0 %v815, 112
      %v1770 = vpop.permute.xlu0 %1769
      %1771 = vrot.lane.b32.xlu0 %v820, 112
      %v1772 = vpop.permute.xlu0 %1771
      %1773 = vrot.lane.b32.xlu0 %v810, 80
      %v1774 = vpop.permute.xlu0 %1773
      %1775 = vrot.lane.b32.xlu0 %v815, 80
      %v1776 = vpop.permute.xlu0 %1775
      %1777 = vrot.lane.b32.xlu0 %v820, 80
      %v1778 = vpop.permute.xlu0 %1777
      %v1779 = vsel %vm832, %v1768, 0
      %v1781 = vsel %vm832, %v1770, 0
      %v1783 = vsel %vm832, %v1772, 0
      %v1785 = vsel %vm832, %v1774, 0
      %v1787 = vsel %vm832, %v1776, 0
      %v1789 = vsel %vm832, %v1778, 0
      %1791 = vmatprep.subr.mxu0 0.0
      %1792 = vmatpush1.xpose.msra.mxu0 %v1785
      %1793 = vmatprep.subr.mxu0 0.0
      %1794 = vmatpush1.xpose.msra.mxu0 %v1787
      %1795 = vmatprep.subr.mxu0 0.0
      %1796 = vmatpush1.xpose.msra.mxu0 %v1789
      %1797 = vmatprep.subr.mxu0 0.0
      %1798 = vmatpush1.xpose.msra.mxu0 0.0
      %1799 = vmatprep.subr.mxu0 0.0
      %1800 = vmatpush1.xpose.msra.mxu0 0.0
      %1801 = vmatprep.subr.mxu0 0.0
      %1802 = vmatpush1.xpose.msra.mxu0 0.0
      %1803 = vmatprep.subr.mxu0 0.0
      %1804 = vmatpush1.xpose.msra.mxu0 0.0
      %1805 = vmatprep.subr.mxu0 0.0
      %1806 = vmatpush1.xpose.msra.mxu0 0.0
      %1807 = vmatprep.subr.mxu0 0.0
      %1808 = vmatpush1.xpose.msra.mxu0 0.0
      %1809 = vmatprep.subr.mxu0 0.0
      %1810 = vmatpush1.xpose.msra.mxu0 0.0
      %1811 = vmatprep.subr.mxu0 0.0
      %1812 = vmatpush1.xpose.msra.mxu0 0.0
      %1813 = vmatprep.subr.mxu0 0.0
      %1814 = vmatpush1.xpose.msra.mxu0 0.0
      %1815 = vmatprep.subr.mxu0 0.0
      %1816 = vmatpush1.xpose.msra.mxu0 0.0
      %1817 = vmatprep.subr.mxu0 0.0
      %1818 = vmatpush1.xpose.msra.mxu0 0.0
      %1819 = vmatprep.subr.mxu0 0.0
      %1820 = vmatpush1.xpose.msra.mxu0 0.0
      %1821 = vmatprep.subr.mxu0 0.0
      %1822 = vmatpush1.xpose.msra.mxu0 0.0
      %1823 = vmatprep.subr.mxu0 0.0
      %1824 = vmatpush1.xpose.msra.mxu0 0.0
      %1825 = vmatprep.subr.mxu0 0.0
      %1826 = vmatpush1.xpose.msra.mxu0 0.0
      %1827 = vmatprep.subr.mxu0 0.0
      %1828 = vmatpush1.xpose.msra.mxu0 0.0
      %1829 = vmatprep.subr.mxu0 0.0
      %1830 = vmatpush1.xpose.msra.mxu0 0.0
      %1831 = vmatprep.subr.mxu0 0.0
      %1832 = vmatpush1.xpose.msra.mxu0 0.0
      %1833 = vmatprep.subr.mxu0 0.0
      %1834 = vmatpush1.xpose.msra.mxu0 0.0
      %1835 = vmatprep.subr.mxu0 0.0
      %1836 = vmatpush1.xpose.msra.mxu0 0.0
      %1837 = vmatprep.subr.mxu0 0.0
      %1838 = vmatpush1.xpose.msra.mxu0 0.0
      %1839 = vmatprep.subr.mxu0 0.0
      %1840 = vmatpush1.xpose.msra.mxu0 0.0
      %1841 = vmatprep.subr.mxu0 0.0
      %1842 = vmatpush1.xpose.msra.mxu0 0.0
      %1843 = vmatprep.subr.mxu0 0.0
      %1844 = vmatpush1.xpose.msra.mxu0 0.0
      %1845 = vmatprep.subr.mxu0 0.0
      %1846 = vmatpush1.xpose.msra.mxu0 0.0
      %1847 = vmatprep.subr.mxu0 0.0
      %1848 = vmatpush1.xpose.msra.mxu0 0.0
      %1849 = vmatprep.subr.mxu0 0.0
      %1850 = vmatpush1.xpose.msra.mxu0 0.0
      %1851 = vmatprep.subr.mxu0 0.0
      %1852 = vmatpush1.xpose.msra.mxu0 0.0
      %1853 = vmatprep.subr.mxu0 0.0
      %1854 = vmatpush1.xpose.msra.mxu0 0.0
      %1855 = vmatprep.mubr.f32.mxu0 0.0
      %1856 = vmatmul.mubr.f32.gmra.mrb[0].mxu0 %v1779
      %v1857 = vpop.f32.mrb[0].mxu0
      %v1858 = vadd.f32 0.0, %v1857
      %v1859 = vpop.f32.mrb[0].mxu0
      %1860 = vmatprep.mubr.f32.mxu0 0.0
      %1861 = vmatmul.mubr.f32.gmra.mrb[0].mxu0 %v1781
      %v1862 = vpop.f32.mrb[0].mxu0
      %v1863 = vadd.f32 0.0, %v1862
      %v1864 = vpop.f32.mrb[0].mxu0
      %1865 = vmatprep.mubr.f32.mxu0 0.0
      %1866 = vmatmul.mubr.f32.gmra.mrb[0].mxu0 %v1783
      %v1867 = vpop.f32.mrb[0].mxu0
      %v1868 = vadd.f32 0.0, %v1867
      %v1869 = vpop.f32.mrb[0].mxu0
      %1870 = vdwg.mxu0
      %v1871 = vmul.f32 %v1650, 0.25
      %v1872 = vmul.f32 %v1655, 0.25
      %v1873 = vmul.f32 %v1660, 0.25
      %v1874 = vmul.f32 %v1754, 0.25
      %v1875 = vmul.f32 %v1759, 0.25
      %v1876 = vmul.f32 %v1764, 0.25
      %v1877 = vmul.f32 %v1858, 0.25
      %v1878 = vmul.f32 %v1863, 0.25
      %v1879 = vmul.f32 %v1868, 0.25
      %v1880 = vsel %vm524, %v1871, -1e+30
      %v1881 = vsel %vm524, %v1872, -1e+30
      %v1882 = vsel %vm524, %v1873, -1e+30
      %v1883 = vsel %vm524, %v1874, -1e+30
      %v1884 = vsel %vm524, %v1875, -1e+30
      %v1885 = vsel %vm524, %v1876, -1e+30
      %v1886 = vsel %vm524, %v1877, -1e+30
      %v1887 = vsel %vm524, %v1878, -1e+30
      %v1888 = vsel %vm524, %v1879, -1e+30
      %v1889 = vsel %vm1145, %v1880, -inf
      %1890 = vmax.xlane.f32.xlu0 %v1889
      %v1891 = vpop.xlane.xlu0 %1890
      %v1892 = vsel %vm1145, %v1881, -inf
      %1893 = vmax.xlane.f32.xlu0 %v1892
      %v1894 = vpop.xlane.xlu0 %1893
      %v1895 = vsel %vm1145, %v1882, -inf
      %1896 = vmax.xlane.f32.xlu0 %v1895
      %v1897 = vpop.xlane.xlu0 %1896
      %v1898 = vsel %vm1145, %v1883, -inf
      %1899 = vmax.xlane.f32.xlu0 %v1898
      %v1900 = vpop.xlane.xlu0 %1899
      %v1901 = vsel %vm1145, %v1884, -inf
      %1902 = vmax.xlane.f32.xlu0 %v1901
      %v1903 = vpop.xlane.xlu0 %1902
      %v1904 = vsel %vm1145, %v1885, -inf
      %1905 = vmax.xlane.f32.xlu0 %v1904
      %v1906 = vpop.xlane.xlu0 %1905
      %v1907 = vsel %vm1145, %v1886, -inf
      %1908 = vmax.xlane.f32.xlu0 %v1907
      %v1909 = vpop.xlane.xlu0 %1908
      %v1910 = vsel %vm1145, %v1887, -inf
      %1911 = vmax.xlane.f32.xlu0 %v1910
      %v1912 = vpop.xlane.xlu0 %1911
      %v1913 = vsel %vm1145, %v1888, -inf
      %1914 = vmax.xlane.f32.xlu0 %v1913
      %v1915 = vpop.xlane.xlu0 %1914
      %v1916 = vsub.f32 %v1880, %v1891
      %v1917 = vsub.f32 %v1881, %v1894
      %v1918 = vsub.f32 %v1882, %v1897
      %v1919 = vsub.f32 %v1883, %v1900
      %v1920 = vsub.f32 %v1884, %v1903
      %v1921 = vsub.f32 %v1885, %v1906
      %v1922 = vsub.f32 %v1886, %v1909
      %v1923 = vsub.f32 %v1887, %v1912
      %v1924 = vsub.f32 %v1888, %v1915
      %v1925 = vmul.f32 %v1916, 1.442695
      %v1926 = vpow.pop %v1925
      %v1927 = vmul.f32 %v1917, 1.442695
      %v1928 = vpow.pop %v1927
      %v1929 = vmul.f32 %v1918, 1.442695
      %v1930 = vpow.pop %v1929
      %v1931 = vmul.f32 %v1919, 1.442695
      %v1932 = vpow.pop %v1931
      %v1933 = vmul.f32 %v1920, 1.442695
      %v1934 = vpow.pop %v1933
      %v1935 = vmul.f32 %v1921, 1.442695
      %v1936 = vpow.pop %v1935
      %v1937 = vmul.f32 %v1922, 1.442695
      %v1938 = vpow.pop %v1937
      %v1939 = vmul.f32 %v1923, 1.442695
      %v1940 = vpow.pop %v1939
      %v1941 = vmul.f32 %v1924, 1.442695
      %v1942 = vpow.pop %v1941
      %v1943 = vsel %vm1145, %v1926, 0.0
      %1944 = vadd.xlane.f32.xlu0 %v1943
      %v1945 = vpop.xlane.xlu0 %1944
      %v1946 = vsel %vm1145, %v1928, 0.0
      %1947 = vadd.xlane.f32.xlu0 %v1946
      %v1948 = vpop.xlane.xlu0 %1947
      %v1949 = vsel %vm1145, %v1930, 0.0
      %1950 = vadd.xlane.f32.xlu0 %v1949
      %v1951 = vpop.xlane.xlu0 %1950
      %v1952 = vsel %vm1145, %v1932, 0.0
      %1953 = vadd.xlane.f32.xlu0 %v1952
      %v1954 = vpop.xlane.xlu0 %1953
      %v1955 = vsel %vm1145, %v1934, 0.0
      %1956 = vadd.xlane.f32.xlu0 %v1955
      %v1957 = vpop.xlane.xlu0 %1956
      %v1958 = vsel %vm1145, %v1936, 0.0
      %1959 = vadd.xlane.f32.xlu0 %v1958
      %v1960 = vpop.xlane.xlu0 %1959
      %v1961 = vsel %vm1145, %v1938, 0.0
      %1962 = vadd.xlane.f32.xlu0 %v1961
      %v1963 = vpop.xlane.xlu0 %1962
      %v1964 = vsel %vm1145, %v1940, 0.0
      %1965 = vadd.xlane.f32.xlu0 %v1964
      %v1966 = vpop.xlane.xlu0 %1965
      %v1967 = vsel %vm1145, %v1942, 0.0
      %1968 = vadd.xlane.f32.xlu0 %v1967
      %v1969 = vpop.xlane.xlu0 %1968
      %v1970 = vrcp.pop %v1945
      %v1971 = vmul.f32 1.0, %v1970
      %v1972 = vrcp.pop %v1948
      %v1973 = vmul.f32 1.0, %v1972
      %v1974 = vrcp.pop %v1951
      %v1975 = vmul.f32 1.0, %v1974
      %v1976 = vrcp.pop %v1954
      %v1977 = vmul.f32 1.0, %v1976
      %v1978 = vrcp.pop %v1957
      %v1979 = vmul.f32 1.0, %v1978
      %v1980 = vrcp.pop %v1960
      %v1981 = vmul.f32 1.0, %v1980
      %v1982 = vrcp.pop %v1963
      %v1983 = vmul.f32 1.0, %v1982
      %v1984 = vrcp.pop %v1966
      %v1985 = vmul.f32 1.0, %v1984
      %v1986 = vrcp.pop %v1969
      %v1987 = vmul.f32 1.0, %v1986
      %v1988 = vmul.f32 %v1926, %v1971
      %v1989 = vmul.f32 %v1928, %v1973
      %v1990 = vmul.f32 %v1930, %v1975
      %v1991 = vmul.f32 %v1932, %v1977
      %v1992 = vmul.f32 %v1934, %v1979
      %v1993 = vmul.f32 %v1936, %v1981
      %v1994 = vmul.f32 %v1938, %v1983
      %v1995 = vmul.f32 %v1940, %v1985
      %v1996 = vmul.f32 %v1942, %v1987
      %s1997 = scalar_lea.vmem %s351, 24
      %1998 = vst.msk [vmem:[%s1997] sm:$0xff] %vm1254, %v1988
      %1999 = vst.msk [vmem:[%s1997 + $0x8] sm:$0xff] %vm1254, %v1989
      %2000 = vst.msk [vmem:[%s1997 + $0x10] sm:$0x1] %vm1257, %v1990
      %2001 = vst.msk [vmem:[%s1997 + $0x60] sm:$0xff] %vm1254, %v1991
      %2002 = vst.msk [vmem:[%s1997 + $0x68] sm:$0xff] %vm1254, %v1992
      %2003 = vst.msk [vmem:[%s1997 + $0x70] sm:$0x1] %vm1257, %v1993
      %2004 = vst.msk [vmem:[%s1997 + $0xc0] sm:$0xff] %vm1254, %v1994
      %2005 = vst.msk [vmem:[%s1997 + $0xc8] sm:$0xff] %vm1254, %v1995
      %2006 = vst.msk [vmem:[%s1997 + $0xd0] sm:$0x1] %vm1257, %v1996
      %2007 = vrot.lane.b32.xlu0 %v780, 48
      %v2008 = vpop.permute.xlu0 %2007
      %2009 = vrot.lane.b32.xlu0 %v785, 48
      %v2010 = vpop.permute.xlu0 %2009
      %2011 = vrot.lane.b32.xlu0 %v790, 48
      %v2012 = vpop.permute.xlu0 %2011
      %v2017 = vsel %vm1145, %v1988, 0
      %v2020 = vsel %vm1145, %v1989, 0
      %v2023 = vsel %vm1145, %v1990, 0
      %2025 = vmatprep.subr.mxu0 0.0
      %2026 = vmatpush1.msra.mxu0 %v2008
      %2027 = vmatprep.subr.mxu0 0.0
      %2028 = vmatpush1.msra.mxu0 %v2010
      %2029 = vmatprep.subr.mxu0 0.0
      %2030 = vmatpush1.msra.mxu0 %v2012
      %2031 = vmatprep.subr.mxu0 0.0
      %2032 = vmatpush1.msra.mxu0 0.0
      %2033 = vmatprep.subr.mxu0 0.0
      %2034 = vmatpush1.msra.mxu0 0.0
      %2035 = vmatprep.subr.mxu0 0.0
      %2036 = vmatpush1.msra.mxu0 0.0
      %2037 = vmatprep.subr.mxu0 0.0
      %2038 = vmatpush1.msra.mxu0 0.0
      %2039 = vmatprep.subr.mxu0 0.0
      %2040 = vmatpush1.msra.mxu0 0.0
      %2041 = vmatprep.subr.mxu0 0.0
      %2042 = vmatpush1.msra.mxu0 0.0
      %2043 = vmatprep.subr.mxu0 0.0
      %2044 = vmatpush1.msra.mxu0 0.0
      %2045 = vmatprep.subr.mxu0 0.0
      %2046 = vmatpush1.msra.mxu0 0.0
      %2047 = vmatprep.subr.mxu0 0.0
      %2048 = vmatpush1.msra.mxu0 0.0
      %2049 = vmatprep.subr.mxu0 0.0
      %2050 = vmatpush1.msra.mxu0 0.0
      %2051 = vmatprep.subr.mxu0 0.0
      %2052 = vmatpush1.msra.mxu0 0.0
      %2053 = vmatprep.subr.mxu0 0.0
      %2054 = vmatpush1.msra.mxu0 0.0
      %2055 = vmatprep.subr.mxu0 0.0
      %2056 = vmatpush1.msra.mxu0 0.0
      %2057 = vmatprep.subr.mxu0 0.0
      %2058 = vmatpush1.msra.mxu0 0.0
      %2059 = vmatprep.subr.mxu0 0.0
      %2060 = vmatpush1.msra.mxu0 0.0
      %2061 = vmatprep.subr.mxu0 0.0
      %2062 = vmatpush1.msra.mxu0 0.0
      %2063 = vmatprep.subr.mxu0 0.0
      %2064 = vmatpush1.msra.mxu0 0.0
      %2065 = vmatprep.subr.mxu0 0.0
      %2066 = vmatpush1.msra.mxu0 0.0
      %2067 = vmatprep.subr.mxu0 0.0
      %2068 = vmatpush1.msra.mxu0 0.0
      %2069 = vmatprep.subr.mxu0 0.0
      %2070 = vmatpush1.msra.mxu0 0.0
      %2071 = vmatprep.subr.mxu0 0.0
      %2072 = vmatpush1.msra.mxu0 0.0
      %2073 = vmatprep.subr.mxu0 0.0
      %2074 = vmatpush1.msra.mxu0 0.0
      %2075 = vmatprep.subr.mxu0 0.0
      %2076 = vmatpush1.msra.mxu0 0.0
      %2077 = vmatprep.subr.mxu0 0.0
      %2078 = vmatpush1.msra.mxu0 0.0
      %2079 = vmatprep.subr.mxu0 0.0
      %2080 = vmatpush1.msra.mxu0 0.0
      %2081 = vmatprep.subr.mxu0 0.0
      %2082 = vmatpush1.msra.mxu0 0.0
      %2083 = vmatprep.subr.mxu0 0.0
      %2084 = vmatpush1.msra.mxu0 0.0
      %2085 = vmatprep.subr.mxu0 0.0
      %2086 = vmatpush1.msra.mxu0 0.0
      %2087 = vmatprep.subr.mxu0 0.0
      %2088 = vmatpush1.msra.mxu0 0.0
      %2089 = vmatprep.mubr.f32.mxu0 0.0
      %2090 = vmatmul.mubr.f32.gmra.mrb[0].mxu0 %v2017
      %v2091 = vpop.f32.mrb[0].mxu0
      %v2092 = vadd.f32 0.0, %v2091
      %v2093 = vpop.f32.mrb[0].mxu0
      %2094 = vmatprep.mubr.f32.mxu0 0.0
      %2095 = vmatmul.mubr.f32.gmra.mrb[0].mxu0 %v2020
      %v2096 = vpop.f32.mrb[0].mxu0
      %v2097 = vadd.f32 0.0, %v2096
      %v2098 = vpop.f32.mrb[0].mxu0
      %2099 = vmatprep.mubr.f32.mxu0 0.0
      %2100 = vmatmul.mubr.f32.gmra.mrb[0].mxu0 %v2023
      %v2101 = vpop.f32.mrb[0].mxu0
      %v2102 = vadd.f32 0.0, %v2101
      %v2103 = vpop.f32.mrb[0].mxu0
      %2104 = vdwg.mxu0
      %2105 = vrot.lane.b32.xlu0 %v795, 48
      %v2106 = vpop.permute.xlu0 %2105
      %2107 = vrot.lane.b32.xlu0 %v800, 48
      %v2108 = vpop.permute.xlu0 %2107
      %2109 = vrot.lane.b32.xlu0 %v805, 48
      %v2110 = vpop.permute.xlu0 %2109
      %v2115 = vsel %vm1145, %v1991, 0
      %v2118 = vsel %vm1145, %v1992, 0
      %v2121 = vsel %vm1145, %v1993, 0
      %2123 = vmatprep.subr.mxu0 0.0
      %2124 = vmatpush1.msra.mxu0 %v2106
      %2125 = vmatprep.subr.mxu0 0.0
      %2126 = vmatpush1.msra.mxu0 %v2108
      %2127 = vmatprep.subr.mxu0 0.0
      %2128 = vmatpush1.msra.mxu0 %v2110
      %2129 = vmatprep.subr.mxu0 0.0
      %2130 = vmatpush1.msra.mxu0 0.0
      %2131 = vmatprep.subr.mxu0 0.0
      %2132 = vmatpush1.msra.mxu0 0.0
      %2133 = vmatprep.subr.mxu0 0.0
      %2134 = vmatpush1.msra.mxu0 0.0
      %2135 = vmatprep.subr.mxu0 0.0
      %2136 = vmatpush1.msra.mxu0 0.0
      %2137 = vmatprep.subr.mxu0 0.0
      %2138 = vmatpush1.msra.mxu0 0.0
      %2139 = vmatprep.subr.mxu0 0.0
      %2140 = vmatpush1.msra.mxu0 0.0
      %2141 = vmatprep.subr.mxu0 0.0
      %2142 = vmatpush1.msra.mxu0 0.0
      %2143 = vmatprep.subr.mxu0 0.0
      %2144 = vmatpush1.msra.mxu0 0.0
      %2145 = vmatprep.subr.mxu0 0.0
      %2146 = vmatpush1.msra.mxu0 0.0
      %2147 = vmatprep.subr.mxu0 0.0
      %2148 = vmatpush1.msra.mxu0 0.0
      %2149 = vmatprep.subr.mxu0 0.0
      %2150 = vmatpush1.msra.mxu0 0.0
      %2151 = vmatprep.subr.mxu0 0.0
      %2152 = vmatpush1.msra.mxu0 0.0
      %2153 = vmatprep.subr.mxu0 0.0
      %2154 = vmatpush1.msra.mxu0 0.0
      %2155 = vmatprep.subr.mxu0 0.0
      %2156 = vmatpush1.msra.mxu0 0.0
      %2157 = vmatprep.subr.mxu0 0.0
      %2158 = vmatpush1.msra.mxu0 0.0
      %2159 = vmatprep.subr.mxu0 0.0
      %2160 = vmatpush1.msra.mxu0 0.0
      %2161 = vmatprep.subr.mxu0 0.0
      %2162 = vmatpush1.msra.mxu0 0.0
      %2163 = vmatprep.subr.mxu0 0.0
      %2164 = vmatpush1.msra.mxu0 0.0
      %2165 = vmatprep.subr.mxu0 0.0
      %2166 = vmatpush1.msra.mxu0 0.0
      %2167 = vmatprep.subr.mxu0 0.0
      %2168 = vmatpush1.msra.mxu0 0.0
      %2169 = vmatprep.subr.mxu0 0.0
      %2170 = vmatpush1.msra.mxu0 0.0
      %2171 = vmatprep.subr.mxu0 0.0
      %2172 = vmatpush1.msra.mxu0 0.0
      %2173 = vmatprep.subr.mxu0 0.0
      %2174 = vmatpush1.msra.mxu0 0.0
      %2175 = vmatprep.subr.mxu0 0.0
      %2176 = vmatpush1.msra.mxu0 0.0
      %2177 = vmatprep.subr.mxu0 0.0
      %2178 = vmatpush1.msra.mxu0 0.0
      %2179 = vmatprep.subr.mxu0 0.0
      %2180 = vmatpush1.msra.mxu0 0.0
      %2181 = vmatprep.subr.mxu0 0.0
      %2182 = vmatpush1.msra.mxu0 0.0
      %2183 = vmatprep.subr.mxu0 0.0
      %2184 = vmatpush1.msra.mxu0 0.0
      %2185 = vmatprep.subr.mxu0 0.0
      %2186 = vmatpush1.msra.mxu0 0.0
      %2187 = vmatprep.mubr.f32.mxu0 0.0
      %2188 = vmatmul.mubr.f32.gmra.mrb[0].mxu0 %v2115
      %v2189 = vpop.f32.mrb[0].mxu0
      %v2190 = vadd.f32 0.0, %v2189
      %v2191 = vpop.f32.mrb[0].mxu0
      %2192 = vmatprep.mubr.f32.mxu0 0.0
      %2193 = vmatmul.mubr.f32.gmra.mrb[0].mxu0 %v2118
      %v2194 = vpop.f32.mrb[0].mxu0
      %v2195 = vadd.f32 0.0, %v2194
      %v2196 = vpop.f32.mrb[0].mxu0
      %2197 = vmatprep.mubr.f32.mxu0 0.0
      %2198 = vmatmul.mubr.f32.gmra.mrb[0].mxu0 %v2121
      %v2199 = vpop.f32.mrb[0].mxu0
      %v2200 = vadd.f32 0.0, %v2199
      %v2201 = vpop.f32.mrb[0].mxu0
      %2202 = vdwg.mxu0
      %2203 = vrot.lane.b32.xlu0 %v810, 48
      %v2204 = vpop.permute.xlu0 %2203
      %2205 = vrot.lane.b32.xlu0 %v815, 48
      %v2206 = vpop.permute.xlu0 %2205
      %2207 = vrot.lane.b32.xlu0 %v820, 48
      %v2208 = vpop.permute.xlu0 %2207
      %v2213 = vsel %vm1145, %v1994, 0
      %v2216 = vsel %vm1145, %v1995, 0
      %v2219 = vsel %vm1145, %v1996, 0
      %2221 = vmatprep.subr.mxu0 0.0
      %2222 = vmatpush1.msra.mxu0 %v2204
      %2223 = vmatprep.subr.mxu0 0.0
      %2224 = vmatpush1.msra.mxu0 %v2206
      %2225 = vmatprep.subr.mxu0 0.0
      %2226 = vmatpush1.msra.mxu0 %v2208
      %2227 = vmatprep.subr.mxu0 0.0
      %2228 = vmatpush1.msra.mxu0 0.0
      %2229 = vmatprep.subr.mxu0 0.0
      %2230 = vmatpush1.msra.mxu0 0.0
      %2231 = vmatprep.subr.mxu0 0.0
      %2232 = vmatpush1.msra.mxu0 0.0
      %2233 = vmatprep.subr.mxu0 0.0
      %2234 = vmatpush1.msra.mxu0 0.0
      %2235 = vmatprep.subr.mxu0 0.0
      %2236 = vmatpush1.msra.mxu0 0.0
      %2237 = vmatprep.subr.mxu0 0.0
      %2238 = vmatpush1.msra.mxu0 0.0
      %2239 = vmatprep.subr.mxu0 0.0
      %2240 = vmatpush1.msra.mxu0 0.0
      %2241 = vmatprep.subr.mxu0 0.0
      %2242 = vmatpush1.msra.mxu0 0.0
      %2243 = vmatprep.subr.mxu0 0.0
      %2244 = vmatpush1.msra.mxu0 0.0
      %2245 = vmatprep.subr.mxu0 0.0
      %2246 = vmatpush1.msra.mxu0 0.0
      %2247 = vmatprep.subr.mxu0 0.0
      %2248 = vmatpush1.msra.mxu0 0.0
      %2249 = vmatprep.subr.mxu0 0.0
      %2250 = vmatpush1.msra.mxu0 0.0
      %2251 = vmatprep.subr.mxu0 0.0
      %2252 = vmatpush1.msra.mxu0 0.0
      %2253 = vmatprep.subr.mxu0 0.0
      %2254 = vmatpush1.msra.mxu0 0.0
      %2255 = vmatprep.subr.mxu0 0.0
      %2256 = vmatpush1.msra.mxu0 0.0
      %2257 = vmatprep.subr.mxu0 0.0
      %2258 = vmatpush1.msra.mxu0 0.0
      %2259 = vmatprep.subr.mxu0 0.0
      %2260 = vmatpush1.msra.mxu0 0.0
      %2261 = vmatprep.subr.mxu0 0.0
      %2262 = vmatpush1.msra.mxu0 0.0
      %2263 = vmatprep.subr.mxu0 0.0
      %2264 = vmatpush1.msra.mxu0 0.0
      %2265 = vmatprep.subr.mxu0 0.0
      %2266 = vmatpush1.msra.mxu0 0.0
      %2267 = vmatprep.subr.mxu0 0.0
      %2268 = vmatpush1.msra.mxu0 0.0
      %2269 = vmatprep.subr.mxu0 0.0
      %2270 = vmatpush1.msra.mxu0 0.0
      %2271 = vmatprep.subr.mxu0 0.0
      %2272 = vmatpush1.msra.mxu0 0.0
      %2273 = vmatprep.subr.mxu0 0.0
      %2274 = vmatpush1.msra.mxu0 0.0
      %2275 = vmatprep.subr.mxu0 0.0
      %2276 = vmatpush1.msra.mxu0 0.0
      %2277 = vmatprep.subr.mxu0 0.0
      %2278 = vmatpush1.msra.mxu0 0.0
      %2279 = vmatprep.subr.mxu0 0.0
      %2280 = vmatpush1.msra.mxu0 0.0
      %2281 = vmatprep.subr.mxu0 0.0
      %2282 = vmatpush1.msra.mxu0 0.0
      %2283 = vmatprep.subr.mxu0 0.0
      %2284 = vmatpush1.msra.mxu0 0.0
      %2285 = vmatprep.mubr.f32.mxu0 0.0
      %2286 = vmatmul.mubr.f32.gmra.mrb[0].mxu0 %v2213
      %v2287 = vpop.f32.mrb[0].mxu0
      %v2288 = vadd.f32 0.0, %v2287
      %v2289 = vpop.f32.mrb[0].mxu0
      %2290 = vmatprep.mubr.f32.mxu0 0.0
      %2291 = vmatmul.mubr.f32.gmra.mrb[0].mxu0 %v2216
      %v2292 = vpop.f32.mrb[0].mxu0
      %v2293 = vadd.f32 0.0, %v2292
      %v2294 = vpop.f32.mrb[0].mxu0
      %2295 = vmatprep.mubr.f32.mxu0 0.0
      %2296 = vmatmul.mubr.f32.gmra.mrb[0].mxu0 %v2219
      %v2297 = vpop.f32.mrb[0].mxu0
      %v2298 = vadd.f32 0.0, %v2297
      %v2299 = vpop.f32.mrb[0].mxu0
      %2300 = vdwg.mxu0
      %2310 = vrot.lane.b32.xlu0 %v2092, 16
      %v2311 = vpop.permute.xlu0 %2310
      %2312 = vrot.lane.b32.xlu0 %v2097, 16
      %v2313 = vpop.permute.xlu0 %2312
      %2314 = vrot.lane.b32.xlu0 %v2102, 16
      %v2315 = vpop.permute.xlu0 %2314
      %2316 = vrot.lane.b32.xlu0 %v2190, 16
      %v2317 = vpop.permute.xlu0 %2316
      %2318 = vrot.lane.b32.xlu0 %v2195, 16
      %v2319 = vpop.permute.xlu0 %2318
      %2320 = vrot.lane.b32.xlu0 %v2200, 16
      %v2321 = vpop.permute.xlu0 %2320
      %2322 = vrot.lane.b32.xlu0 %v2288, 16
      %v2323 = vpop.permute.xlu0 %2322
      %2324 = vrot.lane.b32.xlu0 %v2293, 16
      %v2325 = vpop.permute.xlu0 %2324
      %2326 = vrot.lane.b32.xlu0 %v2298, 16
      %v2327 = vpop.permute.xlu0 %2326
      %v2337 = vsel %vm832, %v1350, %v2311
      %v2338 = vsel %vm832, %v1355, %v2313
      %v2339 = vsel %vm832, %v1360, %v2315
      %v2340 = vsel %vm832, %v1448, %v2317
      %v2341 = vsel %vm832, %v1453, %v2319
      %v2342 = vsel %vm832, %v1458, %v2321
      %v2343 = vsel %vm832, %v1546, %v2323
      %v2344 = vsel %vm832, %v1551, %v2325
      %v2345 = vsel %vm832, %v1556, %v2327
      %v2346 = vld [vmem:[%s5] sm:$0xff]
      %v2347 = vld [vmem:[%s5 + $0x8] sm:$0xff]
      %v2348 = vld [vmem:[%s5 + $0x10] sm:$0xff]
      %v2349 = vld [vmem:[%s5 + $0x18] sm:$0xff]
      %v2351 = vsel %vm533, %v2337, 0
      %v2354 = vsel %vm533, %v2338, 0
      %v2357 = vsel %vm533, %v2339, 0
      %v2360 = vsel %vm533, %v2340, 0
      %v2363 = vsel %vm533, %v2341, 0
      %v2366 = vsel %vm533, %v2342, 0
      %v2369 = vsel %vm533, %v2343, 0
      %v2372 = vsel %vm533, %v2344, 0
      %v2375 = vsel %vm533, %v2345, 0
      %2377 = vmatprep.subr.mxu0 0.0
      %2378 = vmatpush1.msra.mxu0 %v2346
      %2379 = vmatprep.subr.mxu0 0.0
      %2380 = vmatpush1.msra.mxu0 %v2347
      %2381 = vmatprep.subr.mxu0 0.0
      %2382 = vmatpush1.msra.mxu0 %v2348
      %2383 = vmatprep.subr.mxu0 0.0
      %2384 = vmatpush1.msra.mxu0 %v2349
      %2385 = vmatprep.subr.mxu0 0.0
      %2386 = vmatpush1.msra.mxu0 0.0
      %2387 = vmatprep.subr.mxu0 0.0
      %2388 = vmatpush1.msra.mxu0 0.0
      %2389 = vmatprep.subr.mxu0 0.0
      %2390 = vmatpush1.msra.mxu0 0.0
      %2391 = vmatprep.subr.mxu0 0.0
      %2392 = vmatpush1.msra.mxu0 0.0
      %2393 = vmatprep.subr.mxu0 0.0
      %2394 = vmatpush1.msra.mxu0 0.0
      %2395 = vmatprep.subr.mxu0 0.0
      %2396 = vmatpush1.msra.mxu0 0.0
      %2397 = vmatprep.subr.mxu0 0.0
      %2398 = vmatpush1.msra.mxu0 0.0
      %2399 = vmatprep.subr.mxu0 0.0
      %2400 = vmatpush1.msra.mxu0 0.0
      %2401 = vmatprep.subr.mxu0 0.0
      %2402 = vmatpush1.msra.mxu0 0.0
      %2403 = vmatprep.subr.mxu0 0.0
      %2404 = vmatpush1.msra.mxu0 0.0
      %2405 = vmatprep.subr.mxu0 0.0
      %2406 = vmatpush1.msra.mxu0 0.0
      %2407 = vmatprep.subr.mxu0 0.0
      %2408 = vmatpush1.msra.mxu0 0.0
      %2409 = vmatprep.subr.mxu0 0.0
      %2410 = vmatpush1.msra.mxu0 0.0
      %2411 = vmatprep.subr.mxu0 0.0
      %2412 = vmatpush1.msra.mxu0 0.0
      %2413 = vmatprep.subr.mxu0 0.0
      %2414 = vmatpush1.msra.mxu0 0.0
      %2415 = vmatprep.subr.mxu0 0.0
      %2416 = vmatpush1.msra.mxu0 0.0
      %2417 = vmatprep.subr.mxu0 0.0
      %2418 = vmatpush1.msra.mxu0 0.0
      %2419 = vmatprep.subr.mxu0 0.0
      %2420 = vmatpush1.msra.mxu0 0.0
      %2421 = vmatprep.subr.mxu0 0.0
      %2422 = vmatpush1.msra.mxu0 0.0
      %2423 = vmatprep.subr.mxu0 0.0
      %2424 = vmatpush1.msra.mxu0 0.0
      %2425 = vmatprep.subr.mxu0 0.0
      %2426 = vmatpush1.msra.mxu0 0.0
      %2427 = vmatprep.subr.mxu0 0.0
      %2428 = vmatpush1.msra.mxu0 0.0
      %2429 = vmatprep.subr.mxu0 0.0
      %2430 = vmatpush1.msra.mxu0 0.0
      %2431 = vmatprep.subr.mxu0 0.0
      %2432 = vmatpush1.msra.mxu0 0.0
      %2433 = vmatprep.subr.mxu0 0.0
      %2434 = vmatpush1.msra.mxu0 0.0
      %2435 = vmatprep.subr.mxu0 0.0
      %2436 = vmatpush1.msra.mxu0 0.0
      %2437 = vmatprep.subr.mxu0 0.0
      %2438 = vmatpush1.msra.mxu0 0.0
      %2439 = vmatprep.subr.mxu0 0.0
      %2440 = vmatpush1.msra.mxu0 0.0
      %2441 = vmatprep.mubr.f32.mxu0 0.0
      %2442 = vmatmul.mubr.f32.gmra.mrb[0].mxu0 %v2351
      %v2443 = vpop.f32.mrb[0].mxu0
      %v2444 = vadd.f32 0.0, %v2443
      %v2445 = vpop.f32.mrb[0].mxu0
      %2446 = vmatprep.mubr.f32.mxu0 0.0
      %2447 = vmatmul.mubr.f32.gmra.mrb[0].mxu0 %v2354
      %v2448 = vpop.f32.mrb[0].mxu0
      %v2449 = vadd.f32 0.0, %v2448
      %v2450 = vpop.f32.mrb[0].mxu0
      %2451 = vmatprep.mubr.f32.mxu0 0.0
      %2452 = vmatmul.mubr.f32.gmra.mrb[0].mxu0 %v2357
      %v2453 = vpop.f32.mrb[0].mxu0
      %v2454 = vadd.f32 0.0, %v2453
      %v2455 = vpop.f32.mrb[0].mxu0
      %2456 = vmatprep.mubr.f32.mxu0 0.0
      %2457 = vmatmul.mubr.f32.gmra.mrb[0].mxu0 %v2360
      %v2458 = vpop.f32.mrb[0].mxu0
      %v2459 = vadd.f32 0.0, %v2458
      %v2460 = vpop.f32.mrb[0].mxu0
      %2461 = vmatprep.mubr.f32.mxu0 0.0
      %2462 = vmatmul.mubr.f32.gmra.mrb[0].mxu0 %v2363
      %v2463 = vpop.f32.mrb[0].mxu0
      %v2464 = vadd.f32 0.0, %v2463
      %v2465 = vpop.f32.mrb[0].mxu0
      %2466 = vmatprep.mubr.f32.mxu0 0.0
      %2467 = vmatmul.mubr.f32.gmra.mrb[0].mxu0 %v2366
      %v2468 = vpop.f32.mrb[0].mxu0
      %v2469 = vadd.f32 0.0, %v2468
      %v2470 = vpop.f32.mrb[0].mxu0
      %2471 = vmatprep.mubr.f32.mxu0 0.0
      %2472 = vmatmul.mubr.f32.gmra.mrb[0].mxu0 %v2369
      %v2473 = vpop.f32.mrb[0].mxu0
      %v2474 = vadd.f32 0.0, %v2473
      %v2475 = vpop.f32.mrb[0].mxu0
      %2476 = vmatprep.mubr.f32.mxu0 0.0
      %2477 = vmatmul.mubr.f32.gmra.mrb[0].mxu0 %v2372
      %v2478 = vpop.f32.mrb[0].mxu0
      %v2479 = vadd.f32 0.0, %v2478
      %v2480 = vpop.f32.mrb[0].mxu0
      %2481 = vmatprep.mubr.f32.mxu0 0.0
      %2482 = vmatmul.mubr.f32.gmra.mrb[0].mxu0 %v2375
      %v2483 = vpop.f32.mrb[0].mxu0
      %v2484 = vadd.f32 0.0, %v2483
      %v2485 = vpop.f32.mrb[0].mxu0
      %2486 = vdwg.mxu0
      %v2487 = vadd.f32 %v513, %v2444
      %v2488 = vadd.f32 %v514, %v2449
      %v2489 = vadd.f32 %v515, %v2454
      %v2490 = vadd.f32 %v516, %v2459
      %v2491 = vadd.f32 %v517, %v2464
      %v2492 = vadd.f32 %v518, %v2469
      %v2493 = vadd.f32 %v519, %v2474
      %v2494 = vadd.f32 %v520, %v2479
      %v2495 = vadd.f32 %v521, %v2484
      %v2496 = vlaneseq
      %v2497 = vshrl.u32 %v2496, 7
      %v2498 = vsub.s32 0, %v2497
      %v2499 = vrot.slane %v528, %v2498
      %v2500 = vadd.f32 %v2487, %v2499
      %v2501 = vadd.f32 %v2488, %v2499
      %v2502 = vadd.f32 %v2489, %v2499
      %v2503 = vadd.f32 %v2490, %v2499
      %v2504 = vadd.f32 %v2491, %v2499
      %v2505 = vadd.f32 %v2492, %v2499
      %v2506 = vadd.f32 %v2493, %v2499
      %v2507 = vadd.f32 %v2494, %v2499
      %v2508 = vadd.f32 %v2495, %v2499
      %v2509 = vsel %vm533, %v2500, 0.0
      %2510 = vadd.xlane.f32.xlu0 %v2509
      %v2511 = vpop.xlane.xlu0 %2510
      %v2512 = vsel %vm533, %v2501, 0.0
      %2513 = vadd.xlane.f32.xlu0 %v2512
      %v2514 = vpop.xlane.xlu0 %2513
      %v2515 = vsel %vm533, %v2502, 0.0
      %2516 = vadd.xlane.f32.xlu0 %v2515
      %v2517 = vpop.xlane.xlu0 %2516
      %v2518 = vsel %vm533, %v2503, 0.0
      %2519 = vadd.xlane.f32.xlu0 %v2518
      %v2520 = vpop.xlane.xlu0 %2519
      %v2521 = vsel %vm533, %v2504, 0.0
      %2522 = vadd.xlane.f32.xlu0 %v2521
      %v2523 = vpop.xlane.xlu0 %2522
      %v2524 = vsel %vm533, %v2505, 0.0
      %2525 = vadd.xlane.f32.xlu0 %v2524
      %v2526 = vpop.xlane.xlu0 %2525
      %v2527 = vsel %vm533, %v2506, 0.0
      %2528 = vadd.xlane.f32.xlu0 %v2527
      %v2529 = vpop.xlane.xlu0 %2528
      %v2530 = vsel %vm533, %v2507, 0.0
      %2531 = vadd.xlane.f32.xlu0 %v2530
      %v2532 = vpop.xlane.xlu0 %2531
      %v2533 = vsel %vm533, %v2508, 0.0
      %2534 = vadd.xlane.f32.xlu0 %v2533
      %v2535 = vpop.xlane.xlu0 %2534
      %v2536 = vmul.f32 %v2511, %v561
      %v2537 = vmul.f32 %v2514, %v561
      %v2538 = vmul.f32 %v2517, %v561
      %v2539 = vmul.f32 %v2520, %v561
      %v2540 = vmul.f32 %v2523, %v561
      %v2541 = vmul.f32 %v2526, %v561
      %v2542 = vmul.f32 %v2529, %v561
      %v2543 = vmul.f32 %v2532, %v561
      %v2544 = vmul.f32 %v2535, %v561
      %v2545 = vsub.f32 %v2500, %v2536
      %v2546 = vsub.f32 %v2501, %v2537
      %v2547 = vsub.f32 %v2502, %v2538
      %v2548 = vsub.f32 %v2503, %v2539
      %v2549 = vsub.f32 %v2504, %v2540
      %v2550 = vsub.f32 %v2505, %v2541
      %v2551 = vsub.f32 %v2506, %v2542
      %v2552 = vsub.f32 %v2507, %v2543
      %v2553 = vsub.f32 %v2508, %v2544
      %v2554 = vmul.f32 %v2545, %v2545
      %v2555 = vmul.f32 %v2546, %v2546
      %v2556 = vmul.f32 %v2547, %v2547
      %v2557 = vmul.f32 %v2548, %v2548
      %v2558 = vmul.f32 %v2549, %v2549
      %v2559 = vmul.f32 %v2550, %v2550
      %v2560 = vmul.f32 %v2551, %v2551
      %v2561 = vmul.f32 %v2552, %v2552
      %v2562 = vmul.f32 %v2553, %v2553
      %v2563 = vsel %vm533, %v2554, 0.0
      %2564 = vadd.xlane.f32.xlu0 %v2563
      %v2565 = vpop.xlane.xlu0 %2564
      %v2566 = vsel %vm533, %v2555, 0.0
      %2567 = vadd.xlane.f32.xlu0 %v2566
      %v2568 = vpop.xlane.xlu0 %2567
      %v2569 = vsel %vm533, %v2556, 0.0
      %2570 = vadd.xlane.f32.xlu0 %v2569
      %v2571 = vpop.xlane.xlu0 %2570
      %v2572 = vsel %vm533, %v2557, 0.0
      %2573 = vadd.xlane.f32.xlu0 %v2572
      %v2574 = vpop.xlane.xlu0 %2573
      %v2575 = vsel %vm533, %v2558, 0.0
      %2576 = vadd.xlane.f32.xlu0 %v2575
      %v2577 = vpop.xlane.xlu0 %2576
      %v2578 = vsel %vm533, %v2559, 0.0
      %2579 = vadd.xlane.f32.xlu0 %v2578
      %v2580 = vpop.xlane.xlu0 %2579
      %v2581 = vsel %vm533, %v2560, 0.0
      %2582 = vadd.xlane.f32.xlu0 %v2581
      %v2583 = vpop.xlane.xlu0 %2582
      %v2584 = vsel %vm533, %v2561, 0.0
      %2585 = vadd.xlane.f32.xlu0 %v2584
      %v2586 = vpop.xlane.xlu0 %2585
      %v2587 = vsel %vm533, %v2562, 0.0
      %2588 = vadd.xlane.f32.xlu0 %v2587
      %v2589 = vpop.xlane.xlu0 %2588
      %v2590 = vmul.f32 %v2565, %v561
      %v2591 = vmul.f32 %v2568, %v561
      %v2592 = vmul.f32 %v2571, %v561
      %v2593 = vmul.f32 %v2574, %v561
      %v2594 = vmul.f32 %v2577, %v561
      %v2595 = vmul.f32 %v2580, %v561
      %v2596 = vmul.f32 %v2583, %v561
      %v2597 = vmul.f32 %v2586, %v561
      %v2598 = vmul.f32 %v2589, %v561
      %v2599 = vadd.f32 %v2590, 1e-05
      %v2600 = vadd.f32 %v2591, 1e-05
      %v2601 = vadd.f32 %v2592, 1e-05
      %v2602 = vadd.f32 %v2593, 1e-05
      %v2603 = vadd.f32 %v2594, 1e-05
      %v2604 = vadd.f32 %v2595, 1e-05
      %v2605 = vadd.f32 %v2596, 1e-05
      %v2606 = vadd.f32 %v2597, 1e-05
      %v2607 = vadd.f32 %v2598, 1e-05
      %v2608 = vrsqrt.pop %v2599
      %v2609 = vrsqrt.pop %v2600
      %v2610 = vrsqrt.pop %v2601
      %v2611 = vrsqrt.pop %v2602
      %v2612 = vrsqrt.pop %v2603
      %v2613 = vrsqrt.pop %v2604
      %v2614 = vrsqrt.pop %v2605
      %v2615 = vrsqrt.pop %v2606
      %v2616 = vrsqrt.pop %v2607
      %v2617 = vmul.f32 %v2545, %v2608
      %v2618 = vmul.f32 %v2546, %v2609
      %v2619 = vmul.f32 %v2547, %v2610
      %v2620 = vmul.f32 %v2548, %v2611
      %v2621 = vmul.f32 %v2549, %v2612
      %v2622 = vmul.f32 %v2550, %v2613
      %v2623 = vmul.f32 %v2551, %v2614
      %v2624 = vmul.f32 %v2552, %v2615
      %v2625 = vmul.f32 %v2553, %v2616
      %v2626 = vlaneseq
      %v2627 = vshrl.u32 %v2626, 7
      %v2628 = vsub.s32 0, %v2627
      %v2629 = vrot.slane %v529, %v2628
      %v2630 = vmul.f32 %v2617, %v2629
      %v2631 = vmul.f32 %v2618, %v2629
      %v2632 = vmul.f32 %v2619, %v2629
      %v2633 = vmul.f32 %v2620, %v2629
      %v2634 = vmul.f32 %v2621, %v2629
      %v2635 = vmul.f32 %v2622, %v2629
      %v2636 = vmul.f32 %v2623, %v2629
      %v2637 = vmul.f32 %v2624, %v2629
      %v2638 = vmul.f32 %v2625, %v2629
      %v2639 = vlaneseq
      %v2640 = vshrl.u32 %v2639, 7
      %v2641 = vsub.s32 0, %v2640
      %v2642 = vrot.slane %v530, %v2641
      %v2643 = vadd.f32 %v2630, %v2642
      %v2644 = vadd.f32 %v2631, %v2642
      %v2645 = vadd.f32 %v2632, %v2642
      %v2646 = vadd.f32 %v2633, %v2642
      %v2647 = vadd.f32 %v2634, %v2642
      %v2648 = vadd.f32 %v2635, %v2642
      %v2649 = vadd.f32 %v2636, %v2642
      %v2650 = vadd.f32 %v2637, %v2642
      %v2651 = vadd.f32 %v2638, %v2642
      %v2652 = vld [vmem:[%s6] sm:$0xff]
      %v2653 = vld [vmem:[%s6 + $0x8] sm:$0xff]
      %v2654 = vld [vmem:[%s6 + $0x10] sm:$0xff]
      %v2655 = vld [vmem:[%s6 + $0x18] sm:$0xff]
      %v2656 = vlaneseq
      %v2657 = vshrl.u32 %v2656, 7
      %v2658 = vsub.s32 0, %v2657
      %v2659 = vrot.slane %v531, %v2658
      %v2661 = vsel %vm533, %v2643, 0
      %v2664 = vsel %vm533, %v2644, 0
      %v2667 = vsel %vm533, %v2645, 0
      %v2670 = vsel %vm533, %v2646, 0
      %v2673 = vsel %vm533, %v2647, 0
      %v2676 = vsel %vm533, %v2648, 0
      %v2679 = vsel %vm533, %v2649, 0
      %v2682 = vsel %vm533, %v2650, 0
      %v2685 = vsel %vm533, %v2651, 0
      %2687 = vmatprep.subr.mxu0 0.0
      %2688 = vmatpush1.msra.mxu0 %v2652
      %2689 = vmatprep.subr.mxu0 0.0
      %2690 = vmatpush1.msra.mxu0 %v2653
      %2691 = vmatprep.subr.mxu0 0.0
      %2692 = vmatpush1.msra.mxu0 %v2654
      %2693 = vmatprep.subr.mxu0 0.0
      %2694 = vmatpush1.msra.mxu0 %v2655
      %2695 = vmatprep.subr.mxu0 0.0
      %2696 = vmatpush1.msra.mxu0 0.0
      %2697 = vmatprep.subr.mxu0 0.0
      %2698 = vmatpush1.msra.mxu0 0.0
      %2699 = vmatprep.subr.mxu0 0.0
      %2700 = vmatpush1.msra.mxu0 0.0
      %2701 = vmatprep.subr.mxu0 0.0
      %2702 = vmatpush1.msra.mxu0 0.0
      %2703 = vmatprep.subr.mxu0 0.0
      %2704 = vmatpush1.msra.mxu0 0.0
      %2705 = vmatprep.subr.mxu0 0.0
      %2706 = vmatpush1.msra.mxu0 0.0
      %2707 = vmatprep.subr.mxu0 0.0
      %2708 = vmatpush1.msra.mxu0 0.0
      %2709 = vmatprep.subr.mxu0 0.0
      %2710 = vmatpush1.msra.mxu0 0.0
      %2711 = vmatprep.subr.mxu0 0.0
      %2712 = vmatpush1.msra.mxu0 0.0
      %2713 = vmatprep.subr.mxu0 0.0
      %2714 = vmatpush1.msra.mxu0 0.0
      %2715 = vmatprep.subr.mxu0 0.0
      %2716 = vmatpush1.msra.mxu0 0.0
      %2717 = vmatprep.subr.mxu0 0.0
      %2718 = vmatpush1.msra.mxu0 0.0
      %2719 = vmatprep.subr.mxu0 0.0
      %2720 = vmatpush1.msra.mxu0 0.0
      %2721 = vmatprep.subr.mxu0 0.0
      %2722 = vmatpush1.msra.mxu0 0.0
      %2723 = vmatprep.subr.mxu0 0.0
      %2724 = vmatpush1.msra.mxu0 0.0
      %2725 = vmatprep.subr.mxu0 0.0
      %2726 = vmatpush1.msra.mxu0 0.0
      %2727 = vmatprep.subr.mxu0 0.0
      %2728 = vmatpush1.msra.mxu0 0.0
      %2729 = vmatprep.subr.mxu0 0.0
      %2730 = vmatpush1.msra.mxu0 0.0
      %2731 = vmatprep.subr.mxu0 0.0
      %2732 = vmatpush1.msra.mxu0 0.0
      %2733 = vmatprep.subr.mxu0 0.0
      %2734 = vmatpush1.msra.mxu0 0.0
      %2735 = vmatprep.subr.mxu0 0.0
      %2736 = vmatpush1.msra.mxu0 0.0
      %2737 = vmatprep.subr.mxu0 0.0
      %2738 = vmatpush1.msra.mxu0 0.0
      %2739 = vmatprep.subr.mxu0 0.0
      %2740 = vmatpush1.msra.mxu0 0.0
      %2741 = vmatprep.subr.mxu0 0.0
      %2742 = vmatpush1.msra.mxu0 0.0
      %2743 = vmatprep.subr.mxu0 0.0
      %2744 = vmatpush1.msra.mxu0 0.0
      %2745 = vmatprep.subr.mxu0 0.0
      %2746 = vmatpush1.msra.mxu0 0.0
      %2747 = vmatprep.subr.mxu0 0.0
      %2748 = vmatpush1.msra.mxu0 0.0
      %2749 = vmatprep.subr.mxu0 0.0
      %2750 = vmatpush1.msra.mxu0 0.0
      %2751 = vmatprep.mubr.f32.mxu0 0.0
      %2752 = vmatmul.mubr.f32.gmra.mrb[0].mxu0 %v2661
      %v2753 = vpop.f32.mrb[0].mxu0
      %v2754 = vadd.f32 %v2659, %v2753
      %v2755 = vpop.f32.mrb[0].mxu0
      %2756 = vmatprep.mubr.f32.mxu0 0.0
      %2757 = vmatmul.mubr.f32.gmra.mrb[0].mxu0 %v2664
      %v2758 = vpop.f32.mrb[0].mxu0
      %v2759 = vadd.f32 %v2659, %v2758
      %v2760 = vpop.f32.mrb[0].mxu0
      %2761 = vmatprep.mubr.f32.mxu0 0.0
      %2762 = vmatmul.mubr.f32.gmra.mrb[0].mxu0 %v2667
      %v2763 = vpop.f32.mrb[0].mxu0
      %v2764 = vadd.f32 %v2659, %v2763
      %v2765 = vpop.f32.mrb[0].mxu0
      %2766 = vmatprep.mubr.f32.mxu0 0.0
      %2767 = vmatmul.mubr.f32.gmra.mrb[0].mxu0 %v2670
      %v2768 = vpop.f32.mrb[0].mxu0
      %v2769 = vadd.f32 %v2659, %v2768
      %v2770 = vpop.f32.mrb[0].mxu0
      %2771 = vmatprep.mubr.f32.mxu0 0.0
      %2772 = vmatmul.mubr.f32.gmra.mrb[0].mxu0 %v2673
      %v2773 = vpop.f32.mrb[0].mxu0
      %v2774 = vadd.f32 %v2659, %v2773
      %v2775 = vpop.f32.mrb[0].mxu0
      %2776 = vmatprep.mubr.f32.mxu0 0.0
      %2777 = vmatmul.mubr.f32.gmra.mrb[0].mxu0 %v2676
      %v2778 = vpop.f32.mrb[0].mxu0
      %v2779 = vadd.f32 %v2659, %v2778
      %v2780 = vpop.f32.mrb[0].mxu0
      %2781 = vmatprep.mubr.f32.mxu0 0.0
      %2782 = vmatmul.mubr.f32.gmra.mrb[0].mxu0 %v2679
      %v2783 = vpop.f32.mrb[0].mxu0
      %v2784 = vadd.f32 %v2659, %v2783
      %v2785 = vpop.f32.mrb[0].mxu0
      %2786 = vmatprep.mubr.f32.mxu0 0.0
      %2787 = vmatmul.mubr.f32.gmra.mrb[0].mxu0 %v2682
      %v2788 = vpop.f32.mrb[0].mxu0
      %v2789 = vadd.f32 %v2659, %v2788
      %v2790 = vpop.f32.mrb[0].mxu0
      %2791 = vmatprep.mubr.f32.mxu0 0.0
      %2792 = vmatmul.mubr.f32.gmra.mrb[0].mxu0 %v2685
      %v2793 = vpop.f32.mrb[0].mxu0
      %v2794 = vadd.f32 %v2659, %v2793
      %v2795 = vpop.f32.mrb[0].mxu0
      %2796 = vdwg.mxu0
      %v2797 = vmul.f32 %v2754, %v2754
      %v2798 = vmul.f32 %v2759, %v2759
      %v2799 = vmul.f32 %v2764, %v2764
      %v2800 = vmul.f32 %v2769, %v2769
      %v2801 = vmul.f32 %v2774, %v2774
      %v2802 = vmul.f32 %v2779, %v2779
      %v2803 = vmul.f32 %v2784, %v2784
      %v2804 = vmul.f32 %v2789, %v2789
      %v2805 = vmul.f32 %v2794, %v2794
      %v2806 = vmul.f32 %v2754, %v2797
      %v2807 = vmul.f32 %v2759, %v2798
      %v2808 = vmul.f32 %v2764, %v2799
      %v2809 = vmul.f32 %v2769, %v2800
      %v2810 = vmul.f32 %v2774, %v2801
      %v2811 = vmul.f32 %v2779, %v2802
      %v2812 = vmul.f32 %v2784, %v2803
      %v2813 = vmul.f32 %v2789, %v2804
      %v2814 = vmul.f32 %v2794, %v2805
      %v2815 = vmul.f32 %v2806, 0.044715
      %v2816 = vmul.f32 %v2807, 0.044715
      %v2817 = vmul.f32 %v2808, 0.044715
      %v2818 = vmul.f32 %v2809, 0.044715
      %v2819 = vmul.f32 %v2810, 0.044715
      %v2820 = vmul.f32 %v2811, 0.044715
      %v2821 = vmul.f32 %v2812, 0.044715
      %v2822 = vmul.f32 %v2813, 0.044715
      %v2823 = vmul.f32 %v2814, 0.044715
      %v2824 = vadd.f32 %v2754, %v2815
      %v2825 = vadd.f32 %v2759, %v2816
      %v2826 = vadd.f32 %v2764, %v2817
      %v2827 = vadd.f32 %v2769, %v2818
      %v2828 = vadd.f32 %v2774, %v2819
      %v2829 = vadd.f32 %v2779, %v2820
      %v2830 = vadd.f32 %v2784, %v2821
      %v2831 = vadd.f32 %v2789, %v2822
      %v2832 = vadd.f32 %v2794, %v2823
      %v2833 = vmul.f32 %v2824, 0.7978846
      %v2834 = vmul.f32 %v2825, 0.7978846
      %v2835 = vmul.f32 %v2826, 0.7978846
      %v2836 = vmul.f32 %v2827, 0.7978846
      %v2837 = vmul.f32 %v2828, 0.7978846
      %v2838 = vmul.f32 %v2829, 0.7978846
      %v2839 = vmul.f32 %v2830, 0.7978846
      %v2840 = vmul.f32 %v2831, 0.7978846
      %v2841 = vmul.f32 %v2832, 0.7978846
      %v2842 = vtanh.pop %v2833
      %v2843 = vtanh.pop %v2834
      %v2844 = vtanh.pop %v2835
      %v2845 = vtanh.pop %v2836
      %v2846 = vtanh.pop %v2837
      %v2847 = vtanh.pop %v2838
      %v2848 = vtanh.pop %v2839
      %v2849 = vtanh.pop %v2840
      %v2850 = vtanh.pop %v2841
      %v2851 = vadd.f32 %v2842, 1.0
      %v2852 = vadd.f32 %v2843, 1.0
      %v2853 = vadd.f32 %v2844, 1.0
      %v2854 = vadd.f32 %v2845, 1.0
      %v2855 = vadd.f32 %v2846, 1.0
      %v2856 = vadd.f32 %v2847, 1.0
      %v2857 = vadd.f32 %v2848, 1.0
      %v2858 = vadd.f32 %v2849, 1.0
      %v2859 = vadd.f32 %v2850, 1.0
      %v2860 = vmul.f32 %v2851, 0.5
      %v2861 = vmul.f32 %v2852, 0.5
      %v2862 = vmul.f32 %v2853, 0.5
      %v2863 = vmul.f32 %v2854, 0.5
      %v2864 = vmul.f32 %v2855, 0.5
      %v2865 = vmul.f32 %v2856, 0.5
      %v2866 = vmul.f32 %v2857, 0.5
      %v2867 = vmul.f32 %v2858, 0.5
      %v2868 = vmul.f32 %v2859, 0.5
      %v2869 = vmul.f32 %v2754, %v2860
      %v2870 = vmul.f32 %v2759, %v2861
      %v2871 = vmul.f32 %v2764, %v2862
      %v2872 = vmul.f32 %v2769, %v2863
      %v2873 = vmul.f32 %v2774, %v2864
      %v2874 = vmul.f32 %v2779, %v2865
      %v2875 = vmul.f32 %v2784, %v2866
      %v2876 = vmul.f32 %v2789, %v2867
      %v2877 = vmul.f32 %v2794, %v2868
      %v2878 = vld [vmem:[%s7] sm:$0xff]
      %v2879 = vld [vmem:[%s7 + $0x8] sm:$0xff]
      %v2880 = vld [vmem:[%s7 + $0x10] sm:$0xff]
      %v2881 = vld [vmem:[%s7 + $0x18] sm:$0xff]
      %v2882 = vld [vmem:[%s7 + $0x20] sm:$0xff]
      %v2883 = vld [vmem:[%s7 + $0x28] sm:$0xff]
      %v2884 = vld [vmem:[%s7 + $0x30] sm:$0xff]
      %v2885 = vld [vmem:[%s7 + $0x38] sm:$0xff]
      %v2886 = vld [vmem:[%s7 + $0x40] sm:$0xff]
      %v2887 = vld [vmem:[%s7 + $0x48] sm:$0xff]
      %v2888 = vld [vmem:[%s7 + $0x50] sm:$0xff]
      %v2889 = vld [vmem:[%s7 + $0x58] sm:$0xff]
      %v2890 = vld [vmem:[%s7 + $0x60] sm:$0xff]
      %v2891 = vld [vmem:[%s7 + $0x68] sm:$0xff]
      %v2892 = vld [vmem:[%s7 + $0x70] sm:$0xff]
      %v2893 = vld [vmem:[%s7 + $0x78] sm:$0xff]
      %2894 = vmatprep.subr.mxu0 0.0
      %2895 = vmatpush1.msra.mxu0 %v2878
      %2896 = vmatprep.subr.mxu0 0.0
      %2897 = vmatpush1.msra.mxu0 %v2879
      %2898 = vmatprep.subr.mxu0 0.0
      %2899 = vmatpush1.msra.mxu0 %v2880
      %2900 = vmatprep.subr.mxu0 0.0
      %2901 = vmatpush1.msra.mxu0 %v2881
      %2902 = vmatprep.subr.mxu0 0.0
      %2903 = vmatpush1.msra.mxu0 %v2882
      %2904 = vmatprep.subr.mxu0 0.0
      %2905 = vmatpush1.msra.mxu0 %v2883
      %2906 = vmatprep.subr.mxu0 0.0
      %2907 = vmatpush1.msra.mxu0 %v2884
      %2908 = vmatprep.subr.mxu0 0.0
      %2909 = vmatpush1.msra.mxu0 %v2885
      %2910 = vmatprep.subr.mxu0 0.0
      %2911 = vmatpush1.msra.mxu0 %v2886
      %2912 = vmatprep.subr.mxu0 0.0
      %2913 = vmatpush1.msra.mxu0 %v2887
      %2914 = vmatprep.subr.mxu0 0.0
      %2915 = vmatpush1.msra.mxu0 %v2888
      %2916 = vmatprep.subr.mxu0 0.0
      %2917 = vmatpush1.msra.mxu0 %v2889
      %2918 = vmatprep.subr.mxu0 0.0
      %2919 = vmatpush1.msra.mxu0 %v2890
      %2920 = vmatprep.subr.mxu0 0.0
      %2921 = vmatpush1.msra.mxu0 %v2891
      %2922 = vmatprep.subr.mxu0 0.0
      %2923 = vmatpush1.msra.mxu0 %v2892
      %2924 = vmatprep.subr.mxu0 0.0
      %2925 = vmatpush1.msra.mxu0 %v2893
      %2926 = vmatprep.subr.mxu0 0.0
      %2927 = vmatpush1.msra.mxu0 0.0
      %2928 = vmatprep.subr.mxu0 0.0
      %2929 = vmatpush1.msra.mxu0 0.0
      %2930 = vmatprep.subr.mxu0 0.0
      %2931 = vmatpush1.msra.mxu0 0.0
      %2932 = vmatprep.subr.mxu0 0.0
      %2933 = vmatpush1.msra.mxu0 0.0
      %2934 = vmatprep.subr.mxu0 0.0
      %2935 = vmatpush1.msra.mxu0 0.0
      %2936 = vmatprep.subr.mxu0 0.0
      %2937 = vmatpush1.msra.mxu0 0.0
      %2938 = vmatprep.subr.mxu0 0.0
      %2939 = vmatpush1.msra.mxu0 0.0
      %2940 = vmatprep.subr.mxu0 0.0
      %2941 = vmatpush1.msra.mxu0 0.0
      %2942 = vmatprep.subr.mxu0 0.0
      %2943 = vmatpush1.msra.mxu0 0.0
      %2944 = vmatprep.subr.mxu0 0.0
      %2945 = vmatpush1.msra.mxu0 0.0
      %2946 = vmatprep.subr.mxu0 0.0
      %2947 = vmatpush1.msra.mxu0 0.0
      %2948 = vmatprep.subr.mxu0 0.0
      %2949 = vmatpush1.msra.mxu0 0.0
      %2950 = vmatprep.subr.mxu0 0.0
      %2951 = vmatpush1.msra.mxu0 0.0
      %2952 = vmatprep.subr.mxu0 0.0
      %2953 = vmatpush1.msra.mxu0 0.0
      %2954 = vmatprep.subr.mxu0 0.0
      %2955 = vmatpush1.msra.mxu0 0.0
      %2956 = vmatprep.subr.mxu0 0.0
      %2957 = vmatpush1.msra.mxu0 0.0
      %2958 = vmatprep.mubr.f32.mxu0 0.0
      %2959 = vmatmul.mubr.f32.gmra.mrb[0].mxu0 %v2869
      %v2960 = vpop.f32.mrb[0].mxu0
      %v2961 = vadd.f32 0.0, %v2960
      %v2962 = vpop.f32.mrb[0].mxu0
      %2963 = vmatprep.mubr.f32.mxu0 0.0
      %2964 = vmatmul.mubr.f32.gmra.mrb[0].mxu0 %v2870
      %v2965 = vpop.f32.mrb[0].mxu0
      %v2966 = vadd.f32 0.0, %v2965
      %v2967 = vpop.f32.mrb[0].mxu0
      %2968 = vmatprep.mubr.f32.mxu0 0.0
      %2969 = vmatmul.mubr.f32.gmra.mrb[0].mxu0 %v2871
      %v2970 = vpop.f32.mrb[0].mxu0
      %v2971 = vadd.f32 0.0, %v2970
      %v2972 = vpop.f32.mrb[0].mxu0
      %2973 = vmatprep.mubr.f32.mxu0 0.0
      %2974 = vmatmul.mubr.f32.gmra.mrb[0].mxu0 %v2872
      %v2975 = vpop.f32.mrb[0].mxu0
      %v2976 = vadd.f32 0.0, %v2975
      %v2977 = vpop.f32.mrb[0].mxu0
      %2978 = vmatprep.mubr.f32.mxu0 0.0
      %2979 = vmatmul.mubr.f32.gmra.mrb[0].mxu0 %v2873
      %v2980 = vpop.f32.mrb[0].mxu0
      %v2981 = vadd.f32 0.0, %v2980
      %v2982 = vpop.f32.mrb[0].mxu0
      %2983 = vmatprep.mubr.f32.mxu0 0.0
      %2984 = vmatmul.mubr.f32.gmra.mrb[0].mxu0 %v2874
      %v2985 = vpop.f32.mrb[0].mxu0
      %v2986 = vadd.f32 0.0, %v2985
      %v2987 = vpop.f32.mrb[0].mxu0
      %2988 = vmatprep.mubr.f32.mxu0 0.0
      %2989 = vmatmul.mubr.f32.gmra.mrb[0].mxu0 %v2875
      %v2990 = vpop.f32.mrb[0].mxu0
      %v2991 = vadd.f32 0.0, %v2990
      %v2992 = vpop.f32.mrb[0].mxu0
      %2993 = vmatprep.mubr.f32.mxu0 0.0
      %2994 = vmatmul.mubr.f32.gmra.mrb[0].mxu0 %v2876
      %v2995 = vpop.f32.mrb[0].mxu0
      %v2996 = vadd.f32 0.0, %v2995
      %v2997 = vpop.f32.mrb[0].mxu0
      %2998 = vmatprep.mubr.f32.mxu0 0.0
      %2999 = vmatmul.mubr.f32.gmra.mrb[0].mxu0 %v2877
      %v3000 = vpop.f32.mrb[0].mxu0
      %v3001 = vadd.f32 0.0, %v3000
      %v3002 = vpop.f32.mrb[0].mxu0
      %3003 = vdwg.mxu0
      %v3004 = vadd.f32 %v2500, %v2961
      %v3005 = vadd.f32 %v2501, %v2966
      %v3006 = vadd.f32 %v2502, %v2971
      %v3007 = vadd.f32 %v2503, %v2976
      %v3008 = vadd.f32 %v2504, %v2981
      %v3009 = vadd.f32 %v2505, %v2986
      %v3010 = vadd.f32 %v2506, %v2991
      %v3011 = vadd.f32 %v2507, %v2996
      %v3012 = vadd.f32 %v2508, %v3001
      %v3013 = vlaneseq
      %v3014 = vshrl.u32 %v3013, 7
      %v3015 = vsub.s32 0, %v3014
      %v3016 = vrot.slane %v532, %v3015
      %v3017 = vadd.f32 %v3004, %v3016
      %v3018 = vadd.f32 %v3005, %v3016
      %v3019 = vadd.f32 %v3006, %v3016
      %v3020 = vadd.f32 %v3007, %v3016
      %v3021 = vadd.f32 %v3008, %v3016
      %v3022 = vadd.f32 %v3009, %v3016
      %v3023 = vadd.f32 %v3010, %v3016
      %v3024 = vadd.f32 %v3011, %v3016
      %v3025 = vadd.f32 %v3012, %v3016
      %s3026 = scalar_lea.vmem %s3, 8
      %v3027 = vld [vmem:[%s3026] sm:$0x1]
      %v3028 = vld [vmem:[%s3026 + $0x1] sm:$0x1]
      %v3029 = vld [vmem:[%s3026 + $0x2] sm:$0x1]
      %v3030 = vld [vmem:[%s3026 + $0x3] sm:$0x1]
      %v3031 = vld [vmem:[%s3026 + $0x4] sm:$0x1]
      %v3032 = vld [vmem:[%s3026 + $0x5] sm:$0x1]
      %v3033 = vld [vmem:[%s3026 + $0x6] sm:$0x1]
      %v3034 = vld [vmem:[%s3026 + $0x7] sm:$0x1]
      %v3035 = vsel %vm533, %v3017, 0.0
      %3036 = vadd.xlane.f32.xlu0 %v3035
      %v3037 = vpop.xlane.xlu0 %3036
      %v3038 = vsel %vm533, %v3018, 0.0
      %3039 = vadd.xlane.f32.xlu0 %v3038
      %v3040 = vpop.xlane.xlu0 %3039
      %v3041 = vsel %vm533, %v3019, 0.0
      %3042 = vadd.xlane.f32.xlu0 %v3041
      %v3043 = vpop.xlane.xlu0 %3042
      %v3044 = vsel %vm533, %v3020, 0.0
      %3045 = vadd.xlane.f32.xlu0 %v3044
      %v3046 = vpop.xlane.xlu0 %3045
      %v3047 = vsel %vm533, %v3021, 0.0
      %3048 = vadd.xlane.f32.xlu0 %v3047
      %v3049 = vpop.xlane.xlu0 %3048
      %v3050 = vsel %vm533, %v3022, 0.0
      %3051 = vadd.xlane.f32.xlu0 %v3050
      %v3052 = vpop.xlane.xlu0 %3051
      %v3053 = vsel %vm533, %v3023, 0.0
      %3054 = vadd.xlane.f32.xlu0 %v3053
      %v3055 = vpop.xlane.xlu0 %3054
      %v3056 = vsel %vm533, %v3024, 0.0
      %3057 = vadd.xlane.f32.xlu0 %v3056
      %v3058 = vpop.xlane.xlu0 %3057
      %v3059 = vsel %vm533, %v3025, 0.0
      %3060 = vadd.xlane.f32.xlu0 %v3059
      %v3061 = vpop.xlane.xlu0 %3060
      %v3062 = vmul.f32 %v3037, %v561
      %v3063 = vmul.f32 %v3040, %v561
      %v3064 = vmul.f32 %v3043, %v561
      %v3065 = vmul.f32 %v3046, %v561
      %v3066 = vmul.f32 %v3049, %v561
      %v3067 = vmul.f32 %v3052, %v561
      %v3068 = vmul.f32 %v3055, %v561
      %v3069 = vmul.f32 %v3058, %v561
      %v3070 = vmul.f32 %v3061, %v561
      %v3071 = vsub.f32 %v3017, %v3062
      %v3072 = vsub.f32 %v3018, %v3063
      %v3073 = vsub.f32 %v3019, %v3064
      %v3074 = vsub.f32 %v3020, %v3065
      %v3075 = vsub.f32 %v3021, %v3066
      %v3076 = vsub.f32 %v3022, %v3067
      %v3077 = vsub.f32 %v3023, %v3068
      %v3078 = vsub.f32 %v3024, %v3069
      %v3079 = vsub.f32 %v3025, %v3070
      %v3080 = vmul.f32 %v3071, %v3071
      %v3081 = vmul.f32 %v3072, %v3072
      %v3082 = vmul.f32 %v3073, %v3073
      %v3083 = vmul.f32 %v3074, %v3074
      %v3084 = vmul.f32 %v3075, %v3075
      %v3085 = vmul.f32 %v3076, %v3076
      %v3086 = vmul.f32 %v3077, %v3077
      %v3087 = vmul.f32 %v3078, %v3078
      %v3088 = vmul.f32 %v3079, %v3079
      %v3089 = vsel %vm533, %v3080, 0.0
      %3090 = vadd.xlane.f32.xlu0 %v3089
      %v3091 = vpop.xlane.xlu0 %3090
      %v3092 = vsel %vm533, %v3081, 0.0
      %3093 = vadd.xlane.f32.xlu0 %v3092
      %v3094 = vpop.xlane.xlu0 %3093
      %v3095 = vsel %vm533, %v3082, 0.0
      %3096 = vadd.xlane.f32.xlu0 %v3095
      %v3097 = vpop.xlane.xlu0 %3096
      %v3098 = vsel %vm533, %v3083, 0.0
      %3099 = vadd.xlane.f32.xlu0 %v3098
      %v3100 = vpop.xlane.xlu0 %3099
      %v3101 = vsel %vm533, %v3084, 0.0
      %3102 = vadd.xlane.f32.xlu0 %v3101
      %v3103 = vpop.xlane.xlu0 %3102
      %v3104 = vsel %vm533, %v3085, 0.0
      %3105 = vadd.xlane.f32.xlu0 %v3104
      %v3106 = vpop.xlane.xlu0 %3105
      %v3107 = vsel %vm533, %v3086, 0.0
      %3108 = vadd.xlane.f32.xlu0 %v3107
      %v3109 = vpop.xlane.xlu0 %3108
      %v3110 = vsel %vm533, %v3087, 0.0
      %3111 = vadd.xlane.f32.xlu0 %v3110
      %v3112 = vpop.xlane.xlu0 %3111
      %v3113 = vsel %vm533, %v3088, 0.0
      %3114 = vadd.xlane.f32.xlu0 %v3113
      %v3115 = vpop.xlane.xlu0 %3114
      %v3116 = vmul.f32 %v3091, %v561
      %v3117 = vmul.f32 %v3094, %v561
      %v3118 = vmul.f32 %v3097, %v561
      %v3119 = vmul.f32 %v3100, %v561
      %v3120 = vmul.f32 %v3103, %v561
      %v3121 = vmul.f32 %v3106, %v561
      %v3122 = vmul.f32 %v3109, %v561
      %v3123 = vmul.f32 %v3112, %v561
      %v3124 = vmul.f32 %v3115, %v561
      %v3125 = vadd.f32 %v3116, 1e-05
      %v3126 = vadd.f32 %v3117, 1e-05
      %v3127 = vadd.f32 %v3118, 1e-05
      %v3128 = vadd.f32 %v3119, 1e-05
      %v3129 = vadd.f32 %v3120, 1e-05
      %v3130 = vadd.f32 %v3121, 1e-05
      %v3131 = vadd.f32 %v3122, 1e-05
      %v3132 = vadd.f32 %v3123, 1e-05
      %v3133 = vadd.f32 %v3124, 1e-05
      %v3134 = vrsqrt.pop %v3125
      %v3135 = vrsqrt.pop %v3126
      %v3136 = vrsqrt.pop %v3127
      %v3137 = vrsqrt.pop %v3128
      %v3138 = vrsqrt.pop %v3129
      %v3139 = vrsqrt.pop %v3130
      %v3140 = vrsqrt.pop %v3131
      %v3141 = vrsqrt.pop %v3132
      %v3142 = vrsqrt.pop %v3133
      %v3143 = vmul.f32 %v3071, %v3134
      %v3144 = vmul.f32 %v3072, %v3135
      %v3145 = vmul.f32 %v3073, %v3136
      %v3146 = vmul.f32 %v3074, %v3137
      %v3147 = vmul.f32 %v3075, %v3138
      %v3148 = vmul.f32 %v3076, %v3139
      %v3149 = vmul.f32 %v3077, %v3140
      %v3150 = vmul.f32 %v3078, %v3141
      %v3151 = vmul.f32 %v3079, %v3142
      %v3152 = vlaneseq
      %v3153 = vshrl.u32 %v3152, 7
      %v3154 = vsub.s32 0, %v3153
      %v3155 = vrot.slane %v3027, %v3154
      %v3156 = vmul.f32 %v3143, %v3155
      %v3157 = vmul.f32 %v3144, %v3155
      %v3158 = vmul.f32 %v3145, %v3155
      %v3159 = vmul.f32 %v3146, %v3155
      %v3160 = vmul.f32 %v3147, %v3155
      %v3161 = vmul.f32 %v3148, %v3155
      %v3162 = vmul.f32 %v3149, %v3155
      %v3163 = vmul.f32 %v3150, %v3155
      %v3164 = vmul.f32 %v3151, %v3155
      %v3165 = vlaneseq
      %v3166 = vshrl.u32 %v3165, 7
      %v3167 = vsub.s32 0, %v3166
      %v3168 = vrot.slane %v3028, %v3167
      %v3169 = vadd.f32 %v3156, %v3168
      %v3170 = vadd.f32 %v3157, %v3168
      %v3171 = vadd.f32 %v3158, %v3168
      %v3172 = vadd.f32 %v3159, %v3168
      %v3173 = vadd.f32 %v3160, %v3168
      %v3174 = vadd.f32 %v3161, %v3168
      %v3175 = vadd.f32 %v3162, %v3168
      %v3176 = vadd.f32 %v3163, %v3168
      %v3177 = vadd.f32 %v3164, %v3168
      %s3178 = scalar_lea.vmem %s4, 32
      %v3179 = vld [vmem:[%s3178] sm:$0xff]
      %v3180 = vld [vmem:[%s3178 + $0x8] sm:$0xff]
      %v3181 = vld [vmem:[%s3178 + $0x10] sm:$0xff]
      %v3182 = vld [vmem:[%s3178 + $0x18] sm:$0xff]
      %v3183 = vlaneseq
      %v3184 = vshrl.u32 %v3183, 7
      %v3185 = vsub.s32 0, %v3184
      %v3186 = vrot.slane %v3029, %v3185
      %v3188 = vsel %vm533, %v3169, 0
      %v3191 = vsel %vm533, %v3170, 0
      %v3194 = vsel %vm533, %v3171, 0
      %v3197 = vsel %vm533, %v3172, 0
      %v3200 = vsel %vm533, %v3173, 0
      %v3203 = vsel %vm533, %v3174, 0
      %v3206 = vsel %vm533, %v3175, 0
      %v3209 = vsel %vm533, %v3176, 0
      %v3212 = vsel %vm533, %v3177, 0
      %3214 = vmatprep.subr.mxu0 0.0
      %3215 = vmatpush1.msra.mxu0 %v3179
      %3216 = vmatprep.subr.mxu0 0.0
      %3217 = vmatpush1.msra.mxu0 %v3180
      %3218 = vmatprep.subr.mxu0 0.0
      %3219 = vmatpush1.msra.mxu0 %v3181
      %3220 = vmatprep.subr.mxu0 0.0
      %3221 = vmatpush1.msra.mxu0 %v3182
      %3222 = vmatprep.subr.mxu0 0.0
      %3223 = vmatpush1.msra.mxu0 0.0
      %3224 = vmatprep.subr.mxu0 0.0
      %3225 = vmatpush1.msra.mxu0 0.0
      %3226 = vmatprep.subr.mxu0 0.0
      %3227 = vmatpush1.msra.mxu0 0.0
      %3228 = vmatprep.subr.mxu0 0.0
      %3229 = vmatpush1.msra.mxu0 0.0
      %3230 = vmatprep.subr.mxu0 0.0
      %3231 = vmatpush1.msra.mxu0 0.0
      %3232 = vmatprep.subr.mxu0 0.0
      %3233 = vmatpush1.msra.mxu0 0.0
      %3234 = vmatprep.subr.mxu0 0.0
      %3235 = vmatpush1.msra.mxu0 0.0
      %3236 = vmatprep.subr.mxu0 0.0
      %3237 = vmatpush1.msra.mxu0 0.0
      %3238 = vmatprep.subr.mxu0 0.0
      %3239 = vmatpush1.msra.mxu0 0.0
      %3240 = vmatprep.subr.mxu0 0.0
      %3241 = vmatpush1.msra.mxu0 0.0
      %3242 = vmatprep.subr.mxu0 0.0
      %3243 = vmatpush1.msra.mxu0 0.0
      %3244 = vmatprep.subr.mxu0 0.0
      %3245 = vmatpush1.msra.mxu0 0.0
      %3246 = vmatprep.subr.mxu0 0.0
      %3247 = vmatpush1.msra.mxu0 0.0
      %3248 = vmatprep.subr.mxu0 0.0
      %3249 = vmatpush1.msra.mxu0 0.0
      %3250 = vmatprep.subr.mxu0 0.0
      %3251 = vmatpush1.msra.mxu0 0.0
      %3252 = vmatprep.subr.mxu0 0.0
      %3253 = vmatpush1.msra.mxu0 0.0
      %3254 = vmatprep.subr.mxu0 0.0
      %3255 = vmatpush1.msra.mxu0 0.0
      %3256 = vmatprep.subr.mxu0 0.0
      %3257 = vmatpush1.msra.mxu0 0.0
      %3258 = vmatprep.subr.mxu0 0.0
      %3259 = vmatpush1.msra.mxu0 0.0
      %3260 = vmatprep.subr.mxu0 0.0
      %3261 = vmatpush1.msra.mxu0 0.0
      %3262 = vmatprep.subr.mxu0 0.0
      %3263 = vmatpush1.msra.mxu0 0.0
      %3264 = vmatprep.subr.mxu0 0.0
      %3265 = vmatpush1.msra.mxu0 0.0
      %3266 = vmatprep.subr.mxu0 0.0
      %3267 = vmatpush1.msra.mxu0 0.0
      %3268 = vmatprep.subr.mxu0 0.0
      %3269 = vmatpush1.msra.mxu0 0.0
      %3270 = vmatprep.subr.mxu0 0.0
      %3271 = vmatpush1.msra.mxu0 0.0
      %3272 = vmatprep.subr.mxu0 0.0
      %3273 = vmatpush1.msra.mxu0 0.0
      %3274 = vmatprep.subr.mxu0 0.0
      %3275 = vmatpush1.msra.mxu0 0.0
      %3276 = vmatprep.subr.mxu0 0.0
      %3277 = vmatpush1.msra.mxu0 0.0
      %3278 = vmatprep.mubr.f32.mxu0 0.0
      %3279 = vmatmul.mubr.f32.gmra.mrb[0].mxu0 %v3188
      %v3280 = vpop.f32.mrb[0].mxu0
      %v3281 = vadd.f32 %v3186, %v3280
      %v3282 = vpop.f32.mrb[0].mxu0
      %3283 = vmatprep.mubr.f32.mxu0 0.0
      %3284 = vmatmul.mubr.f32.gmra.mrb[0].mxu0 %v3191
      %v3285 = vpop.f32.mrb[0].mxu0
      %v3286 = vadd.f32 %v3186, %v3285
      %v3287 = vpop.f32.mrb[0].mxu0
      %3288 = vmatprep.mubr.f32.mxu0 0.0
      %3289 = vmatmul.mubr.f32.gmra.mrb[0].mxu0 %v3194
      %v3290 = vpop.f32.mrb[0].mxu0
      %v3291 = vadd.f32 %v3186, %v3290
      %v3292 = vpop.f32.mrb[0].mxu0
      %3293 = vmatprep.mubr.f32.mxu0 0.0
      %3294 = vmatmul.mubr.f32.gmra.mrb[0].mxu0 %v3197
      %v3295 = vpop.f32.mrb[0].mxu0
      %v3296 = vadd.f32 %v3186, %v3295
      %v3297 = vpop.f32.mrb[0].mxu0
      %3298 = vmatprep.mubr.f32.mxu0 0.0
      %3299 = vmatmul.mubr.f32.gmra.mrb[0].mxu0 %v3200
      %v3300 = vpop.f32.mrb[0].mxu0
      %v3301 = vadd.f32 %v3186, %v3300
      %v3302 = vpop.f32.mrb[0].mxu0
      %3303 = vmatprep.mubr.f32.mxu0 0.0
      %3304 = vmatmul.mubr.f32.gmra.mrb[0].mxu0 %v3203
      %v3305 = vpop.f32.mrb[0].mxu0
      %v3306 = vadd.f32 %v3186, %v3305
      %v3307 = vpop.f32.mrb[0].mxu0
      %3308 = vmatprep.mubr.f32.mxu0 0.0
      %3309 = vmatmul.mubr.f32.gmra.mrb[0].mxu0 %v3206
      %v3310 = vpop.f32.mrb[0].mxu0
      %v3311 = vadd.f32 %v3186, %v3310
      %v3312 = vpop.f32.mrb[0].mxu0
      %3313 = vmatprep.mubr.f32.mxu0 0.0
      %3314 = vmatmul.mubr.f32.gmra.mrb[0].mxu0 %v3209
      %v3315 = vpop.f32.mrb[0].mxu0
      %v3316 = vadd.f32 %v3186, %v3315
      %v3317 = vpop.f32.mrb[0].mxu0
      %3318 = vmatprep.mubr.f32.mxu0 0.0
      %3319 = vmatmul.mubr.f32.gmra.mrb[0].mxu0 %v3212
      %v3320 = vpop.f32.mrb[0].mxu0
      %v3321 = vadd.f32 %v3186, %v3320
      %v3322 = vpop.f32.mrb[0].mxu0
      %3323 = vdwg.mxu0
      %3327 = vrot.lane.b32.xlu0 %v3281, 96
      %v3328 = vpop.permute.xlu0 %3327
      %3329 = vrot.lane.b32.xlu0 %v3286, 96
      %v3330 = vpop.permute.xlu0 %3329
      %3331 = vrot.lane.b32.xlu0 %v3291, 96
      %v3332 = vpop.permute.xlu0 %3331
      %v3333 = vsel %vm832, %v3281, 0
      %v3335 = vsel %vm832, %v3286, 0
      %v3337 = vsel %vm832, %v3291, 0
      %v3339 = vsel %vm832, %v3328, 0
      %v3341 = vsel %vm832, %v3330, 0
      %v3343 = vsel %vm832, %v3332, 0
      %3345 = vmatprep.subr.mxu0 0.0
      %3346 = vmatpush1.xpose.msra.mxu0 %v3339
      %3347 = vmatprep.subr.mxu0 0.0
      %3348 = vmatpush1.xpose.msra.mxu0 %v3341
      %3349 = vmatprep.subr.mxu0 0.0
      %3350 = vmatpush1.xpose.msra.mxu0 %v3343
      %3351 = vmatprep.subr.mxu0 0.0
      %3352 = vmatpush1.xpose.msra.mxu0 0.0
      %3353 = vmatprep.subr.mxu0 0.0
      %3354 = vmatpush1.xpose.msra.mxu0 0.0
      %3355 = vmatprep.subr.mxu0 0.0
      %3356 = vmatpush1.xpose.msra.mxu0 0.0
      %3357 = vmatprep.subr.mxu0 0.0
      %3358 = vmatpush1.xpose.msra.mxu0 0.0
      %3359 = vmatprep.subr.mxu0 0.0
      %3360 = vmatpush1.xpose.msra.mxu0 0.0
      %3361 = vmatprep.subr.mxu0 0.0
      %3362 = vmatpush1.xpose.msra.mxu0 0.0
      %3363 = vmatprep.subr.mxu0 0.0
      %3364 = vmatpush1.xpose.msra.mxu0 0.0
      %3365 = vmatprep.subr.mxu0 0.0
      %3366 = vmatpush1.xpose.msra.mxu0 0.0
      %3367 = vmatprep.subr.mxu0 0.0
      %3368 = vmatpush1.xpose.msra.mxu0 0.0
      %3369 = vmatprep.subr.mxu0 0.0
      %3370 = vmatpush1.xpose.msra.mxu0 0.0
      %3371 = vmatprep.subr.mxu0 0.0
      %3372 = vmatpush1.xpose.msra.mxu0 0.0
      %3373 = vmatprep.subr.mxu0 0.0
      %3374 = vmatpush1.xpose.msra.mxu0 0.0
      %3375 = vmatprep.subr.mxu0 0.0
      %3376 = vmatpush1.xpose.msra.mxu0 0.0
      %3377 = vmatprep.subr.mxu0 0.0
      %3378 = vmatpush1.xpose.msra.mxu0 0.0
      %3379 = vmatprep.subr.mxu0 0.0
      %3380 = vmatpush1.xpose.msra.mxu0 0.0
      %3381 = vmatprep.subr.mxu0 0.0
      %3382 = vmatpush1.xpose.msra.mxu0 0.0
      %3383 = vmatprep.subr.mxu0 0.0
      %3384 = vmatpush1.xpose.msra.mxu0 0.0
      %3385 = vmatprep.subr.mxu0 0.0
      %3386 = vmatpush1.xpose.msra.mxu0 0.0
      %3387 = vmatprep.subr.mxu0 0.0
      %3388 = vmatpush1.xpose.msra.mxu0 0.0
      %3389 = vmatprep.subr.mxu0 0.0
      %3390 = vmatpush1.xpose.msra.mxu0 0.0
      %3391 = vmatprep.subr.mxu0 0.0
      %3392 = vmatpush1.xpose.msra.mxu0 0.0
      %3393 = vmatprep.subr.mxu0 0.0
      %3394 = vmatpush1.xpose.msra.mxu0 0.0
      %3395 = vmatprep.subr.mxu0 0.0
      %3396 = vmatpush1.xpose.msra.mxu0 0.0
      %3397 = vmatprep.subr.mxu0 0.0
      %3398 = vmatpush1.xpose.msra.mxu0 0.0
      %3399 = vmatprep.subr.mxu0 0.0
      %3400 = vmatpush1.xpose.msra.mxu0 0.0
      %3401 = vmatprep.subr.mxu0 0.0
      %3402 = vmatpush1.xpose.msra.mxu0 0.0
      %3403 = vmatprep.subr.mxu0 0.0
      %3404 = vmatpush1.xpose.msra.mxu0 0.0
      %3405 = vmatprep.subr.mxu0 0.0
      %3406 = vmatpush1.xpose.msra.mxu0 0.0
      %3407 = vmatprep.subr.mxu0 0.0
      %3408 = vmatpush1.xpose.msra.mxu0 0.0
      %3409 = vmatprep.mubr.f32.mxu0 0.0
      %3410 = vmatmul.mubr.f32.gmra.mrb[0].mxu0 %v3333
      %v3411 = vpop.f32.mrb[0].mxu0
      %v3412 = vadd.f32 0.0, %v3411
      %v3413 = vpop.f32.mrb[0].mxu0
      %3414 = vmatprep.mubr.f32.mxu0 0.0
      %3415 = vmatmul.mubr.f32.gmra.mrb[0].mxu0 %v3335
      %v3416 = vpop.f32.mrb[0].mxu0
      %v3417 = vadd.f32 0.0, %v3416
      %v3418 = vpop.f32.mrb[0].mxu0
      %3419 = vmatprep.mubr.f32.mxu0 0.0
      %3420 = vmatmul.mubr.f32.gmra.mrb[0].mxu0 %v3337
      %v3421 = vpop.f32.mrb[0].mxu0
      %v3422 = vadd.f32 0.0, %v3421
      %v3423 = vpop.f32.mrb[0].mxu0
      %3424 = vdwg.mxu0
      %3428 = vrot.lane.b32.xlu0 %v3296, 96
      %v3429 = vpop.permute.xlu0 %3428
      %3430 = vrot.lane.b32.xlu0 %v3301, 96
      %v3431 = vpop.permute.xlu0 %3430
      %3432 = vrot.lane.b32.xlu0 %v3306, 96
      %v3433 = vpop.permute.xlu0 %3432
      %v3434 = vsel %vm832, %v3296, 0
      %v3436 = vsel %vm832, %v3301, 0
      %v3438 = vsel %vm832, %v3306, 0
      %v3440 = vsel %vm832, %v3429, 0
      %v3442 = vsel %vm832, %v3431, 0
      %v3444 = vsel %vm832, %v3433, 0
      %3446 = vmatprep.subr.mxu0 0.0
      %3447 = vmatpush1.xpose.msra.mxu0 %v3440
      %3448 = vmatprep.subr.mxu0 0.0
      %3449 = vmatpush1.xpose.msra.mxu0 %v3442
      %3450 = vmatprep.subr.mxu0 0.0
      %3451 = vmatpush1.xpose.msra.mxu0 %v3444
      %3452 = vmatprep.subr.mxu0 0.0
      %3453 = vmatpush1.xpose.msra.mxu0 0.0
      %3454 = vmatprep.subr.mxu0 0.0
      %3455 = vmatpush1.xpose.msra.mxu0 0.0
      %3456 = vmatprep.subr.mxu0 0.0
      %3457 = vmatpush1.xpose.msra.mxu0 0.0
      %3458 = vmatprep.subr.mxu0 0.0
      %3459 = vmatpush1.xpose.msra.mxu0 0.0
      %3460 = vmatprep.subr.mxu0 0.0
      %3461 = vmatpush1.xpose.msra.mxu0 0.0
      %3462 = vmatprep.subr.mxu0 0.0
      %3463 = vmatpush1.xpose.msra.mxu0 0.0
      %3464 = vmatprep.subr.mxu0 0.0
      %3465 = vmatpush1.xpose.msra.mxu0 0.0
      %3466 = vmatprep.subr.mxu0 0.0
      %3467 = vmatpush1.xpose.msra.mxu0 0.0
      %3468 = vmatprep.subr.mxu0 0.0
      %3469 = vmatpush1.xpose.msra.mxu0 0.0
      %3470 = vmatprep.subr.mxu0 0.0
      %3471 = vmatpush1.xpose.msra.mxu0 0.0
      %3472 = vmatprep.subr.mxu0 0.0
      %3473 = vmatpush1.xpose.msra.mxu0 0.0
      %3474 = vmatprep.subr.mxu0 0.0
      %3475 = vmatpush1.xpose.msra.mxu0 0.0
      %3476 = vmatprep.subr.mxu0 0.0
      %3477 = vmatpush1.xpose.msra.mxu0 0.0
      %3478 = vmatprep.subr.mxu0 0.0
      %3479 = vmatpush1.xpose.msra.mxu0 0.0
      %3480 = vmatprep.subr.mxu0 0.0
      %3481 = vmatpush1.xpose.msra.mxu0 0.0
      %3482 = vmatprep.subr.mxu0 0.0
      %3483 = vmatpush1.xpose.msra.mxu0 0.0
      %3484 = vmatprep.subr.mxu0 0.0
      %3485 = vmatpush1.xpose.msra.mxu0 0.0
      %3486 = vmatprep.subr.mxu0 0.0
      %3487 = vmatpush1.xpose.msra.mxu0 0.0
      %3488 = vmatprep.subr.mxu0 0.0
      %3489 = vmatpush1.xpose.msra.mxu0 0.0
      %3490 = vmatprep.subr.mxu0 0.0
      %3491 = vmatpush1.xpose.msra.mxu0 0.0
      %3492 = vmatprep.subr.mxu0 0.0
      %3493 = vmatpush1.xpose.msra.mxu0 0.0
      %3494 = vmatprep.subr.mxu0 0.0
      %3495 = vmatpush1.xpose.msra.mxu0 0.0
      %3496 = vmatprep.subr.mxu0 0.0
      %3497 = vmatpush1.xpose.msra.mxu0 0.0
      %3498 = vmatprep.subr.mxu0 0.0
      %3499 = vmatpush1.xpose.msra.mxu0 0.0
      %3500 = vmatprep.subr.mxu0 0.0
      %3501 = vmatpush1.xpose.msra.mxu0 0.0
      %3502 = vmatprep.subr.mxu0 0.0
      %3503 = vmatpush1.xpose.msra.mxu0 0.0
      %3504 = vmatprep.subr.mxu0 0.0
      %3505 = vmatpush1.xpose.msra.mxu0 0.0
      %3506 = vmatprep.subr.mxu0 0.0
      %3507 = vmatpush1.xpose.msra.mxu0 0.0
      %3508 = vmatprep.subr.mxu0 0.0
      %3509 = vmatpush1.xpose.msra.mxu0 0.0
      %3510 = vmatprep.mubr.f32.mxu0 0.0
      %3511 = vmatmul.mubr.f32.gmra.mrb[0].mxu0 %v3434
      %v3512 = vpop.f32.mrb[0].mxu0
      %v3513 = vadd.f32 0.0, %v3512
      %v3514 = vpop.f32.mrb[0].mxu0
      %3515 = vmatprep.mubr.f32.mxu0 0.0
      %3516 = vmatmul.mubr.f32.gmra.mrb[0].mxu0 %v3436
      %v3517 = vpop.f32.mrb[0].mxu0
      %v3518 = vadd.f32 0.0, %v3517
      %v3519 = vpop.f32.mrb[0].mxu0
      %3520 = vmatprep.mubr.f32.mxu0 0.0
      %3521 = vmatmul.mubr.f32.gmra.mrb[0].mxu0 %v3438
      %v3522 = vpop.f32.mrb[0].mxu0
      %v3523 = vadd.f32 0.0, %v3522
      %v3524 = vpop.f32.mrb[0].mxu0
      %3525 = vdwg.mxu0
      %3529 = vrot.lane.b32.xlu0 %v3311, 96
      %v3530 = vpop.permute.xlu0 %3529
      %3531 = vrot.lane.b32.xlu0 %v3316, 96
      %v3532 = vpop.permute.xlu0 %3531
      %3533 = vrot.lane.b32.xlu0 %v3321, 96
      %v3534 = vpop.permute.xlu0 %3533
      %v3535 = vsel %vm832, %v3311, 0
      %v3537 = vsel %vm832, %v3316, 0
      %v3539 = vsel %vm832, %v3321, 0
      %v3541 = vsel %vm832, %v3530, 0
      %v3543 = vsel %vm832, %v3532, 0
      %v3545 = vsel %vm832, %v3534, 0
      %3547 = vmatprep.subr.mxu0 0.0
      %3548 = vmatpush1.xpose.msra.mxu0 %v3541
      %3549 = vmatprep.subr.mxu0 0.0
      %3550 = vmatpush1.xpose.msra.mxu0 %v3543
      %3551 = vmatprep.subr.mxu0 0.0
      %3552 = vmatpush1.xpose.msra.mxu0 %v3545
      %3553 = vmatprep.subr.mxu0 0.0
      %3554 = vmatpush1.xpose.msra.mxu0 0.0
      %3555 = vmatprep.subr.mxu0 0.0
      %3556 = vmatpush1.xpose.msra.mxu0 0.0
      %3557 = vmatprep.subr.mxu0 0.0
      %3558 = vmatpush1.xpose.msra.mxu0 0.0
      %3559 = vmatprep.subr.mxu0 0.0
      %3560 = vmatpush1.xpose.msra.mxu0 0.0
      %3561 = vmatprep.subr.mxu0 0.0
      %3562 = vmatpush1.xpose.msra.mxu0 0.0
      %3563 = vmatprep.subr.mxu0 0.0
      %3564 = vmatpush1.xpose.msra.mxu0 0.0
      %3565 = vmatprep.subr.mxu0 0.0
      %3566 = vmatpush1.xpose.msra.mxu0 0.0
      %3567 = vmatprep.subr.mxu0 0.0
      %3568 = vmatpush1.xpose.msra.mxu0 0.0
      %3569 = vmatprep.subr.mxu0 0.0
      %3570 = vmatpush1.xpose.msra.mxu0 0.0
      %3571 = vmatprep.subr.mxu0 0.0
      %3572 = vmatpush1.xpose.msra.mxu0 0.0
      %3573 = vmatprep.subr.mxu0 0.0
      %3574 = vmatpush1.xpose.msra.mxu0 0.0
      %3575 = vmatprep.subr.mxu0 0.0
      %3576 = vmatpush1.xpose.msra.mxu0 0.0
      %3577 = vmatprep.subr.mxu0 0.0
      %3578 = vmatpush1.xpose.msra.mxu0 0.0
      %3579 = vmatprep.subr.mxu0 0.0
      %3580 = vmatpush1.xpose.msra.mxu0 0.0
      %3581 = vmatprep.subr.mxu0 0.0
      %3582 = vmatpush1.xpose.msra.mxu0 0.0
      %3583 = vmatprep.subr.mxu0 0.0
      %3584 = vmatpush1.xpose.msra.mxu0 0.0
      %3585 = vmatprep.subr.mxu0 0.0
      %3586 = vmatpush1.xpose.msra.mxu0 0.0
      %3587 = vmatprep.subr.mxu0 0.0
      %3588 = vmatpush1.xpose.msra.mxu0 0.0
      %3589 = vmatprep.subr.mxu0 0.0
      %3590 = vmatpush1.xpose.msra.mxu0 0.0
      %3591 = vmatprep.subr.mxu0 0.0
      %3592 = vmatpush1.xpose.msra.mxu0 0.0
      %3593 = vmatprep.subr.mxu0 0.0
      %3594 = vmatpush1.xpose.msra.mxu0 0.0
      %3595 = vmatprep.subr.mxu0 0.0
      %3596 = vmatpush1.xpose.msra.mxu0 0.0
      %3597 = vmatprep.subr.mxu0 0.0
      %3598 = vmatpush1.xpose.msra.mxu0 0.0
      %3599 = vmatprep.subr.mxu0 0.0
      %3600 = vmatpush1.xpose.msra.mxu0 0.0
      %3601 = vmatprep.subr.mxu0 0.0
      %3602 = vmatpush1.xpose.msra.mxu0 0.0
      %3603 = vmatprep.subr.mxu0 0.0
      %3604 = vmatpush1.xpose.msra.mxu0 0.0
      %3605 = vmatprep.subr.mxu0 0.0
      %3606 = vmatpush1.xpose.msra.mxu0 0.0
      %3607 = vmatprep.subr.mxu0 0.0
      %3608 = vmatpush1.xpose.msra.mxu0 0.0
      %3609 = vmatprep.subr.mxu0 0.0
      %3610 = vmatpush1.xpose.msra.mxu0 0.0
      %3611 = vmatprep.mubr.f32.mxu0 0.0
      %3612 = vmatmul.mubr.f32.gmra.mrb[0].mxu0 %v3535
      %v3613 = vpop.f32.mrb[0].mxu0
      %v3614 = vadd.f32 0.0, %v3613
      %v3615 = vpop.f32.mrb[0].mxu0
      %3616 = vmatprep.mubr.f32.mxu0 0.0
      %3617 = vmatmul.mubr.f32.gmra.mrb[0].mxu0 %v3537
      %v3618 = vpop.f32.mrb[0].mxu0
      %v3619 = vadd.f32 0.0, %v3618
      %v3620 = vpop.f32.mrb[0].mxu0
      %3621 = vmatprep.mubr.f32.mxu0 0.0
      %3622 = vmatmul.mubr.f32.gmra.mrb[0].mxu0 %v3539
      %v3623 = vpop.f32.mrb[0].mxu0
      %v3624 = vadd.f32 0.0, %v3623
      %v3625 = vpop.f32.mrb[0].mxu0
      %3626 = vdwg.mxu0
      %v3627 = vmul.f32 %v3412, 0.25
      %v3628 = vmul.f32 %v3417, 0.25
      %v3629 = vmul.f32 %v3422, 0.25
      %v3630 = vmul.f32 %v3513, 0.25
      %v3631 = vmul.f32 %v3518, 0.25
      %v3632 = vmul.f32 %v3523, 0.25
      %v3633 = vmul.f32 %v3614, 0.25
      %v3634 = vmul.f32 %v3619, 0.25
      %v3635 = vmul.f32 %v3624, 0.25
      %v3636 = vsel %vm524, %v3627, -1e+30
      %v3637 = vsel %vm524, %v3628, -1e+30
      %v3638 = vsel %vm524, %v3629, -1e+30
      %v3639 = vsel %vm524, %v3630, -1e+30
      %v3640 = vsel %vm524, %v3631, -1e+30
      %v3641 = vsel %vm524, %v3632, -1e+30
      %v3642 = vsel %vm524, %v3633, -1e+30
      %v3643 = vsel %vm524, %v3634, -1e+30
      %v3644 = vsel %vm524, %v3635, -1e+30
      %v3645 = vsel %vm1145, %v3636, -inf
      %3646 = vmax.xlane.f32.xlu0 %v3645
      %v3647 = vpop.xlane.xlu0 %3646
      %v3648 = vsel %vm1145, %v3637, -inf
      %3649 = vmax.xlane.f32.xlu0 %v3648
      %v3650 = vpop.xlane.xlu0 %3649
      %v3651 = vsel %vm1145, %v3638, -inf
      %3652 = vmax.xlane.f32.xlu0 %v3651
      %v3653 = vpop.xlane.xlu0 %3652
      %v3654 = vsel %vm1145, %v3639, -inf
      %3655 = vmax.xlane.f32.xlu0 %v3654
      %v3656 = vpop.xlane.xlu0 %3655
      %v3657 = vsel %vm1145, %v3640, -inf
      %3658 = vmax.xlane.f32.xlu0 %v3657
      %v3659 = vpop.xlane.xlu0 %3658
      %v3660 = vsel %vm1145, %v3641, -inf
      %3661 = vmax.xlane.f32.xlu0 %v3660
      %v3662 = vpop.xlane.xlu0 %3661
      %v3663 = vsel %vm1145, %v3642, -inf
      %3664 = vmax.xlane.f32.xlu0 %v3663
      %v3665 = vpop.xlane.xlu0 %3664
      %v3666 = vsel %vm1145, %v3643, -inf
      %3667 = vmax.xlane.f32.xlu0 %v3666
      %v3668 = vpop.xlane.xlu0 %3667
      %v3669 = vsel %vm1145, %v3644, -inf
      %3670 = vmax.xlane.f32.xlu0 %v3669
      %v3671 = vpop.xlane.xlu0 %3670
      %v3672 = vsub.f32 %v3636, %v3647
      %v3673 = vsub.f32 %v3637, %v3650
      %v3674 = vsub.f32 %v3638, %v3653
      %v3675 = vsub.f32 %v3639, %v3656
      %v3676 = vsub.f32 %v3640, %v3659
      %v3677 = vsub.f32 %v3641, %v3662
      %v3678 = vsub.f32 %v3642, %v3665
      %v3679 = vsub.f32 %v3643, %v3668
      %v3680 = vsub.f32 %v3644, %v3671
      %v3681 = vmul.f32 %v3672, 1.442695
      %v3682 = vpow.pop %v3681
      %v3683 = vmul.f32 %v3673, 1.442695
      %v3684 = vpow.pop %v3683
      %v3685 = vmul.f32 %v3674, 1.442695
      %v3686 = vpow.pop %v3685
      %v3687 = vmul.f32 %v3675, 1.442695
      %v3688 = vpow.pop %v3687
      %v3689 = vmul.f32 %v3676, 1.442695
      %v3690 = vpow.pop %v3689
      %v3691 = vmul.f32 %v3677, 1.442695
      %v3692 = vpow.pop %v3691
      %v3693 = vmul.f32 %v3678, 1.442695
      %v3694 = vpow.pop %v3693
      %v3695 = vmul.f32 %v3679, 1.442695
      %v3696 = vpow.pop %v3695
      %v3697 = vmul.f32 %v3680, 1.442695
      %v3698 = vpow.pop %v3697
      %v3699 = vsel %vm1145, %v3682, 0.0
      %3700 = vadd.xlane.f32.xlu0 %v3699
      %v3701 = vpop.xlane.xlu0 %3700
      %v3702 = vsel %vm1145, %v3684, 0.0
      %3703 = vadd.xlane.f32.xlu0 %v3702
      %v3704 = vpop.xlane.xlu0 %3703
      %v3705 = vsel %vm1145, %v3686, 0.0
      %3706 = vadd.xlane.f32.xlu0 %v3705
      %v3707 = vpop.xlane.xlu0 %3706
      %v3708 = vsel %vm1145, %v3688, 0.0
      %3709 = vadd.xlane.f32.xlu0 %v3708
      %v3710 = vpop.xlane.xlu0 %3709
      %v3711 = vsel %vm1145, %v3690, 0.0
      %3712 = vadd.xlane.f32.xlu0 %v3711
      %v3713 = vpop.xlane.xlu0 %3712
      %v3714 = vsel %vm1145, %v3692, 0.0
      %3715 = vadd.xlane.f32.xlu0 %v3714
      %v3716 = vpop.xlane.xlu0 %3715
      %v3717 = vsel %vm1145, %v3694, 0.0
      %3718 = vadd.xlane.f32.xlu0 %v3717
      %v3719 = vpop.xlane.xlu0 %3718
      %v3720 = vsel %vm1145, %v3696, 0.0
      %3721 = vadd.xlane.f32.xlu0 %v3720
      %v3722 = vpop.xlane.xlu0 %3721
      %v3723 = vsel %vm1145, %v3698, 0.0
      %3724 = vadd.xlane.f32.xlu0 %v3723
      %v3725 = vpop.xlane.xlu0 %3724
      %v3726 = vrcp.pop %v3701
      %v3727 = vmul.f32 1.0, %v3726
      %v3728 = vrcp.pop %v3704
      %v3729 = vmul.f32 1.0, %v3728
      %v3730 = vrcp.pop %v3707
      %v3731 = vmul.f32 1.0, %v3730
      %v3732 = vrcp.pop %v3710
      %v3733 = vmul.f32 1.0, %v3732
      %v3734 = vrcp.pop %v3713
      %v3735 = vmul.f32 1.0, %v3734
      %v3736 = vrcp.pop %v3716
      %v3737 = vmul.f32 1.0, %v3736
      %v3738 = vrcp.pop %v3719
      %v3739 = vmul.f32 1.0, %v3738
      %v3740 = vrcp.pop %v3722
      %v3741 = vmul.f32 1.0, %v3740
      %v3742 = vrcp.pop %v3725
      %v3743 = vmul.f32 1.0, %v3742
      %v3744 = vmul.f32 %v3682, %v3727
      %v3745 = vmul.f32 %v3684, %v3729
      %v3746 = vmul.f32 %v3686, %v3731
      %v3747 = vmul.f32 %v3688, %v3733
      %v3748 = vmul.f32 %v3690, %v3735
      %v3749 = vmul.f32 %v3692, %v3737
      %v3750 = vmul.f32 %v3694, %v3739
      %v3751 = vmul.f32 %v3696, %v3741
      %v3752 = vmul.f32 %v3698, %v3743
      %s3753 = scalar_lea.vmem %s351, 48
      %3754 = vst.msk [vmem:[%s3753] sm:$0xff] %vm1254, %v3744
      %3755 = vst.msk [vmem:[%s3753 + $0x8] sm:$0xff] %vm1254, %v3745
      %3756 = vst.msk [vmem:[%s3753 + $0x10] sm:$0x1] %vm1257, %v3746
      %3757 = vst.msk [vmem:[%s3753 + $0x60] sm:$0xff] %vm1254, %v3747
      %3758 = vst.msk [vmem:[%s3753 + $0x68] sm:$0xff] %vm1254, %v3748
      %3759 = vst.msk [vmem:[%s3753 + $0x70] sm:$0x1] %vm1257, %v3749
      %3760 = vst.msk [vmem:[%s3753 + $0xc0] sm:$0xff] %vm1254, %v3750
      %3761 = vst.msk [vmem:[%s3753 + $0xc8] sm:$0xff] %vm1254, %v3751
      %3762 = vst.msk [vmem:[%s3753 + $0xd0] sm:$0x1] %vm1257, %v3752
      %3763 = vrot.lane.b32.xlu0 %v3281, 64
      %v3764 = vpop.permute.xlu0 %3763
      %3765 = vrot.lane.b32.xlu0 %v3286, 64
      %v3766 = vpop.permute.xlu0 %3765
      %3767 = vrot.lane.b32.xlu0 %v3291, 64
      %v3768 = vpop.permute.xlu0 %3767
      %v3773 = vsel %vm1145, %v3744, 0
      %v3776 = vsel %vm1145, %v3745, 0
      %v3779 = vsel %vm1145, %v3746, 0
      %3781 = vmatprep.subr.mxu0 0.0
      %3782 = vmatpush1.msra.mxu0 %v3764
      %3783 = vmatprep.subr.mxu0 0.0
      %3784 = vmatpush1.msra.mxu0 %v3766
      %3785 = vmatprep.subr.mxu0 0.0
      %3786 = vmatpush1.msra.mxu0 %v3768
      %3787 = vmatprep.subr.mxu0 0.0
      %3788 = vmatpush1.msra.mxu0 0.0
      %3789 = vmatprep.subr.mxu0 0.0
      %3790 = vmatpush1.msra.mxu0 0.0
      %3791 = vmatprep.subr.mxu0 0.0
      %3792 = vmatpush1.msra.mxu0 0.0
      %3793 = vmatprep.subr.mxu0 0.0
      %3794 = vmatpush1.msra.mxu0 0.0
      %3795 = vmatprep.subr.mxu0 0.0
      %3796 = vmatpush1.msra.mxu0 0.0
      %3797 = vmatprep.subr.mxu0 0.0
      %3798 = vmatpush1.msra.mxu0 0.0
      %3799 = vmatprep.subr.mxu0 0.0
      %3800 = vmatpush1.msra.mxu0 0.0
      %3801 = vmatprep.subr.mxu0 0.0
      %3802 = vmatpush1.msra.mxu0 0.0
      %3803 = vmatprep.subr.mxu0 0.0
      %3804 = vmatpush1.msra.mxu0 0.0
      %3805 = vmatprep.subr.mxu0 0.0
      %3806 = vmatpush1.msra.mxu0 0.0
      %3807 = vmatprep.subr.mxu0 0.0
      %3808 = vmatpush1.msra.mxu0 0.0
      %3809 = vmatprep.subr.mxu0 0.0
      %3810 = vmatpush1.msra.mxu0 0.0
      %3811 = vmatprep.subr.mxu0 0.0
      %3812 = vmatpush1.msra.mxu0 0.0
      %3813 = vmatprep.subr.mxu0 0.0
      %3814 = vmatpush1.msra.mxu0 0.0
      %3815 = vmatprep.subr.mxu0 0.0
      %3816 = vmatpush1.msra.mxu0 0.0
      %3817 = vmatprep.subr.mxu0 0.0
      %3818 = vmatpush1.msra.mxu0 0.0
      %3819 = vmatprep.subr.mxu0 0.0
      %3820 = vmatpush1.msra.mxu0 0.0
      %3821 = vmatprep.subr.mxu0 0.0
      %3822 = vmatpush1.msra.mxu0 0.0
      %3823 = vmatprep.subr.mxu0 0.0
      %3824 = vmatpush1.msra.mxu0 0.0
      %3825 = vmatprep.subr.mxu0 0.0
      %3826 = vmatpush1.msra.mxu0 0.0
      %3827 = vmatprep.subr.mxu0 0.0
      %3828 = vmatpush1.msra.mxu0 0.0
      %3829 = vmatprep.subr.mxu0 0.0
      %3830 = vmatpush1.msra.mxu0 0.0
      %3831 = vmatprep.subr.mxu0 0.0
      %3832 = vmatpush1.msra.mxu0 0.0
      %3833 = vmatprep.subr.mxu0 0.0
      %3834 = vmatpush1.msra.mxu0 0.0
      %3835 = vmatprep.subr.mxu0 0.0
      %3836 = vmatpush1.msra.mxu0 0.0
      %3837 = vmatprep.subr.mxu0 0.0
      %3838 = vmatpush1.msra.mxu0 0.0
      %3839 = vmatprep.subr.mxu0 0.0
      %3840 = vmatpush1.msra.mxu0 0.0
      %3841 = vmatprep.subr.mxu0 0.0
      %3842 = vmatpush1.msra.mxu0 0.0
      %3843 = vmatprep.subr.mxu0 0.0
      %3844 = vmatpush1.msra.mxu0 0.0
      %3845 = vmatprep.mubr.f32.mxu0 0.0
      %3846 = vmatmul.mubr.f32.gmra.mrb[0].mxu0 %v3773
      %v3847 = vpop.f32.mrb[0].mxu0
      %v3848 = vadd.f32 0.0, %v3847
      %v3849 = vpop.f32.mrb[0].mxu0
      %3850 = vmatprep.mubr.f32.mxu0 0.0
      %3851 = vmatmul.mubr.f32.gmra.mrb[0].mxu0 %v3776
      %v3852 = vpop.f32.mrb[0].mxu0
      %v3853 = vadd.f32 0.0, %v3852
      %v3854 = vpop.f32.mrb[0].mxu0
      %3855 = vmatprep.mubr.f32.mxu0 0.0
      %3856 = vmatmul.mubr.f32.gmra.mrb[0].mxu0 %v3779
      %v3857 = vpop.f32.mrb[0].mxu0
      %v3858 = vadd.f32 0.0, %v3857
      %v3859 = vpop.f32.mrb[0].mxu0
      %3860 = vdwg.mxu0
      %3861 = vrot.lane.b32.xlu0 %v3296, 64
      %v3862 = vpop.permute.xlu0 %3861
      %3863 = vrot.lane.b32.xlu0 %v3301, 64
      %v3864 = vpop.permute.xlu0 %3863
      %3865 = vrot.lane.b32.xlu0 %v3306, 64
      %v3866 = vpop.permute.xlu0 %3865
      %v3871 = vsel %vm1145, %v3747, 0
      %v3874 = vsel %vm1145, %v3748, 0
      %v3877 = vsel %vm1145, %v3749, 0
      %3879 = vmatprep.subr.mxu0 0.0
      %3880 = vmatpush1.msra.mxu0 %v3862
      %3881 = vmatprep.subr.mxu0 0.0
      %3882 = vmatpush1.msra.mxu0 %v3864
      %3883 = vmatprep.subr.mxu0 0.0
      %3884 = vmatpush1.msra.mxu0 %v3866
      %3885 = vmatprep.subr.mxu0 0.0
      %3886 = vmatpush1.msra.mxu0 0.0
      %3887 = vmatprep.subr.mxu0 0.0
      %3888 = vmatpush1.msra.mxu0 0.0
      %3889 = vmatprep.subr.mxu0 0.0
      %3890 = vmatpush1.msra.mxu0 0.0
      %3891 = vmatprep.subr.mxu0 0.0
      %3892 = vmatpush1.msra.mxu0 0.0
      %3893 = vmatprep.subr.mxu0 0.0
      %3894 = vmatpush1.msra.mxu0 0.0
      %3895 = vmatprep.subr.mxu0 0.0
      %3896 = vmatpush1.msra.mxu0 0.0
      %3897 = vmatprep.subr.mxu0 0.0
      %3898 = vmatpush1.msra.mxu0 0.0
      %3899 = vmatprep.subr.mxu0 0.0
      %3900 = vmatpush1.msra.mxu0 0.0
      %3901 = vmatprep.subr.mxu0 0.0
      %3902 = vmatpush1.msra.mxu0 0.0
      %3903 = vmatprep.subr.mxu0 0.0
      %3904 = vmatpush1.msra.mxu0 0.0
      %3905 = vmatprep.subr.mxu0 0.0
      %3906 = vmatpush1.msra.mxu0 0.0
      %3907 = vmatprep.subr.mxu0 0.0
      %3908 = vmatpush1.msra.mxu0 0.0
      %3909 = vmatprep.subr.mxu0 0.0
      %3910 = vmatpush1.msra.mxu0 0.0
      %3911 = vmatprep.subr.mxu0 0.0
      %3912 = vmatpush1.msra.mxu0 0.0
      %3913 = vmatprep.subr.mxu0 0.0
      %3914 = vmatpush1.msra.mxu0 0.0
      %3915 = vmatprep.subr.mxu0 0.0
      %3916 = vmatpush1.msra.mxu0 0.0
      %3917 = vmatprep.subr.mxu0 0.0
      %3918 = vmatpush1.msra.mxu0 0.0
      %3919 = vmatprep.subr.mxu0 0.0
      %3920 = vmatpush1.msra.mxu0 0.0
      %3921 = vmatprep.subr.mxu0 0.0
      %3922 = vmatpush1.msra.mxu0 0.0
      %3923 = vmatprep.subr.mxu0 0.0
      %3924 = vmatpush1.msra.mxu0 0.0
      %3925 = vmatprep.subr.mxu0 0.0
      %3926 = vmatpush1.msra.mxu0 0.0
      %3927 = vmatprep.subr.mxu0 0.0
      %3928 = vmatpush1.msra.mxu0 0.0
      %3929 = vmatprep.subr.mxu0 0.0
      %3930 = vmatpush1.msra.mxu0 0.0
      %3931 = vmatprep.subr.mxu0 0.0
      %3932 = vmatpush1.msra.mxu0 0.0
      %3933 = vmatprep.subr.mxu0 0.0
      %3934 = vmatpush1.msra.mxu0 0.0
      %3935 = vmatprep.subr.mxu0 0.0
      %3936 = vmatpush1.msra.mxu0 0.0
      %3937 = vmatprep.subr.mxu0 0.0
      %3938 = vmatpush1.msra.mxu0 0.0
      %3939 = vmatprep.subr.mxu0 0.0
      %3940 = vmatpush1.msra.mxu0 0.0
      %3941 = vmatprep.subr.mxu0 0.0
      %3942 = vmatpush1.msra.mxu0 0.0
      %3943 = vmatprep.mubr.f32.mxu0 0.0
      %3944 = vmatmul.mubr.f32.gmra.mrb[0].mxu0 %v3871
      %v3945 = vpop.f32.mrb[0].mxu0
      %v3946 = vadd.f32 0.0, %v3945
      %v3947 = vpop.f32.mrb[0].mxu0
      %3948 = vmatprep.mubr.f32.mxu0 0.0
      %3949 = vmatmul.mubr.f32.gmra.mrb[0].mxu0 %v3874
      %v3950 = vpop.f32.mrb[0].mxu0
      %v3951 = vadd.f32 0.0, %v3950
      %v3952 = vpop.f32.mrb[0].mxu0
      %3953 = vmatprep.mubr.f32.mxu0 0.0
      %3954 = vmatmul.mubr.f32.gmra.mrb[0].mxu0 %v3877
      %v3955 = vpop.f32.mrb[0].mxu0
      %v3956 = vadd.f32 0.0, %v3955
      %v3957 = vpop.f32.mrb[0].mxu0
      %3958 = vdwg.mxu0
      %3959 = vrot.lane.b32.xlu0 %v3311, 64
      %v3960 = vpop.permute.xlu0 %3959
      %3961 = vrot.lane.b32.xlu0 %v3316, 64
      %v3962 = vpop.permute.xlu0 %3961
      %3963 = vrot.lane.b32.xlu0 %v3321, 64
      %v3964 = vpop.permute.xlu0 %3963
      %v3969 = vsel %vm1145, %v3750, 0
      %v3972 = vsel %vm1145, %v3751, 0
      %v3975 = vsel %vm1145, %v3752, 0
      %3977 = vmatprep.subr.mxu0 0.0
      %3978 = vmatpush1.msra.mxu0 %v3960
      %3979 = vmatprep.subr.mxu0 0.0
      %3980 = vmatpush1.msra.mxu0 %v3962
      %3981 = vmatprep.subr.mxu0 0.0
      %3982 = vmatpush1.msra.mxu0 %v3964
      %3983 = vmatprep.subr.mxu0 0.0
      %3984 = vmatpush1.msra.mxu0 0.0
      %3985 = vmatprep.subr.mxu0 0.0
      %3986 = vmatpush1.msra.mxu0 0.0
      %3987 = vmatprep.subr.mxu0 0.0
      %3988 = vmatpush1.msra.mxu0 0.0
      %3989 = vmatprep.subr.mxu0 0.0
      %3990 = vmatpush1.msra.mxu0 0.0
      %3991 = vmatprep.subr.mxu0 0.0
      %3992 = vmatpush1.msra.mxu0 0.0
      %3993 = vmatprep.subr.mxu0 0.0
      %3994 = vmatpush1.msra.mxu0 0.0
      %3995 = vmatprep.subr.mxu0 0.0
      %3996 = vmatpush1.msra.mxu0 0.0
      %3997 = vmatprep.subr.mxu0 0.0
      %3998 = vmatpush1.msra.mxu0 0.0
      %3999 = vmatprep.subr.mxu0 0.0
      %4000 = vmatpush1.msra.mxu0 0.0
      %4001 = vmatprep.subr.mxu0 0.0
      %4002 = vmatpush1.msra.mxu0 0.0
      %4003 = vmatprep.subr.mxu0 0.0
      %4004 = vmatpush1.msra.mxu0 0.0
      %4005 = vmatprep.subr.mxu0 0.0
      %4006 = vmatpush1.msra.mxu0 0.0
      %4007 = vmatprep.subr.mxu0 0.0
      %4008 = vmatpush1.msra.mxu0 0.0
      %4009 = vmatprep.subr.mxu0 0.0
      %4010 = vmatpush1.msra.mxu0 0.0
      %4011 = vmatprep.subr.mxu0 0.0
      %4012 = vmatpush1.msra.mxu0 0.0
      %4013 = vmatprep.subr.mxu0 0.0
      %4014 = vmatpush1.msra.mxu0 0.0
      %4015 = vmatprep.subr.mxu0 0.0
      %4016 = vmatpush1.msra.mxu0 0.0
      %4017 = vmatprep.subr.mxu0 0.0
      %4018 = vmatpush1.msra.mxu0 0.0
      %4019 = vmatprep.subr.mxu0 0.0
      %4020 = vmatpush1.msra.mxu0 0.0
      %4021 = vmatprep.subr.mxu0 0.0
      %4022 = vmatpush1.msra.mxu0 0.0
      %4023 = vmatprep.subr.mxu0 0.0
      %4024 = vmatpush1.msra.mxu0 0.0
      %4025 = vmatprep.subr.mxu0 0.0
      %4026 = vmatpush1.msra.mxu0 0.0
      %4027 = vmatprep.subr.mxu0 0.0
      %4028 = vmatpush1.msra.mxu0 0.0
      %4029 = vmatprep.subr.mxu0 0.0
      %4030 = vmatpush1.msra.mxu0 0.0
      %4031 = vmatprep.subr.mxu0 0.0
      %4032 = vmatpush1.msra.mxu0 0.0
      %4033 = vmatprep.subr.mxu0 0.0
      %4034 = vmatpush1.msra.mxu0 0.0
      %4035 = vmatprep.subr.mxu0 0.0
      %4036 = vmatpush1.msra.mxu0 0.0
      %4037 = vmatprep.subr.mxu0 0.0
      %4038 = vmatpush1.msra.mxu0 0.0
      %4039 = vmatprep.subr.mxu0 0.0
      %4040 = vmatpush1.msra.mxu0 0.0
      %4041 = vmatprep.mubr.f32.mxu0 0.0
      %4042 = vmatmul.mubr.f32.gmra.mrb[0].mxu0 %v3969
      %v4043 = vpop.f32.mrb[0].mxu0
      %v4044 = vadd.f32 0.0, %v4043
      %v4045 = vpop.f32.mrb[0].mxu0
      %4046 = vmatprep.mubr.f32.mxu0 0.0
      %4047 = vmatmul.mubr.f32.gmra.mrb[0].mxu0 %v3972
      %v4048 = vpop.f32.mrb[0].mxu0
      %v4049 = vadd.f32 0.0, %v4048
      %v4050 = vpop.f32.mrb[0].mxu0
      %4051 = vmatprep.mubr.f32.mxu0 0.0
      %4052 = vmatmul.mubr.f32.gmra.mrb[0].mxu0 %v3975
      %v4053 = vpop.f32.mrb[0].mxu0
      %v4054 = vadd.f32 0.0, %v4053
      %v4055 = vpop.f32.mrb[0].mxu0
      %4056 = vdwg.mxu0
      %4057 = vrot.lane.b32.xlu0 %v3281, 112
      %v4058 = vpop.permute.xlu0 %4057
      %4059 = vrot.lane.b32.xlu0 %v3286, 112
      %v4060 = vpop.permute.xlu0 %4059
      %4061 = vrot.lane.b32.xlu0 %v3291, 112
      %v4062 = vpop.permute.xlu0 %4061
      %4063 = vrot.lane.b32.xlu0 %v3281, 80
      %v4064 = vpop.permute.xlu0 %4063
      %4065 = vrot.lane.b32.xlu0 %v3286, 80
      %v4066 = vpop.permute.xlu0 %4065
      %4067 = vrot.lane.b32.xlu0 %v3291, 80
      %v4068 = vpop.permute.xlu0 %4067
      %v4069 = vsel %vm832, %v4058, 0
      %v4071 = vsel %vm832, %v4060, 0
      %v4073 = vsel %vm832, %v4062, 0
      %v4075 = vsel %vm832, %v4064, 0
      %v4077 = vsel %vm832, %v4066, 0
      %v4079 = vsel %vm832, %v4068, 0
      %4081 = vmatprep.subr.mxu0 0.0
      %4082 = vmatpush1.xpose.msra.mxu0 %v4075
      %4083 = vmatprep.subr.mxu0 0.0
      %4084 = vmatpush1.xpose.msra.mxu0 %v4077
      %4085 = vmatprep.subr.mxu0 0.0
      %4086 = vmatpush1.xpose.msra.mxu0 %v4079
      %4087 = vmatprep.subr.mxu0 0.0
      %4088 = vmatpush1.xpose.msra.mxu0 0.0
      %4089 = vmatprep.subr.mxu0 0.0
      %4090 = vmatpush1.xpose.msra.mxu0 0.0
      %4091 = vmatprep.subr.mxu0 0.0
      %4092 = vmatpush1.xpose.msra.mxu0 0.0
      %4093 = vmatprep.subr.mxu0 0.0
      %4094 = vmatpush1.xpose.msra.mxu0 0.0
      %4095 = vmatprep.subr.mxu0 0.0
      %4096 = vmatpush1.xpose.msra.mxu0 0.0
      %4097 = vmatprep.subr.mxu0 0.0
      %4098 = vmatpush1.xpose.msra.mxu0 0.0
      %4099 = vmatprep.subr.mxu0 0.0
      %4100 = vmatpush1.xpose.msra.mxu0 0.0
      %4101 = vmatprep.subr.mxu0 0.0
      %4102 = vmatpush1.xpose.msra.mxu0 0.0
      %4103 = vmatprep.subr.mxu0 0.0
      %4104 = vmatpush1.xpose.msra.mxu0 0.0
      %4105 = vmatprep.subr.mxu0 0.0
      %4106 = vmatpush1.xpose.msra.mxu0 0.0
      %4107 = vmatprep.subr.mxu0 0.0
      %4108 = vmatpush1.xpose.msra.mxu0 0.0
      %4109 = vmatprep.subr.mxu0 0.0
      %4110 = vmatpush1.xpose.msra.mxu0 0.0
      %4111 = vmatprep.subr.mxu0 0.0
      %4112 = vmatpush1.xpose.msra.mxu0 0.0
      %4113 = vmatprep.subr.mxu0 0.0
      %4114 = vmatpush1.xpose.msra.mxu0 0.0
      %4115 = vmatprep.subr.mxu0 0.0
      %4116 = vmatpush1.xpose.msra.mxu0 0.0
      %4117 = vmatprep.subr.mxu0 0.0
      %4118 = vmatpush1.xpose.msra.mxu0 0.0
      %4119 = vmatprep.subr.mxu0 0.0
      %4120 = vmatpush1.xpose.msra.mxu0 0.0
      %4121 = vmatprep.subr.mxu0 0.0
      %4122 = vmatpush1.xpose.msra.mxu0 0.0
      %4123 = vmatprep.subr.mxu0 0.0
      %4124 = vmatpush1.xpose.msra.mxu0 0.0
      %4125 = vmatprep.subr.mxu0 0.0
      %4126 = vmatpush1.xpose.msra.mxu0 0.0
      %4127 = vmatprep.subr.mxu0 0.0
      %4128 = vmatpush1.xpose.msra.mxu0 0.0
      %4129 = vmatprep.subr.mxu0 0.0
      %4130 = vmatpush1.xpose.msra.mxu0 0.0
      %4131 = vmatprep.subr.mxu0 0.0
      %4132 = vmatpush1.xpose.msra.mxu0 0.0
      %4133 = vmatprep.subr.mxu0 0.0
      %4134 = vmatpush1.xpose.msra.mxu0 0.0
      %4135 = vmatprep.subr.mxu0 0.0
      %4136 = vmatpush1.xpose.msra.mxu0 0.0
      %4137 = vmatprep.subr.mxu0 0.0
      %4138 = vmatpush1.xpose.msra.mxu0 0.0
      %4139 = vmatprep.subr.mxu0 0.0
      %4140 = vmatpush1.xpose.msra.mxu0 0.0
      %4141 = vmatprep.subr.mxu0 0.0
      %4142 = vmatpush1.xpose.msra.mxu0 0.0
      %4143 = vmatprep.subr.mxu0 0.0
      %4144 = vmatpush1.xpose.msra.mxu0 0.0
      %4145 = vmatprep.mubr.f32.mxu0 0.0
      %4146 = vmatmul.mubr.f32.gmra.mrb[0].mxu0 %v4069
      %v4147 = vpop.f32.mrb[0].mxu0
      %v4148 = vadd.f32 0.0, %v4147
      %v4149 = vpop.f32.mrb[0].mxu0
      %4150 = vmatprep.mubr.f32.mxu0 0.0
      %4151 = vmatmul.mubr.f32.gmra.mrb[0].mxu0 %v4071
      %v4152 = vpop.f32.mrb[0].mxu0
      %v4153 = vadd.f32 0.0, %v4152
      %v4154 = vpop.f32.mrb[0].mxu0
      %4155 = vmatprep.mubr.f32.mxu0 0.0
      %4156 = vmatmul.mubr.f32.gmra.mrb[0].mxu0 %v4073
      %v4157 = vpop.f32.mrb[0].mxu0
      %v4158 = vadd.f32 0.0, %v4157
      %v4159 = vpop.f32.mrb[0].mxu0
      %4160 = vdwg.mxu0
      %4161 = vrot.lane.b32.xlu0 %v3296, 112
      %v4162 = vpop.permute.xlu0 %4161
      %4163 = vrot.lane.b32.xlu0 %v3301, 112
      %v4164 = vpop.permute.xlu0 %4163
      %4165 = vrot.lane.b32.xlu0 %v3306, 112
      %v4166 = vpop.permute.xlu0 %4165
      %4167 = vrot.lane.b32.xlu0 %v3296, 80
      %v4168 = vpop.permute.xlu0 %4167
      %4169 = vrot.lane.b32.xlu0 %v3301, 80
      %v4170 = vpop.permute.xlu0 %4169
      %4171 = vrot.lane.b32.xlu0 %v3306, 80
      %v4172 = vpop.permute.xlu0 %4171
      %v4173 = vsel %vm832, %v4162, 0
      %v4175 = vsel %vm832, %v4164, 0
      %v4177 = vsel %vm832, %v4166, 0
      %v4179 = vsel %vm832, %v4168, 0
      %v4181 = vsel %vm832, %v4170, 0
      %v4183 = vsel %vm832, %v4172, 0
      %4185 = vmatprep.subr.mxu0 0.0
      %4186 = vmatpush1.xpose.msra.mxu0 %v4179
      %4187 = vmatprep.subr.mxu0 0.0
      %4188 = vmatpush1.xpose.msra.mxu0 %v4181
      %4189 = vmatprep.subr.mxu0 0.0
      %4190 = vmatpush1.xpose.msra.mxu0 %v4183
      %4191 = vmatprep.subr.mxu0 0.0
      %4192 = vmatpush1.xpose.msra.mxu0 0.0
      %4193 = vmatprep.subr.mxu0 0.0
      %4194 = vmatpush1.xpose.msra.mxu0 0.0
      %4195 = vmatprep.subr.mxu0 0.0
      %4196 = vmatpush1.xpose.msra.mxu0 0.0
      %4197 = vmatprep.subr.mxu0 0.0
      %4198 = vmatpush1.xpose.msra.mxu0 0.0
      %4199 = vmatprep.subr.mxu0 0.0
      %4200 = vmatpush1.xpose.msra.mxu0 0.0
      %4201 = vmatprep.subr.mxu0 0.0
      %4202 = vmatpush1.xpose.msra.mxu0 0.0
      %4203 = vmatprep.subr.mxu0 0.0
      %4204 = vmatpush1.xpose.msra.mxu0 0.0
      %4205 = vmatprep.subr.mxu0 0.0
      %4206 = vmatpush1.xpose.msra.mxu0 0.0
      %4207 = vmatprep.subr.mxu0 0.0
      %4208 = vmatpush1.xpose.msra.mxu0 0.0
      %4209 = vmatprep.subr.mxu0 0.0
      %4210 = vmatpush1.xpose.msra.mxu0 0.0
      %4211 = vmatprep.subr.mxu0 0.0
      %4212 = vmatpush1.xpose.msra.mxu0 0.0
      %4213 = vmatprep.subr.mxu0 0.0
      %4214 = vmatpush1.xpose.msra.mxu0 0.0
      %4215 = vmatprep.subr.mxu0 0.0
      %4216 = vmatpush1.xpose.msra.mxu0 0.0
      %4217 = vmatprep.subr.mxu0 0.0
      %4218 = vmatpush1.xpose.msra.mxu0 0.0
      %4219 = vmatprep.subr.mxu0 0.0
      %4220 = vmatpush1.xpose.msra.mxu0 0.0
      %4221 = vmatprep.subr.mxu0 0.0
      %4222 = vmatpush1.xpose.msra.mxu0 0.0
      %4223 = vmatprep.subr.mxu0 0.0
      %4224 = vmatpush1.xpose.msra.mxu0 0.0
      %4225 = vmatprep.subr.mxu0 0.0
      %4226 = vmatpush1.xpose.msra.mxu0 0.0
      %4227 = vmatprep.subr.mxu0 0.0
      %4228 = vmatpush1.xpose.msra.mxu0 0.0
      %4229 = vmatprep.subr.mxu0 0.0
      %4230 = vmatpush1.xpose.msra.mxu0 0.0
      %4231 = vmatprep.subr.mxu0 0.0
      %4232 = vmatpush1.xpose.msra.mxu0 0.0
      %4233 = vmatprep.subr.mxu0 0.0
      %4234 = vmatpush1.xpose.msra.mxu0 0.0
      %4235 = vmatprep.subr.mxu0 0.0
      %4236 = vmatpush1.xpose.msra.mxu0 0.0
      %4237 = vmatprep.subr.mxu0 0.0
      %4238 = vmatpush1.xpose.msra.mxu0 0.0
      %4239 = vmatprep.subr.mxu0 0.0
      %4240 = vmatpush1.xpose.msra.mxu0 0.0
      %4241 = vmatprep.subr.mxu0 0.0
      %4242 = vmatpush1.xpose.msra.mxu0 0.0
      %4243 = vmatprep.subr.mxu0 0.0
      %4244 = vmatpush1.xpose.msra.mxu0 0.0
      %4245 = vmatprep.subr.mxu0 0.0
      %4246 = vmatpush1.xpose.msra.mxu0 0.0
      %4247 = vmatprep.subr.mxu0 0.0
      %4248 = vmatpush1.xpose.msra.mxu0 0.0
      %4249 = vmatprep.mubr.f32.mxu0 0.0
      %4250 = vmatmul.mubr.f32.gmra.mrb[0].mxu0 %v4173
      %v4251 = vpop.f32.mrb[0].mxu0
      %v4252 = vadd.f32 0.0, %v4251
      %v4253 = vpop.f32.mrb[0].mxu0
      %4254 = vmatprep.mubr.f32.mxu0 0.0
      %4255 = vmatmul.mubr.f32.gmra.mrb[0].mxu0 %v4175
      %v4256 = vpop.f32.mrb[0].mxu0
      %v4257 = vadd.f32 0.0, %v4256
      %v4258 = vpop.f32.mrb[0].mxu0
      %4259 = vmatprep.mubr.f32.mxu0 0.0
      %4260 = vmatmul.mubr.f32.gmra.mrb[0].mxu0 %v4177
      %v4261 = vpop.f32.mrb[0].mxu0
      %v4262 = vadd.f32 0.0, %v4261
      %v4263 = vpop.f32.mrb[0].mxu0
      %4264 = vdwg.mxu0
      %4265 = vrot.lane.b32.xlu0 %v3311, 112
      %v4266 = vpop.permute.xlu0 %4265
      %4267 = vrot.lane.b32.xlu0 %v3316, 112
      %v4268 = vpop.permute.xlu0 %4267
      %4269 = vrot.lane.b32.xlu0 %v3321, 112
      %v4270 = vpop.permute.xlu0 %4269
      %4271 = vrot.lane.b32.xlu0 %v3311, 80
      %v4272 = vpop.permute.xlu0 %4271
      %4273 = vrot.lane.b32.xlu0 %v3316, 80
      %v4274 = vpop.permute.xlu0 %4273
      %4275 = vrot.lane.b32.xlu0 %v3321, 80
      %v4276 = vpop.permute.xlu0 %4275
      %v4277 = vsel %vm832, %v4266, 0
      %v4279 = vsel %vm832, %v4268, 0
      %v4281 = vsel %vm832, %v4270, 0
      %v4283 = vsel %vm832, %v4272, 0
      %v4285 = vsel %vm832, %v4274, 0
      %v4287 = vsel %vm832, %v4276, 0
      %4289 = vmatprep.subr.mxu0 0.0
      %4290 = vmatpush1.xpose.msra.mxu0 %v4283
      %4291 = vmatprep.subr.mxu0 0.0
      %4292 = vmatpush1.xpose.msra.mxu0 %v4285
      %4293 = vmatprep.subr.mxu0 0.0
      %4294 = vmatpush1.xpose.msra.mxu0 %v4287
      %4295 = vmatprep.subr.mxu0 0.0
      %4296 = vmatpush1.xpose.msra.mxu0 0.0
      %4297 = vmatprep.subr.mxu0 0.0
      %4298 = vmatpush1.xpose.msra.mxu0 0.0
      %4299 = vmatprep.subr.mxu0 0.0
      %4300 = vmatpush1.xpose.msra.mxu0 0.0
      %4301 = vmatprep.subr.mxu0 0.0
      %4302 = vmatpush1.xpose.msra.mxu0 0.0
      %4303 = vmatprep.subr.mxu0 0.0
      %4304 = vmatpush1.xpose.msra.mxu0 0.0
      %4305 = vmatprep.subr.mxu0 0.0
      %4306 = vmatpush1.xpose.msra.mxu0 0.0
      %4307 = vmatprep.subr.mxu0 0.0
      %4308 = vmatpush1.xpose.msra.mxu0 0.0
      %4309 = vmatprep.subr.mxu0 0.0
      %4310 = vmatpush1.xpose.msra.mxu0 0.0
      %4311 = vmatprep.subr.mxu0 0.0
      %4312 = vmatpush1.xpose.msra.mxu0 0.0
      %4313 = vmatprep.subr.mxu0 0.0
      %4314 = vmatpush1.xpose.msra.mxu0 0.0
      %4315 = vmatprep.subr.mxu0 0.0
      %4316 = vmatpush1.xpose.msra.mxu0 0.0
      %4317 = vmatprep.subr.mxu0 0.0
      %4318 = vmatpush1.xpose.msra.mxu0 0.0
      %4319 = vmatprep.subr.mxu0 0.0
      %4320 = vmatpush1.xpose.msra.mxu0 0.0
      %4321 = vmatprep.subr.mxu0 0.0
      %4322 = vmatpush1.xpose.msra.mxu0 0.0
      %4323 = vmatprep.subr.mxu0 0.0
      %4324 = vmatpush1.xpose.msra.mxu0 0.0
      %4325 = vmatprep.subr.mxu0 0.0
      %4326 = vmatpush1.xpose.msra.mxu0 0.0
      %4327 = vmatprep.subr.mxu0 0.0
      %4328 = vmatpush1.xpose.msra.mxu0 0.0
      %4329 = vmatprep.subr.mxu0 0.0
      %4330 = vmatpush1.xpose.msra.mxu0 0.0
      %4331 = vmatprep.subr.mxu0 0.0
      %4332 = vmatpush1.xpose.msra.mxu0 0.0
      %4333 = vmatprep.subr.mxu0 0.0
      %4334 = vmatpush1.xpose.msra.mxu0 0.0
      %4335 = vmatprep.subr.mxu0 0.0
      %4336 = vmatpush1.xpose.msra.mxu0 0.0
      %4337 = vmatprep.subr.mxu0 0.0
      %4338 = vmatpush1.xpose.msra.mxu0 0.0
      %4339 = vmatprep.subr.mxu0 0.0
      %4340 = vmatpush1.xpose.msra.mxu0 0.0
      %4341 = vmatprep.subr.mxu0 0.0
      %4342 = vmatpush1.xpose.msra.mxu0 0.0
      %4343 = vmatprep.subr.mxu0 0.0
      %4344 = vmatpush1.xpose.msra.mxu0 0.0
      %4345 = vmatprep.subr.mxu0 0.0
      %4346 = vmatpush1.xpose.msra.mxu0 0.0
      %4347 = vmatprep.subr.mxu0 0.0
      %4348 = vmatpush1.xpose.msra.mxu0 0.0
      %4349 = vmatprep.subr.mxu0 0.0
      %4350 = vmatpush1.xpose.msra.mxu0 0.0
      %4351 = vmatprep.subr.mxu0 0.0
      %4352 = vmatpush1.xpose.msra.mxu0 0.0
      %4353 = vmatprep.mubr.f32.mxu0 0.0
      %4354 = vmatmul.mubr.f32.gmra.mrb[0].mxu0 %v4277
      %v4355 = vpop.f32.mrb[0].mxu0
      %v4356 = vadd.f32 0.0, %v4355
      %v4357 = vpop.f32.mrb[0].mxu0
      %4358 = vmatprep.mubr.f32.mxu0 0.0
      %4359 = vmatmul.mubr.f32.gmra.mrb[0].mxu0 %v4279
      %v4360 = vpop.f32.mrb[0].mxu0
      %v4361 = vadd.f32 0.0, %v4360
      %v4362 = vpop.f32.mrb[0].mxu0
      %4363 = vmatprep.mubr.f32.mxu0 0.0
      %4364 = vmatmul.mubr.f32.gmra.mrb[0].mxu0 %v4281
      %v4365 = vpop.f32.mrb[0].mxu0
      %v4366 = vadd.f32 0.0, %v4365
      %v4367 = vpop.f32.mrb[0].mxu0
      %4368 = vdwg.mxu0
      %v4369 = vmul.f32 %v4148, 0.25
      %v4370 = vmul.f32 %v4153, 0.25
      %v4371 = vmul.f32 %v4158, 0.25
      %v4372 = vmul.f32 %v4252, 0.25
      %v4373 = vmul.f32 %v4257, 0.25
      %v4374 = vmul.f32 %v4262, 0.25
      %v4375 = vmul.f32 %v4356, 0.25
      %v4376 = vmul.f32 %v4361, 0.25
      %v4377 = vmul.f32 %v4366, 0.25
      %v4378 = vsel %vm524, %v4369, -1e+30
      %v4379 = vsel %vm524, %v4370, -1e+30
      %v4380 = vsel %vm524, %v4371, -1e+30
      %v4381 = vsel %vm524, %v4372, -1e+30
      %v4382 = vsel %vm524, %v4373, -1e+30
      %v4383 = vsel %vm524, %v4374, -1e+30
      %v4384 = vsel %vm524, %v4375, -1e+30
      %v4385 = vsel %vm524, %v4376, -1e+30
      %v4386 = vsel %vm524, %v4377, -1e+30
      %v4387 = vsel %vm1145, %v4378, -inf
      %4388 = vmax.xlane.f32.xlu0 %v4387
      %v4389 = vpop.xlane.xlu0 %4388
      %v4390 = vsel %vm1145, %v4379, -inf
      %4391 = vmax.xlane.f32.xlu0 %v4390
      %v4392 = vpop.xlane.xlu0 %4391
      %v4393 = vsel %vm1145, %v4380, -inf
      %4394 = vmax.xlane.f32.xlu0 %v4393
      %v4395 = vpop.xlane.xlu0 %4394
      %v4396 = vsel %vm1145, %v4381, -inf
      %4397 = vmax.xlane.f32.xlu0 %v4396
      %v4398 = vpop.xlane.xlu0 %4397
      %v4399 = vsel %vm1145, %v4382, -inf
      %4400 = vmax.xlane.f32.xlu0 %v4399
      %v4401 = vpop.xlane.xlu0 %4400
      %v4402 = vsel %vm1145, %v4383, -inf
      %4403 = vmax.xlane.f32.xlu0 %v4402
      %v4404 = vpop.xlane.xlu0 %4403
      %v4405 = vsel %vm1145, %v4384, -inf
      %4406 = vmax.xlane.f32.xlu0 %v4405
      %v4407 = vpop.xlane.xlu0 %4406
      %v4408 = vsel %vm1145, %v4385, -inf
      %4409 = vmax.xlane.f32.xlu0 %v4408
      %v4410 = vpop.xlane.xlu0 %4409
      %v4411 = vsel %vm1145, %v4386, -inf
      %4412 = vmax.xlane.f32.xlu0 %v4411
      %v4413 = vpop.xlane.xlu0 %4412
      %v4414 = vsub.f32 %v4378, %v4389
      %v4415 = vsub.f32 %v4379, %v4392
      %v4416 = vsub.f32 %v4380, %v4395
      %v4417 = vsub.f32 %v4381, %v4398
      %v4418 = vsub.f32 %v4382, %v4401
      %v4419 = vsub.f32 %v4383, %v4404
      %v4420 = vsub.f32 %v4384, %v4407
      %v4421 = vsub.f32 %v4385, %v4410
      %v4422 = vsub.f32 %v4386, %v4413
      %v4423 = vmul.f32 %v4414, 1.442695
      %v4424 = vpow.pop %v4423
      %v4425 = vmul.f32 %v4415, 1.442695
      %v4426 = vpow.pop %v4425
      %v4427 = vmul.f32 %v4416, 1.442695
      %v4428 = vpow.pop %v4427
      %v4429 = vmul.f32 %v4417, 1.442695
      %v4430 = vpow.pop %v4429
      %v4431 = vmul.f32 %v4418, 1.442695
      %v4432 = vpow.pop %v4431
      %v4433 = vmul.f32 %v4419, 1.442695
      %v4434 = vpow.pop %v4433
      %v4435 = vmul.f32 %v4420, 1.442695
      %v4436 = vpow.pop %v4435
      %v4437 = vmul.f32 %v4421, 1.442695
      %v4438 = vpow.pop %v4437
      %v4439 = vmul.f32 %v4422, 1.442695
      %v4440 = vpow.pop %v4439
      %v4441 = vsel %vm1145, %v4424, 0.0
      %4442 = vadd.xlane.f32.xlu0 %v4441
      %v4443 = vpop.xlane.xlu0 %4442
      %v4444 = vsel %vm1145, %v4426, 0.0
      %4445 = vadd.xlane.f32.xlu0 %v4444
      %v4446 = vpop.xlane.xlu0 %4445
      %v4447 = vsel %vm1145, %v4428, 0.0
      %4448 = vadd.xlane.f32.xlu0 %v4447
      %v4449 = vpop.xlane.xlu0 %4448
      %v4450 = vsel %vm1145, %v4430, 0.0
      %4451 = vadd.xlane.f32.xlu0 %v4450
      %v4452 = vpop.xlane.xlu0 %4451
      %v4453 = vsel %vm1145, %v4432, 0.0
      %4454 = vadd.xlane.f32.xlu0 %v4453
      %v4455 = vpop.xlane.xlu0 %4454
      %v4456 = vsel %vm1145, %v4434, 0.0
      %4457 = vadd.xlane.f32.xlu0 %v4456
      %v4458 = vpop.xlane.xlu0 %4457
      %v4459 = vsel %vm1145, %v4436, 0.0
      %4460 = vadd.xlane.f32.xlu0 %v4459
      %v4461 = vpop.xlane.xlu0 %4460
      %v4462 = vsel %vm1145, %v4438, 0.0
      %4463 = vadd.xlane.f32.xlu0 %v4462
      %v4464 = vpop.xlane.xlu0 %4463
      %v4465 = vsel %vm1145, %v4440, 0.0
      %4466 = vadd.xlane.f32.xlu0 %v4465
      %v4467 = vpop.xlane.xlu0 %4466
      %v4468 = vrcp.pop %v4443
      %v4469 = vmul.f32 1.0, %v4468
      %v4470 = vrcp.pop %v4446
      %v4471 = vmul.f32 1.0, %v4470
      %v4472 = vrcp.pop %v4449
      %v4473 = vmul.f32 1.0, %v4472
      %v4474 = vrcp.pop %v4452
      %v4475 = vmul.f32 1.0, %v4474
      %v4476 = vrcp.pop %v4455
      %v4477 = vmul.f32 1.0, %v4476
      %v4478 = vrcp.pop %v4458
      %v4479 = vmul.f32 1.0, %v4478
      %v4480 = vrcp.pop %v4461
      %v4481 = vmul.f32 1.0, %v4480
      %v4482 = vrcp.pop %v4464
      %v4483 = vmul.f32 1.0, %v4482
      %v4484 = vrcp.pop %v4467
      %v4485 = vmul.f32 1.0, %v4484
      %v4486 = vmul.f32 %v4424, %v4469
      %v4487 = vmul.f32 %v4426, %v4471
      %v4488 = vmul.f32 %v4428, %v4473
      %v4489 = vmul.f32 %v4430, %v4475
      %v4490 = vmul.f32 %v4432, %v4477
      %v4491 = vmul.f32 %v4434, %v4479
      %v4492 = vmul.f32 %v4436, %v4481
      %v4493 = vmul.f32 %v4438, %v4483
      %v4494 = vmul.f32 %v4440, %v4485
      %s4495 = scalar_lea.vmem %s351, 72
      %4496 = vst.msk [vmem:[%s4495] sm:$0xff] %vm1254, %v4486
      %4497 = vst.msk [vmem:[%s4495 + $0x8] sm:$0xff] %vm1254, %v4487
      %4498 = vst.msk [vmem:[%s4495 + $0x10] sm:$0x1] %vm1257, %v4488
      %4499 = vst.msk [vmem:[%s4495 + $0x60] sm:$0xff] %vm1254, %v4489
      %4500 = vst.msk [vmem:[%s4495 + $0x68] sm:$0xff] %vm1254, %v4490
      %4501 = vst.msk [vmem:[%s4495 + $0x70] sm:$0x1] %vm1257, %v4491
      %4502 = vst.msk [vmem:[%s4495 + $0xc0] sm:$0xff] %vm1254, %v4492
      %4503 = vst.msk [vmem:[%s4495 + $0xc8] sm:$0xff] %vm1254, %v4493
      %4504 = vst.msk [vmem:[%s4495 + $0xd0] sm:$0x1] %vm1257, %v4494
      %4505 = vrot.lane.b32.xlu0 %v3281, 48
      %v4506 = vpop.permute.xlu0 %4505
      %4507 = vrot.lane.b32.xlu0 %v3286, 48
      %v4508 = vpop.permute.xlu0 %4507
      %4509 = vrot.lane.b32.xlu0 %v3291, 48
      %v4510 = vpop.permute.xlu0 %4509
      %v4515 = vsel %vm1145, %v4486, 0
      %v4518 = vsel %vm1145, %v4487, 0
      %v4521 = vsel %vm1145, %v4488, 0
      %4523 = vmatprep.subr.mxu0 0.0
      %4524 = vmatpush1.msra.mxu0 %v4506
      %4525 = vmatprep.subr.mxu0 0.0
      %4526 = vmatpush1.msra.mxu0 %v4508
      %4527 = vmatprep.subr.mxu0 0.0
      %4528 = vmatpush1.msra.mxu0 %v4510
      %4529 = vmatprep.subr.mxu0 0.0
      %4530 = vmatpush1.msra.mxu0 0.0
      %4531 = vmatprep.subr.mxu0 0.0
      %4532 = vmatpush1.msra.mxu0 0.0
      %4533 = vmatprep.subr.mxu0 0.0
      %4534 = vmatpush1.msra.mxu0 0.0
      %4535 = vmatprep.subr.mxu0 0.0
      %4536 = vmatpush1.msra.mxu0 0.0
      %4537 = vmatprep.subr.mxu0 0.0
      %4538 = vmatpush1.msra.mxu0 0.0
      %4539 = vmatprep.subr.mxu0 0.0
      %4540 = vmatpush1.msra.mxu0 0.0
      %4541 = vmatprep.subr.mxu0 0.0
      %4542 = vmatpush1.msra.mxu0 0.0
      %4543 = vmatprep.subr.mxu0 0.0
      %4544 = vmatpush1.msra.mxu0 0.0
      %4545 = vmatprep.subr.mxu0 0.0
      %4546 = vmatpush1.msra.mxu0 0.0
      %4547 = vmatprep.subr.mxu0 0.0
      %4548 = vmatpush1.msra.mxu0 0.0
      %4549 = vmatprep.subr.mxu0 0.0
      %4550 = vmatpush1.msra.mxu0 0.0
      %4551 = vmatprep.subr.mxu0 0.0
      %4552 = vmatpush1.msra.mxu0 0.0
      %4553 = vmatprep.subr.mxu0 0.0
      %4554 = vmatpush1.msra.mxu0 0.0
      %4555 = vmatprep.subr.mxu0 0.0
      %4556 = vmatpush1.msra.mxu0 0.0
      %4557 = vmatprep.subr.mxu0 0.0
      %4558 = vmatpush1.msra.mxu0 0.0
      %4559 = vmatprep.subr.mxu0 0.0
      %4560 = vmatpush1.msra.mxu0 0.0
      %4561 = vmatprep.subr.mxu0 0.0
      %4562 = vmatpush1.msra.mxu0 0.0
      %4563 = vmatprep.subr.mxu0 0.0
      %4564 = vmatpush1.msra.mxu0 0.0
      %4565 = vmatprep.subr.mxu0 0.0
      %4566 = vmatpush1.msra.mxu0 0.0
      %4567 = vmatprep.subr.mxu0 0.0
      %4568 = vmatpush1.msra.mxu0 0.0
      %4569 = vmatprep.subr.mxu0 0.0
      %4570 = vmatpush1.msra.mxu0 0.0
      %4571 = vmatprep.subr.mxu0 0.0
      %4572 = vmatpush1.msra.mxu0 0.0
      %4573 = vmatprep.subr.mxu0 0.0
      %4574 = vmatpush1.msra.mxu0 0.0
      %4575 = vmatprep.subr.mxu0 0.0
      %4576 = vmatpush1.msra.mxu0 0.0
      %4577 = vmatprep.subr.mxu0 0.0
      %4578 = vmatpush1.msra.mxu0 0.0
      %4579 = vmatprep.subr.mxu0 0.0
      %4580 = vmatpush1.msra.mxu0 0.0
      %4581 = vmatprep.subr.mxu0 0.0
      %4582 = vmatpush1.msra.mxu0 0.0
      %4583 = vmatprep.subr.mxu0 0.0
      %4584 = vmatpush1.msra.mxu0 0.0
      %4585 = vmatprep.subr.mxu0 0.0
      %4586 = vmatpush1.msra.mxu0 0.0
      %4587 = vmatprep.mubr.f32.mxu0 0.0
      %4588 = vmatmul.mubr.f32.gmra.mrb[0].mxu0 %v4515
      %v4589 = vpop.f32.mrb[0].mxu0
      %v4590 = vadd.f32 0.0, %v4589
      %v4591 = vpop.f32.mrb[0].mxu0
      %4592 = vmatprep.mubr.f32.mxu0 0.0
      %4593 = vmatmul.mubr.f32.gmra.mrb[0].mxu0 %v4518
      %v4594 = vpop.f32.mrb[0].mxu0
      %v4595 = vadd.f32 0.0, %v4594
      %v4596 = vpop.f32.mrb[0].mxu0
      %4597 = vmatprep.mubr.f32.mxu0 0.0
      %4598 = vmatmul.mubr.f32.gmra.mrb[0].mxu0 %v4521
      %v4599 = vpop.f32.mrb[0].mxu0
      %v4600 = vadd.f32 0.0, %v4599
      %v4601 = vpop.f32.mrb[0].mxu0
      %4602 = vdwg.mxu0
      %4603 = vrot.lane.b32.xlu0 %v3296, 48
      %v4604 = vpop.permute.xlu0 %4603
      %4605 = vrot.lane.b32.xlu0 %v3301, 48
      %v4606 = vpop.permute.xlu0 %4605
      %4607 = vrot.lane.b32.xlu0 %v3306, 48
      %v4608 = vpop.permute.xlu0 %4607
      %v4613 = vsel %vm1145, %v4489, 0
      %v4616 = vsel %vm1145, %v4490, 0
      %v4619 = vsel %vm1145, %v4491, 0
      %4621 = vmatprep.subr.mxu0 0.0
      %4622 = vmatpush1.msra.mxu0 %v4604
      %4623 = vmatprep.subr.mxu0 0.0
      %4624 = vmatpush1.msra.mxu0 %v4606
      %4625 = vmatprep.subr.mxu0 0.0
      %4626 = vmatpush1.msra.mxu0 %v4608
      %4627 = vmatprep.subr.mxu0 0.0
      %4628 = vmatpush1.msra.mxu0 0.0
      %4629 = vmatprep.subr.mxu0 0.0
      %4630 = vmatpush1.msra.mxu0 0.0
      %4631 = vmatprep.subr.mxu0 0.0
      %4632 = vmatpush1.msra.mxu0 0.0
      %4633 = vmatprep.subr.mxu0 0.0
      %4634 = vmatpush1.msra.mxu0 0.0
      %4635 = vmatprep.subr.mxu0 0.0
      %4636 = vmatpush1.msra.mxu0 0.0
      %4637 = vmatprep.subr.mxu0 0.0
      %4638 = vmatpush1.msra.mxu0 0.0
      %4639 = vmatprep.subr.mxu0 0.0
      %4640 = vmatpush1.msra.mxu0 0.0
      %4641 = vmatprep.subr.mxu0 0.0
      %4642 = vmatpush1.msra.mxu0 0.0
      %4643 = vmatprep.subr.mxu0 0.0
      %4644 = vmatpush1.msra.mxu0 0.0
      %4645 = vmatprep.subr.mxu0 0.0
      %4646 = vmatpush1.msra.mxu0 0.0
      %4647 = vmatprep.subr.mxu0 0.0
      %4648 = vmatpush1.msra.mxu0 0.0
      %4649 = vmatprep.subr.mxu0 0.0
      %4650 = vmatpush1.msra.mxu0 0.0
      %4651 = vmatprep.subr.mxu0 0.0
      %4652 = vmatpush1.msra.mxu0 0.0
      %4653 = vmatprep.subr.mxu0 0.0
      %4654 = vmatpush1.msra.mxu0 0.0
      %4655 = vmatprep.subr.mxu0 0.0
      %4656 = vmatpush1.msra.mxu0 0.0
      %4657 = vmatprep.subr.mxu0 0.0
      %4658 = vmatpush1.msra.mxu0 0.0
      %4659 = vmatprep.subr.mxu0 0.0
      %4660 = vmatpush1.msra.mxu0 0.0
      %4661 = vmatprep.subr.mxu0 0.0
      %4662 = vmatpush1.msra.mxu0 0.0
      %4663 = vmatprep.subr.mxu0 0.0
      %4664 = vmatpush1.msra.mxu0 0.0
      %4665 = vmatprep.subr.mxu0 0.0
      %4666 = vmatpush1.msra.mxu0 0.0
      %4667 = vmatprep.subr.mxu0 0.0
      %4668 = vmatpush1.msra.mxu0 0.0
      %4669 = vmatprep.subr.mxu0 0.0
      %4670 = vmatpush1.msra.mxu0 0.0
      %4671 = vmatprep.subr.mxu0 0.0
      %4672 = vmatpush1.msra.mxu0 0.0
      %4673 = vmatprep.subr.mxu0 0.0
      %4674 = vmatpush1.msra.mxu0 0.0
      %4675 = vmatprep.subr.mxu0 0.0
      %4676 = vmatpush1.msra.mxu0 0.0
      %4677 = vmatprep.subr.mxu0 0.0
      %4678 = vmatpush1.msra.mxu0 0.0
      %4679 = vmatprep.subr.mxu0 0.0
      %4680 = vmatpush1.msra.mxu0 0.0
      %4681 = vmatprep.subr.mxu0 0.0
      %4682 = vmatpush1.msra.mxu0 0.0
      %4683 = vmatprep.subr.mxu0 0.0
      %4684 = vmatpush1.msra.mxu0 0.0
      %4685 = vmatprep.mubr.f32.mxu0 0.0
      %4686 = vmatmul.mubr.f32.gmra.mrb[0].mxu0 %v4613
      %v4687 = vpop.f32.mrb[0].mxu0
      %v4688 = vadd.f32 0.0, %v4687
      %v4689 = vpop.f32.mrb[0].mxu0
      %4690 = vmatprep.mubr.f32.mxu0 0.0
      %4691 = vmatmul.mubr.f32.gmra.mrb[0].mxu0 %v4616
      %v4692 = vpop.f32.mrb[0].mxu0
      %v4693 = vadd.f32 0.0, %v4692
      %v4694 = vpop.f32.mrb[0].mxu0
      %4695 = vmatprep.mubr.f32.mxu0 0.0
      %4696 = vmatmul.mubr.f32.gmra.mrb[0].mxu0 %v4619
      %v4697 = vpop.f32.mrb[0].mxu0
      %v4698 = vadd.f32 0.0, %v4697
      %v4699 = vpop.f32.mrb[0].mxu0
      %4700 = vdwg.mxu0
      %4701 = vrot.lane.b32.xlu0 %v3311, 48
      %v4702 = vpop.permute.xlu0 %4701
      %4703 = vrot.lane.b32.xlu0 %v3316, 48
      %v4704 = vpop.permute.xlu0 %4703
      %4705 = vrot.lane.b32.xlu0 %v3321, 48
      %v4706 = vpop.permute.xlu0 %4705
      %v4711 = vsel %vm1145, %v4492, 0
      %v4714 = vsel %vm1145, %v4493, 0
      %v4717 = vsel %vm1145, %v4494, 0
      %4719 = vmatprep.subr.mxu0 0.0
      %4720 = vmatpush1.msra.mxu0 %v4702
      %4721 = vmatprep.subr.mxu0 0.0
      %4722 = vmatpush1.msra.mxu0 %v4704
      %4723 = vmatprep.subr.mxu0 0.0
      %4724 = vmatpush1.msra.mxu0 %v4706
      %4725 = vmatprep.subr.mxu0 0.0
      %4726 = vmatpush1.msra.mxu0 0.0
      %4727 = vmatprep.subr.mxu0 0.0
      %4728 = vmatpush1.msra.mxu0 0.0
      %4729 = vmatprep.subr.mxu0 0.0
      %4730 = vmatpush1.msra.mxu0 0.0
      %4731 = vmatprep.subr.mxu0 0.0
      %4732 = vmatpush1.msra.mxu0 0.0
      %4733 = vmatprep.subr.mxu0 0.0
      %4734 = vmatpush1.msra.mxu0 0.0
      %4735 = vmatprep.subr.mxu0 0.0
      %4736 = vmatpush1.msra.mxu0 0.0
      %4737 = vmatprep.subr.mxu0 0.0
      %4738 = vmatpush1.msra.mxu0 0.0
      %4739 = vmatprep.subr.mxu0 0.0
      %4740 = vmatpush1.msra.mxu0 0.0
      %4741 = vmatprep.subr.mxu0 0.0
      %4742 = vmatpush1.msra.mxu0 0.0
      %4743 = vmatprep.subr.mxu0 0.0
      %4744 = vmatpush1.msra.mxu0 0.0
      %4745 = vmatprep.subr.mxu0 0.0
      %4746 = vmatpush1.msra.mxu0 0.0
      %4747 = vmatprep.subr.mxu0 0.0
      %4748 = vmatpush1.msra.mxu0 0.0
      %4749 = vmatprep.subr.mxu0 0.0
      %4750 = vmatpush1.msra.mxu0 0.0
      %4751 = vmatprep.subr.mxu0 0.0
      %4752 = vmatpush1.msra.mxu0 0.0
      %4753 = vmatprep.subr.mxu0 0.0
      %4754 = vmatpush1.msra.mxu0 0.0
      %4755 = vmatprep.subr.mxu0 0.0
      %4756 = vmatpush1.msra.mxu0 0.0
      %4757 = vmatprep.subr.mxu0 0.0
      %4758 = vmatpush1.msra.mxu0 0.0
      %4759 = vmatprep.subr.mxu0 0.0
      %4760 = vmatpush1.msra.mxu0 0.0
      %4761 = vmatprep.subr.mxu0 0.0
      %4762 = vmatpush1.msra.mxu0 0.0
      %4763 = vmatprep.subr.mxu0 0.0
      %4764 = vmatpush1.msra.mxu0 0.0
      %4765 = vmatprep.subr.mxu0 0.0
      %4766 = vmatpush1.msra.mxu0 0.0
      %4767 = vmatprep.subr.mxu0 0.0
      %4768 = vmatpush1.msra.mxu0 0.0
      %4769 = vmatprep.subr.mxu0 0.0
      %4770 = vmatpush1.msra.mxu0 0.0
      %4771 = vmatprep.subr.mxu0 0.0
      %4772 = vmatpush1.msra.mxu0 0.0
      %4773 = vmatprep.subr.mxu0 0.0
      %4774 = vmatpush1.msra.mxu0 0.0
      %4775 = vmatprep.subr.mxu0 0.0
      %4776 = vmatpush1.msra.mxu0 0.0
      %4777 = vmatprep.subr.mxu0 0.0
      %4778 = vmatpush1.msra.mxu0 0.0
      %4779 = vmatprep.subr.mxu0 0.0
      %4780 = vmatpush1.msra.mxu0 0.0
      %4781 = vmatprep.subr.mxu0 0.0
      %4782 = vmatpush1.msra.mxu0 0.0
      %4783 = vmatprep.mubr.f32.mxu0 0.0
      %4784 = vmatmul.mubr.f32.gmra.mrb[0].mxu0 %v4711
      %v4785 = vpop.f32.mrb[0].mxu0
      %v4786 = vadd.f32 0.0, %v4785
      %v4787 = vpop.f32.mrb[0].mxu0
      %4788 = vmatprep.mubr.f32.mxu0 0.0
      %4789 = vmatmul.mubr.f32.gmra.mrb[0].mxu0 %v4714
      %v4790 = vpop.f32.mrb[0].mxu0
      %v4791 = vadd.f32 0.0, %v4790
      %v4792 = vpop.f32.mrb[0].mxu0
      %4793 = vmatprep.mubr.f32.mxu0 0.0
      %4794 = vmatmul.mubr.f32.gmra.mrb[0].mxu0 %v4717
      %v4795 = vpop.f32.mrb[0].mxu0
      %v4796 = vadd.f32 0.0, %v4795
      %v4797 = vpop.f32.mrb[0].mxu0
      %4798 = vdwg.mxu0
      %4808 = vrot.lane.b32.xlu0 %v4590, 16
      %v4809 = vpop.permute.xlu0 %4808
      %4810 = vrot.lane.b32.xlu0 %v4595, 16
      %v4811 = vpop.permute.xlu0 %4810
      %4812 = vrot.lane.b32.xlu0 %v4600, 16
      %v4813 = vpop.permute.xlu0 %4812
      %4814 = vrot.lane.b32.xlu0 %v4688, 16
      %v4815 = vpop.permute.xlu0 %4814
      %4816 = vrot.lane.b32.xlu0 %v4693, 16
      %v4817 = vpop.permute.xlu0 %4816
      %4818 = vrot.lane.b32.xlu0 %v4698, 16
      %v4819 = vpop.permute.xlu0 %4818
      %4820 = vrot.lane.b32.xlu0 %v4786, 16
      %v4821 = vpop.permute.xlu0 %4820
      %4822 = vrot.lane.b32.xlu0 %v4791, 16
      %v4823 = vpop.permute.xlu0 %4822
      %4824 = vrot.lane.b32.xlu0 %v4796, 16
      %v4825 = vpop.permute.xlu0 %4824
      %v4835 = vsel %vm832, %v3848, %v4809
      %v4836 = vsel %vm832, %v3853, %v4811
      %v4837 = vsel %vm832, %v3858, %v4813
      %v4838 = vsel %vm832, %v3946, %v4815
      %v4839 = vsel %vm832, %v3951, %v4817
      %v4840 = vsel %vm832, %v3956, %v4819
      %v4841 = vsel %vm832, %v4044, %v4821
      %v4842 = vsel %vm832, %v4049, %v4823
      %v4843 = vsel %vm832, %v4054, %v4825
      %s4844 = scalar_lea.vmem %s5, 32
      %v4845 = vld [vmem:[%s4844] sm:$0xff]
      %v4846 = vld [vmem:[%s4844 + $0x8] sm:$0xff]
      %v4847 = vld [vmem:[%s4844 + $0x10] sm:$0xff]
      %v4848 = vld [vmem:[%s4844 + $0x18] sm:$0xff]
      %v4850 = vsel %vm533, %v4835, 0
      %v4853 = vsel %vm533, %v4836, 0
      %v4856 = vsel %vm533, %v4837, 0
      %v4859 = vsel %vm533, %v4838, 0
      %v4862 = vsel %vm533, %v4839, 0
      %v4865 = vsel %vm533, %v4840, 0
      %v4868 = vsel %vm533, %v4841, 0
      %v4871 = vsel %vm533, %v4842, 0
      %v4874 = vsel %vm533, %v4843, 0
      %4876 = vmatprep.subr.mxu0 0.0
      %4877 = vmatpush1.msra.mxu0 %v4845
      %4878 = vmatprep.subr.mxu0 0.0
      %4879 = vmatpush1.msra.mxu0 %v4846
      %4880 = vmatprep.subr.mxu0 0.0
      %4881 = vmatpush1.msra.mxu0 %v4847
      %4882 = vmatprep.subr.mxu0 0.0
      %4883 = vmatpush1.msra.mxu0 %v4848
      %4884 = vmatprep.subr.mxu0 0.0
      %4885 = vmatpush1.msra.mxu0 0.0
      %4886 = vmatprep.subr.mxu0 0.0
      %4887 = vmatpush1.msra.mxu0 0.0
      %4888 = vmatprep.subr.mxu0 0.0
      %4889 = vmatpush1.msra.mxu0 0.0
      %4890 = vmatprep.subr.mxu0 0.0
      %4891 = vmatpush1.msra.mxu0 0.0
      %4892 = vmatprep.subr.mxu0 0.0
      %4893 = vmatpush1.msra.mxu0 0.0
      %4894 = vmatprep.subr.mxu0 0.0
      %4895 = vmatpush1.msra.mxu0 0.0
      %4896 = vmatprep.subr.mxu0 0.0
      %4897 = vmatpush1.msra.mxu0 0.0
      %4898 = vmatprep.subr.mxu0 0.0
      %4899 = vmatpush1.msra.mxu0 0.0
      %4900 = vmatprep.subr.mxu0 0.0
      %4901 = vmatpush1.msra.mxu0 0.0
      %4902 = vmatprep.subr.mxu0 0.0
      %4903 = vmatpush1.msra.mxu0 0.0
      %4904 = vmatprep.subr.mxu0 0.0
      %4905 = vmatpush1.msra.mxu0 0.0
      %4906 = vmatprep.subr.mxu0 0.0
      %4907 = vmatpush1.msra.mxu0 0.0
      %4908 = vmatprep.subr.mxu0 0.0
      %4909 = vmatpush1.msra.mxu0 0.0
      %4910 = vmatprep.subr.mxu0 0.0
      %4911 = vmatpush1.msra.mxu0 0.0
      %4912 = vmatprep.subr.mxu0 0.0
      %4913 = vmatpush1.msra.mxu0 0.0
      %4914 = vmatprep.subr.mxu0 0.0
      %4915 = vmatpush1.msra.mxu0 0.0
      %4916 = vmatprep.subr.mxu0 0.0
      %4917 = vmatpush1.msra.mxu0 0.0
      %4918 = vmatprep.subr.mxu0 0.0
      %4919 = vmatpush1.msra.mxu0 0.0
      %4920 = vmatprep.subr.mxu0 0.0
      %4921 = vmatpush1.msra.mxu0 0.0
      %4922 = vmatprep.subr.mxu0 0.0
      %4923 = vmatpush1.msra.mxu0 0.0
      %4924 = vmatprep.subr.mxu0 0.0
      %4925 = vmatpush1.msra.mxu0 0.0
      %4926 = vmatprep.subr.mxu0 0.0
      %4927 = vmatpush1.msra.mxu0 0.0
      %4928 = vmatprep.subr.mxu0 0.0
      %4929 = vmatpush1.msra.mxu0 0.0
      %4930 = vmatprep.subr.mxu0 0.0
      %4931 = vmatpush1.msra.mxu0 0.0
      %4932 = vmatprep.subr.mxu0 0.0
      %4933 = vmatpush1.msra.mxu0 0.0
      %4934 = vmatprep.subr.mxu0 0.0
      %4935 = vmatpush1.msra.mxu0 0.0
      %4936 = vmatprep.subr.mxu0 0.0
      %4937 = vmatpush1.msra.mxu0 0.0
      %4938 = vmatprep.subr.mxu0 0.0
      %4939 = vmatpush1.msra.mxu0 0.0
      %4940 = vmatprep.mubr.f32.mxu0 0.0
      %4941 = vmatmul.mubr.f32.gmra.mrb[0].mxu0 %v4850
      %v4942 = vpop.f32.mrb[0].mxu0
      %v4943 = vadd.f32 0.0, %v4942
      %v4944 = vpop.f32.mrb[0].mxu0
      %4945 = vmatprep.mubr.f32.mxu0 0.0
      %4946 = vmatmul.mubr.f32.gmra.mrb[0].mxu0 %v4853
      %v4947 = vpop.f32.mrb[0].mxu0
      %v4948 = vadd.f32 0.0, %v4947
      %v4949 = vpop.f32.mrb[0].mxu0
      %4950 = vmatprep.mubr.f32.mxu0 0.0
      %4951 = vmatmul.mubr.f32.gmra.mrb[0].mxu0 %v4856
      %v4952 = vpop.f32.mrb[0].mxu0
      %v4953 = vadd.f32 0.0, %v4952
      %v4954 = vpop.f32.mrb[0].mxu0
      %4955 = vmatprep.mubr.f32.mxu0 0.0
      %4956 = vmatmul.mubr.f32.gmra.mrb[0].mxu0 %v4859
      %v4957 = vpop.f32.mrb[0].mxu0
      %v4958 = vadd.f32 0.0, %v4957
      %v4959 = vpop.f32.mrb[0].mxu0
      %4960 = vmatprep.mubr.f32.mxu0 0.0
      %4961 = vmatmul.mubr.f32.gmra.mrb[0].mxu0 %v4862
      %v4962 = vpop.f32.mrb[0].mxu0
      %v4963 = vadd.f32 0.0, %v4962
      %v4964 = vpop.f32.mrb[0].mxu0
      %4965 = vmatprep.mubr.f32.mxu0 0.0
      %4966 = vmatmul.mubr.f32.gmra.mrb[0].mxu0 %v4865
      %v4967 = vpop.f32.mrb[0].mxu0
      %v4968 = vadd.f32 0.0, %v4967
      %v4969 = vpop.f32.mrb[0].mxu0
      %4970 = vmatprep.mubr.f32.mxu0 0.0
      %4971 = vmatmul.mubr.f32.gmra.mrb[0].mxu0 %v4868
      %v4972 = vpop.f32.mrb[0].mxu0
      %v4973 = vadd.f32 0.0, %v4972
      %v4974 = vpop.f32.mrb[0].mxu0
      %4975 = vmatprep.mubr.f32.mxu0 0.0
      %4976 = vmatmul.mubr.f32.gmra.mrb[0].mxu0 %v4871
      %v4977 = vpop.f32.mrb[0].mxu0
      %v4978 = vadd.f32 0.0, %v4977
      %v4979 = vpop.f32.mrb[0].mxu0
      %4980 = vmatprep.mubr.f32.mxu0 0.0
      %4981 = vmatmul.mubr.f32.gmra.mrb[0].mxu0 %v4874
      %v4982 = vpop.f32.mrb[0].mxu0
      %v4983 = vadd.f32 0.0, %v4982
      %v4984 = vpop.f32.mrb[0].mxu0
      %4985 = vdwg.mxu0
      %v4986 = vadd.f32 %v3017, %v4943
      %v4987 = vadd.f32 %v3018, %v4948
      %v4988 = vadd.f32 %v3019, %v4953
      %v4989 = vadd.f32 %v3020, %v4958
      %v4990 = vadd.f32 %v3021, %v4963
      %v4991 = vadd.f32 %v3022, %v4968
      %v4992 = vadd.f32 %v3023, %v4973
      %v4993 = vadd.f32 %v3024, %v4978
      %v4994 = vadd.f32 %v3025, %v4983
      %v4995 = vlaneseq
      %v4996 = vshrl.u32 %v4995, 7
      %v4997 = vsub.s32 0, %v4996
      %v4998 = vrot.slane %v3030, %v4997
      %v4999 = vadd.f32 %v4986, %v4998
      %v5000 = vadd.f32 %v4987, %v4998
      %v5001 = vadd.f32 %v4988, %v4998
      %v5002 = vadd.f32 %v4989, %v4998
      %v5003 = vadd.f32 %v4990, %v4998
      %v5004 = vadd.f32 %v4991, %v4998
      %v5005 = vadd.f32 %v4992, %v4998
      %v5006 = vadd.f32 %v4993, %v4998
      %v5007 = vadd.f32 %v4994, %v4998
      %v5008 = vsel %vm533, %v4999, 0.0
      %5009 = vadd.xlane.f32.xlu0 %v5008
      %v5010 = vpop.xlane.xlu0 %5009
      %v5011 = vsel %vm533, %v5000, 0.0
      %5012 = vadd.xlane.f32.xlu0 %v5011
      %v5013 = vpop.xlane.xlu0 %5012
      %v5014 = vsel %vm533, %v5001, 0.0
      %5015 = vadd.xlane.f32.xlu0 %v5014
      %v5016 = vpop.xlane.xlu0 %5015
      %v5017 = vsel %vm533, %v5002, 0.0
      %5018 = vadd.xlane.f32.xlu0 %v5017
      %v5019 = vpop.xlane.xlu0 %5018
      %v5020 = vsel %vm533, %v5003, 0.0
      %5021 = vadd.xlane.f32.xlu0 %v5020
      %v5022 = vpop.xlane.xlu0 %5021
      %v5023 = vsel %vm533, %v5004, 0.0
      %5024 = vadd.xlane.f32.xlu0 %v5023
      %v5025 = vpop.xlane.xlu0 %5024
      %v5026 = vsel %vm533, %v5005, 0.0
      %5027 = vadd.xlane.f32.xlu0 %v5026
      %v5028 = vpop.xlane.xlu0 %5027
      %v5029 = vsel %vm533, %v5006, 0.0
      %5030 = vadd.xlane.f32.xlu0 %v5029
      %v5031 = vpop.xlane.xlu0 %5030
      %v5032 = vsel %vm533, %v5007, 0.0
      %5033 = vadd.xlane.f32.xlu0 %v5032
      %v5034 = vpop.xlane.xlu0 %5033
      %v5035 = vmul.f32 %v5010, %v561
      %v5036 = vmul.f32 %v5013, %v561
      %v5037 = vmul.f32 %v5016, %v561
      %v5038 = vmul.f32 %v5019, %v561
      %v5039 = vmul.f32 %v5022, %v561
      %v5040 = vmul.f32 %v5025, %v561
      %v5041 = vmul.f32 %v5028, %v561
      %v5042 = vmul.f32 %v5031, %v561
      %v5043 = vmul.f32 %v5034, %v561
      %v5044 = vsub.f32 %v4999, %v5035
      %v5045 = vsub.f32 %v5000, %v5036
      %v5046 = vsub.f32 %v5001, %v5037
      %v5047 = vsub.f32 %v5002, %v5038
      %v5048 = vsub.f32 %v5003, %v5039
      %v5049 = vsub.f32 %v5004, %v5040
      %v5050 = vsub.f32 %v5005, %v5041
      %v5051 = vsub.f32 %v5006, %v5042
      %v5052 = vsub.f32 %v5007, %v5043
      %v5053 = vmul.f32 %v5044, %v5044
      %v5054 = vmul.f32 %v5045, %v5045
      %v5055 = vmul.f32 %v5046, %v5046
      %v5056 = vmul.f32 %v5047, %v5047
      %v5057 = vmul.f32 %v5048, %v5048
      %v5058 = vmul.f32 %v5049, %v5049
      %v5059 = vmul.f32 %v5050, %v5050
      %v5060 = vmul.f32 %v5051, %v5051
      %v5061 = vmul.f32 %v5052, %v5052
      %v5062 = vsel %vm533, %v5053, 0.0
      %5063 = vadd.xlane.f32.xlu0 %v5062
      %v5064 = vpop.xlane.xlu0 %5063
      %v5065 = vsel %vm533, %v5054, 0.0
      %5066 = vadd.xlane.f32.xlu0 %v5065
      %v5067 = vpop.xlane.xlu0 %5066
      %v5068 = vsel %vm533, %v5055, 0.0
      %5069 = vadd.xlane.f32.xlu0 %v5068
      %v5070 = vpop.xlane.xlu0 %5069
      %v5071 = vsel %vm533, %v5056, 0.0
      %5072 = vadd.xlane.f32.xlu0 %v5071
      %v5073 = vpop.xlane.xlu0 %5072
      %v5074 = vsel %vm533, %v5057, 0.0
      %5075 = vadd.xlane.f32.xlu0 %v5074
      %v5076 = vpop.xlane.xlu0 %5075
      %v5077 = vsel %vm533, %v5058, 0.0
      %5078 = vadd.xlane.f32.xlu0 %v5077
      %v5079 = vpop.xlane.xlu0 %5078
      %v5080 = vsel %vm533, %v5059, 0.0
      %5081 = vadd.xlane.f32.xlu0 %v5080
      %v5082 = vpop.xlane.xlu0 %5081
      %v5083 = vsel %vm533, %v5060, 0.0
      %5084 = vadd.xlane.f32.xlu0 %v5083
      %v5085 = vpop.xlane.xlu0 %5084
      %v5086 = vsel %vm533, %v5061, 0.0
      %5087 = vadd.xlane.f32.xlu0 %v5086
      %v5088 = vpop.xlane.xlu0 %5087
      %v5089 = vmul.f32 %v5064, %v561
      %v5090 = vmul.f32 %v5067, %v561
      %v5091 = vmul.f32 %v5070, %v561
      %v5092 = vmul.f32 %v5073, %v561
      %v5093 = vmul.f32 %v5076, %v561
      %v5094 = vmul.f32 %v5079, %v561
      %v5095 = vmul.f32 %v5082, %v561
      %v5096 = vmul.f32 %v5085, %v561
      %v5097 = vmul.f32 %v5088, %v561
      %v5098 = vadd.f32 %v5089, 1e-05
      %v5099 = vadd.f32 %v5090, 1e-05
      %v5100 = vadd.f32 %v5091, 1e-05
      %v5101 = vadd.f32 %v5092, 1e-05
      %v5102 = vadd.f32 %v5093, 1e-05
      %v5103 = vadd.f32 %v5094, 1e-05
      %v5104 = vadd.f32 %v5095, 1e-05
      %v5105 = vadd.f32 %v5096, 1e-05
      %v5106 = vadd.f32 %v5097, 1e-05
      %v5107 = vrsqrt.pop %v5098
      %v5108 = vrsqrt.pop %v5099
      %v5109 = vrsqrt.pop %v5100
      %v5110 = vrsqrt.pop %v5101
      %v5111 = vrsqrt.pop %v5102
      %v5112 = vrsqrt.pop %v5103
      %v5113 = vrsqrt.pop %v5104
      %v5114 = vrsqrt.pop %v5105
      %v5115 = vrsqrt.pop %v5106
      %v5116 = vmul.f32 %v5044, %v5107
      %v5117 = vmul.f32 %v5045, %v5108
      %v5118 = vmul.f32 %v5046, %v5109
      %v5119 = vmul.f32 %v5047, %v5110
      %v5120 = vmul.f32 %v5048, %v5111
      %v5121 = vmul.f32 %v5049, %v5112
      %v5122 = vmul.f32 %v5050, %v5113
      %v5123 = vmul.f32 %v5051, %v5114
      %v5124 = vmul.f32 %v5052, %v5115
      %v5125 = vlaneseq
      %v5126 = vshrl.u32 %v5125, 7
      %v5127 = vsub.s32 0, %v5126
      %v5128 = vrot.slane %v3031, %v5127
      %v5129 = vmul.f32 %v5116, %v5128
      %v5130 = vmul.f32 %v5117, %v5128
      %v5131 = vmul.f32 %v5118, %v5128
      %v5132 = vmul.f32 %v5119, %v5128
      %v5133 = vmul.f32 %v5120, %v5128
      %v5134 = vmul.f32 %v5121, %v5128
      %v5135 = vmul.f32 %v5122, %v5128
      %v5136 = vmul.f32 %v5123, %v5128
      %v5137 = vmul.f32 %v5124, %v5128
      %v5138 = vlaneseq
      %v5139 = vshrl.u32 %v5138, 7
      %v5140 = vsub.s32 0, %v5139
      %v5141 = vrot.slane %v3032, %v5140
      %v5142 = vadd.f32 %v5129, %v5141
      %v5143 = vadd.f32 %v5130, %v5141
      %v5144 = vadd.f32 %v5131, %v5141
      %v5145 = vadd.f32 %v5132, %v5141
      %v5146 = vadd.f32 %v5133, %v5141
      %v5147 = vadd.f32 %v5134, %v5141
      %v5148 = vadd.f32 %v5135, %v5141
      %v5149 = vadd.f32 %v5136, %v5141
      %v5150 = vadd.f32 %v5137, %v5141
      %s5151 = scalar_lea.vmem %s6, 32
      %v5152 = vld [vmem:[%s5151] sm:$0xff]
      %v5153 = vld [vmem:[%s5151 + $0x8] sm:$0xff]
      %v5154 = vld [vmem:[%s5151 + $0x10] sm:$0xff]
      %v5155 = vld [vmem:[%s5151 + $0x18] sm:$0xff]
      %v5156 = vlaneseq
      %v5157 = vshrl.u32 %v5156, 7
      %v5158 = vsub.s32 0, %v5157
      %v5159 = vrot.slane %v3033, %v5158
      %v5161 = vsel %vm533, %v5142, 0
      %v5164 = vsel %vm533, %v5143, 0
      %v5167 = vsel %vm533, %v5144, 0
      %v5170 = vsel %vm533, %v5145, 0
      %v5173 = vsel %vm533, %v5146, 0
      %v5176 = vsel %vm533, %v5147, 0
      %v5179 = vsel %vm533, %v5148, 0
      %v5182 = vsel %vm533, %v5149, 0
      %v5185 = vsel %vm533, %v5150, 0
      %5187 = vmatprep.subr.mxu0 0.0
      %5188 = vmatpush1.msra.mxu0 %v5152
      %5189 = vmatprep.subr.mxu0 0.0
      %5190 = vmatpush1.msra.mxu0 %v5153
      %5191 = vmatprep.subr.mxu0 0.0
      %5192 = vmatpush1.msra.mxu0 %v5154
      %5193 = vmatprep.subr.mxu0 0.0
      %5194 = vmatpush1.msra.mxu0 %v5155
      %5195 = vmatprep.subr.mxu0 0.0
      %5196 = vmatpush1.msra.mxu0 0.0
      %5197 = vmatprep.subr.mxu0 0.0
      %5198 = vmatpush1.msra.mxu0 0.0
      %5199 = vmatprep.subr.mxu0 0.0
      %5200 = vmatpush1.msra.mxu0 0.0
      %5201 = vmatprep.subr.mxu0 0.0
      %5202 = vmatpush1.msra.mxu0 0.0
      %5203 = vmatprep.subr.mxu0 0.0
      %5204 = vmatpush1.msra.mxu0 0.0
      %5205 = vmatprep.subr.mxu0 0.0
      %5206 = vmatpush1.msra.mxu0 0.0
      %5207 = vmatprep.subr.mxu0 0.0
      %5208 = vmatpush1.msra.mxu0 0.0
      %5209 = vmatprep.subr.mxu0 0.0
      %5210 = vmatpush1.msra.mxu0 0.0
      %5211 = vmatprep.subr.mxu0 0.0
      %5212 = vmatpush1.msra.mxu0 0.0
      %5213 = vmatprep.subr.mxu0 0.0
      %5214 = vmatpush1.msra.mxu0 0.0
      %5215 = vmatprep.subr.mxu0 0.0
      %5216 = vmatpush1.msra.mxu0 0.0
      %5217 = vmatprep.subr.mxu0 0.0
      %5218 = vmatpush1.msra.mxu0 0.0
      %5219 = vmatprep.subr.mxu0 0.0
      %5220 = vmatpush1.msra.mxu0 0.0
      %5221 = vmatprep.subr.mxu0 0.0
      %5222 = vmatpush1.msra.mxu0 0.0
      %5223 = vmatprep.subr.mxu0 0.0
      %5224 = vmatpush1.msra.mxu0 0.0
      %5225 = vmatprep.subr.mxu0 0.0
      %5226 = vmatpush1.msra.mxu0 0.0
      %5227 = vmatprep.subr.mxu0 0.0
      %5228 = vmatpush1.msra.mxu0 0.0
      %5229 = vmatprep.subr.mxu0 0.0
      %5230 = vmatpush1.msra.mxu0 0.0
      %5231 = vmatprep.subr.mxu0 0.0
      %5232 = vmatpush1.msra.mxu0 0.0
      %5233 = vmatprep.subr.mxu0 0.0
      %5234 = vmatpush1.msra.mxu0 0.0
      %5235 = vmatprep.subr.mxu0 0.0
      %5236 = vmatpush1.msra.mxu0 0.0
      %5237 = vmatprep.subr.mxu0 0.0
      %5238 = vmatpush1.msra.mxu0 0.0
      %5239 = vmatprep.subr.mxu0 0.0
      %5240 = vmatpush1.msra.mxu0 0.0
      %5241 = vmatprep.subr.mxu0 0.0
      %5242 = vmatpush1.msra.mxu0 0.0
      %5243 = vmatprep.subr.mxu0 0.0
      %5244 = vmatpush1.msra.mxu0 0.0
      %5245 = vmatprep.subr.mxu0 0.0
      %5246 = vmatpush1.msra.mxu0 0.0
      %5247 = vmatprep.subr.mxu0 0.0
      %5248 = vmatpush1.msra.mxu0 0.0
      %5249 = vmatprep.subr.mxu0 0.0
      %5250 = vmatpush1.msra.mxu0 0.0
      %5251 = vmatprep.mubr.f32.mxu0 0.0
      %5252 = vmatmul.mubr.f32.gmra.mrb[0].mxu0 %v5161
      %v5253 = vpop.f32.mrb[0].mxu0
      %v5254 = vadd.f32 %v5159, %v5253
      %v5255 = vpop.f32.mrb[0].mxu0
      %5256 = vmatprep.mubr.f32.mxu0 0.0
      %5257 = vmatmul.mubr.f32.gmra.mrb[0].mxu0 %v5164
      %v5258 = vpop.f32.mrb[0].mxu0
      %v5259 = vadd.f32 %v5159, %v5258
      %v5260 = vpop.f32.mrb[0].mxu0
      %5261 = vmatprep.mubr.f32.mxu0 0.0
      %5262 = vmatmul.mubr.f32.gmra.mrb[0].mxu0 %v5167
      %v5263 = vpop.f32.mrb[0].mxu0
      %v5264 = vadd.f32 %v5159, %v5263
      %v5265 = vpop.f32.mrb[0].mxu0
      %5266 = vmatprep.mubr.f32.mxu0 0.0
      %5267 = vmatmul.mubr.f32.gmra.mrb[0].mxu0 %v5170
      %v5268 = vpop.f32.mrb[0].mxu0
      %v5269 = vadd.f32 %v5159, %v5268
      %v5270 = vpop.f32.mrb[0].mxu0
      %5271 = vmatprep.mubr.f32.mxu0 0.0
      %5272 = vmatmul.mubr.f32.gmra.mrb[0].mxu0 %v5173
      %v5273 = vpop.f32.mrb[0].mxu0
      %v5274 = vadd.f32 %v5159, %v5273
      %v5275 = vpop.f32.mrb[0].mxu0
      %5276 = vmatprep.mubr.f32.mxu0 0.0
      %5277 = vmatmul.mubr.f32.gmra.mrb[0].mxu0 %v5176
      %v5278 = vpop.f32.mrb[0].mxu0
      %v5279 = vadd.f32 %v5159, %v5278
      %v5280 = vpop.f32.mrb[0].mxu0
      %5281 = vmatprep.mubr.f32.mxu0 0.0
      %5282 = vmatmul.mubr.f32.gmra.mrb[0].mxu0 %v5179
      %v5283 = vpop.f32.mrb[0].mxu0
      %v5284 = vadd.f32 %v5159, %v5283
      %v5285 = vpop.f32.mrb[0].mxu0
      %5286 = vmatprep.mubr.f32.mxu0 0.0
      %5287 = vmatmul.mubr.f32.gmra.mrb[0].mxu0 %v5182
      %v5288 = vpop.f32.mrb[0].mxu0
      %v5289 = vadd.f32 %v5159, %v5288
      %v5290 = vpop.f32.mrb[0].mxu0
      %5291 = vmatprep.mubr.f32.mxu0 0.0
      %5292 = vmatmul.mubr.f32.gmra.mrb[0].mxu0 %v5185
      %v5293 = vpop.f32.mrb[0].mxu0
      %v5294 = vadd.f32 %v5159, %v5293
      %v5295 = vpop.f32.mrb[0].mxu0
      %5296 = vdwg.mxu0
      %v5297 = vmul.f32 %v5254, %v5254
      %v5298 = vmul.f32 %v5259, %v5259
      %v5299 = vmul.f32 %v5264, %v5264
      %v5300 = vmul.f32 %v5269, %v5269
      %v5301 = vmul.f32 %v5274, %v5274
      %v5302 = vmul.f32 %v5279, %v5279
      %v5303 = vmul.f32 %v5284, %v5284
      %v5304 = vmul.f32 %v5289, %v5289
      %v5305 = vmul.f32 %v5294, %v5294
      %v5306 = vmul.f32 %v5254, %v5297
      %v5307 = vmul.f32 %v5259, %v5298
      %v5308 = vmul.f32 %v5264, %v5299
      %v5309 = vmul.f32 %v5269, %v5300
      %v5310 = vmul.f32 %v5274, %v5301
      %v5311 = vmul.f32 %v5279, %v5302
      %v5312 = vmul.f32 %v5284, %v5303
      %v5313 = vmul.f32 %v5289, %v5304
      %v5314 = vmul.f32 %v5294, %v5305
      %v5315 = vmul.f32 %v5306, 0.044715
      %v5316 = vmul.f32 %v5307, 0.044715
      %v5317 = vmul.f32 %v5308, 0.044715
      %v5318 = vmul.f32 %v5309, 0.044715
      %v5319 = vmul.f32 %v5310, 0.044715
      %v5320 = vmul.f32 %v5311, 0.044715
      %v5321 = vmul.f32 %v5312, 0.044715
      %v5322 = vmul.f32 %v5313, 0.044715
      %v5323 = vmul.f32 %v5314, 0.044715
      %v5324 = vadd.f32 %v5254, %v5315
      %v5325 = vadd.f32 %v5259, %v5316
      %v5326 = vadd.f32 %v5264, %v5317
      %v5327 = vadd.f32 %v5269, %v5318
      %v5328 = vadd.f32 %v5274, %v5319
      %v5329 = vadd.f32 %v5279, %v5320
      %v5330 = vadd.f32 %v5284, %v5321
      %v5331 = vadd.f32 %v5289, %v5322
      %v5332 = vadd.f32 %v5294, %v5323
      %v5333 = vmul.f32 %v5324, 0.7978846
      %v5334 = vmul.f32 %v5325, 0.7978846
      %v5335 = vmul.f32 %v5326, 0.7978846
      %v5336 = vmul.f32 %v5327, 0.7978846
      %v5337 = vmul.f32 %v5328, 0.7978846
      %v5338 = vmul.f32 %v5329, 0.7978846
      %v5339 = vmul.f32 %v5330, 0.7978846
      %v5340 = vmul.f32 %v5331, 0.7978846
      %v5341 = vmul.f32 %v5332, 0.7978846
      %v5342 = vtanh.pop %v5333
      %v5343 = vtanh.pop %v5334
      %v5344 = vtanh.pop %v5335
      %v5345 = vtanh.pop %v5336
      %v5346 = vtanh.pop %v5337
      %v5347 = vtanh.pop %v5338
      %v5348 = vtanh.pop %v5339
      %v5349 = vtanh.pop %v5340
      %v5350 = vtanh.pop %v5341
      %v5351 = vadd.f32 %v5342, 1.0
      %v5352 = vadd.f32 %v5343, 1.0
      %v5353 = vadd.f32 %v5344, 1.0
      %v5354 = vadd.f32 %v5345, 1.0
      %v5355 = vadd.f32 %v5346, 1.0
      %v5356 = vadd.f32 %v5347, 1.0
      %v5357 = vadd.f32 %v5348, 1.0
      %v5358 = vadd.f32 %v5349, 1.0
      %v5359 = vadd.f32 %v5350, 1.0
      %v5360 = vmul.f32 %v5351, 0.5
      %v5361 = vmul.f32 %v5352, 0.5
      %v5362 = vmul.f32 %v5353, 0.5
      %v5363 = vmul.f32 %v5354, 0.5
      %v5364 = vmul.f32 %v5355, 0.5
      %v5365 = vmul.f32 %v5356, 0.5
      %v5366 = vmul.f32 %v5357, 0.5
      %v5367 = vmul.f32 %v5358, 0.5
      %v5368 = vmul.f32 %v5359, 0.5
      %v5369 = vmul.f32 %v5254, %v5360
      %v5370 = vmul.f32 %v5259, %v5361
      %v5371 = vmul.f32 %v5264, %v5362
      %v5372 = vmul.f32 %v5269, %v5363
      %v5373 = vmul.f32 %v5274, %v5364
      %v5374 = vmul.f32 %v5279, %v5365
      %v5375 = vmul.f32 %v5284, %v5366
      %v5376 = vmul.f32 %v5289, %v5367
      %v5377 = vmul.f32 %v5294, %v5368
      %s5378 = scalar_lea.vmem %s7, 128
      %v5379 = vld [vmem:[%s5378] sm:$0xff]
      %v5380 = vld [vmem:[%s5378 + $0x8] sm:$0xff]
      %v5381 = vld [vmem:[%s5378 + $0x10] sm:$0xff]
      %v5382 = vld [vmem:[%s5378 + $0x18] sm:$0xff]
      %v5383 = vld [vmem:[%s5378 + $0x20] sm:$0xff]
      %v5384 = vld [vmem:[%s5378 + $0x28] sm:$0xff]
      %v5385 = vld [vmem:[%s5378 + $0x30] sm:$0xff]
      %v5386 = vld [vmem:[%s5378 + $0x38] sm:$0xff]
      %v5387 = vld [vmem:[%s5378 + $0x40] sm:$0xff]
      %v5388 = vld [vmem:[%s5378 + $0x48] sm:$0xff]
      %v5389 = vld [vmem:[%s5378 + $0x50] sm:$0xff]
      %v5390 = vld [vmem:[%s5378 + $0x58] sm:$0xff]
      %v5391 = vld [vmem:[%s5378 + $0x60] sm:$0xff]
      %v5392 = vld [vmem:[%s5378 + $0x68] sm:$0xff]
      %v5393 = vld [vmem:[%s5378 + $0x70] sm:$0xff]
      %v5394 = vld [vmem:[%s5378 + $0x78] sm:$0xff]
      %5395 = vmatprep.subr.mxu0 0.0
      %5396 = vmatpush1.msra.mxu0 %v5379
      %5397 = vmatprep.subr.mxu0 0.0
      %5398 = vmatpush1.msra.mxu0 %v5380
      %5399 = vmatprep.subr.mxu0 0.0
      %5400 = vmatpush1.msra.mxu0 %v5381
      %5401 = vmatprep.subr.mxu0 0.0
      %5402 = vmatpush1.msra.mxu0 %v5382
      %5403 = vmatprep.subr.mxu0 0.0
      %5404 = vmatpush1.msra.mxu0 %v5383
      %5405 = vmatprep.subr.mxu0 0.0
      %5406 = vmatpush1.msra.mxu0 %v5384
      %5407 = vmatprep.subr.mxu0 0.0
      %5408 = vmatpush1.msra.mxu0 %v5385
      %5409 = vmatprep.subr.mxu0 0.0
      %5410 = vmatpush1.msra.mxu0 %v5386
      %5411 = vmatprep.subr.mxu0 0.0
      %5412 = vmatpush1.msra.mxu0 %v5387
      %5413 = vmatprep.subr.mxu0 0.0
      %5414 = vmatpush1.msra.mxu0 %v5388
      %5415 = vmatprep.subr.mxu0 0.0
      %5416 = vmatpush1.msra.mxu0 %v5389
      %5417 = vmatprep.subr.mxu0 0.0
      %5418 = vmatpush1.msra.mxu0 %v5390
      %5419 = vmatprep.subr.mxu0 0.0
      %5420 = vmatpush1.msra.mxu0 %v5391
      %5421 = vmatprep.subr.mxu0 0.0
      %5422 = vmatpush1.msra.mxu0 %v5392
      %5423 = vmatprep.subr.mxu0 0.0
      %5424 = vmatpush1.msra.mxu0 %v5393
      %5425 = vmatprep.subr.mxu0 0.0
      %5426 = vmatpush1.msra.mxu0 %v5394
      %5427 = vmatprep.subr.mxu0 0.0
      %5428 = vmatpush1.msra.mxu0 0.0
      %5429 = vmatprep.subr.mxu0 0.0
      %5430 = vmatpush1.msra.mxu0 0.0
      %5431 = vmatprep.subr.mxu0 0.0
      %5432 = vmatpush1.msra.mxu0 0.0
      %5433 = vmatprep.subr.mxu0 0.0
      %5434 = vmatpush1.msra.mxu0 0.0
      %5435 = vmatprep.subr.mxu0 0.0
      %5436 = vmatpush1.msra.mxu0 0.0
      %5437 = vmatprep.subr.mxu0 0.0
      %5438 = vmatpush1.msra.mxu0 0.0
      %5439 = vmatprep.subr.mxu0 0.0
      %5440 = vmatpush1.msra.mxu0 0.0
      %5441 = vmatprep.subr.mxu0 0.0
      %5442 = vmatpush1.msra.mxu0 0.0
      %5443 = vmatprep.subr.mxu0 0.0
      %5444 = vmatpush1.msra.mxu0 0.0
      %5445 = vmatprep.subr.mxu0 0.0
      %5446 = vmatpush1.msra.mxu0 0.0
      %5447 = vmatprep.subr.mxu0 0.0
      %5448 = vmatpush1.msra.mxu0 0.0
      %5449 = vmatprep.subr.mxu0 0.0
      %5450 = vmatpush1.msra.mxu0 0.0
      %5451 = vmatprep.subr.mxu0 0.0
      %5452 = vmatpush1.msra.mxu0 0.0
      %5453 = vmatprep.subr.mxu0 0.0
      %5454 = vmatpush1.msra.mxu0 0.0
      %5455 = vmatprep.subr.mxu0 0.0
      %5456 = vmatpush1.msra.mxu0 0.0
      %5457 = vmatprep.subr.mxu0 0.0
      %5458 = vmatpush1.msra.mxu0 0.0
      %5459 = vmatprep.mubr.f32.mxu0 0.0
      %5460 = vmatmul.mubr.f32.gmra.mrb[0].mxu0 %v5369
      %v5461 = vpop.f32.mrb[0].mxu0
      %v5462 = vadd.f32 0.0, %v5461
      %v5463 = vpop.f32.mrb[0].mxu0
      %5464 = vmatprep.mubr.f32.mxu0 0.0
      %5465 = vmatmul.mubr.f32.gmra.mrb[0].mxu0 %v5370
      %v5466 = vpop.f32.mrb[0].mxu0
      %v5467 = vpop.f32.mrb[0].mxu0
      %5468 = vmatprep.mubr.f32.mxu0 0.0
      %5469 = vmatmul.mubr.f32.gmra.mrb[0].mxu0 %v5371
      %v5470 = vpop.f32.mrb[0].mxu0
      %v5471 = vpop.f32.mrb[0].mxu0
      %5472 = vmatprep.mubr.f32.mxu0 0.0
      %5473 = vmatmul.mubr.f32.gmra.mrb[0].mxu0 %v5372
      %v5474 = vpop.f32.mrb[0].mxu0
      %v5475 = vadd.f32 0.0, %v5474
      %v5476 = vpop.f32.mrb[0].mxu0
      %5477 = vmatprep.mubr.f32.mxu0 0.0
      %5478 = vmatmul.mubr.f32.gmra.mrb[0].mxu0 %v5373
      %v5479 = vpop.f32.mrb[0].mxu0
      %v5480 = vpop.f32.mrb[0].mxu0
      %5481 = vmatprep.mubr.f32.mxu0 0.0
      %5482 = vmatmul.mubr.f32.gmra.mrb[0].mxu0 %v5374
      %v5483 = vpop.f32.mrb[0].mxu0
      %v5484 = vpop.f32.mrb[0].mxu0
      %5485 = vmatprep.mubr.f32.mxu0 0.0
      %5486 = vmatmul.mubr.f32.gmra.mrb[0].mxu0 %v5375
      %v5487 = vpop.f32.mrb[0].mxu0
      %v5488 = vadd.f32 0.0, %v5487
      %v5489 = vpop.f32.mrb[0].mxu0
      %5490 = vmatprep.mubr.f32.mxu0 0.0
      %5491 = vmatmul.mubr.f32.gmra.mrb[0].mxu0 %v5376
      %v5492 = vpop.f32.mrb[0].mxu0
      %v5493 = vpop.f32.mrb[0].mxu0
      %5494 = vmatprep.mubr.f32.mxu0 0.0
      %5495 = vmatmul.mubr.f32.gmra.mrb[0].mxu0 %v5377
      %v5496 = vpop.f32.mrb[0].mxu0
      %v5497 = vpop.f32.mrb[0].mxu0
      %5498 = vdwg.mxu0
      %v5499 = vadd.f32 %v4999, %v5462
      %v5500 = vadd.f32 %v5002, %v5475
      %v5501 = vadd.f32 %v5005, %v5488
      %v5502 = vlaneseq
      %v5503 = vshrl.u32 %v5502, 7
      %v5504 = vsub.s32 0, %v5503
      %v5505 = vrot.slane %v3034, %v5504
      %v5506 = vadd.f32 %v5499, %v5505
      %v5507 = vadd.f32 %v5500, %v5505
      %v5508 = vadd.f32 %v5501, %v5505
      %v5512 = vrot.slane %v5507, 7
      %vm5513 = vcmask 1041409
      %v5514 = vsel %vm5513, %v5512, %v5506
      %v5515 = vrot.slane %v5508, 6
      %vm5516 = vcmask 1042434
      %v5517 = vsel %vm5516, %v5515, %v5514
      %vm5519 = vcmask 256000
      %v5520 = vsel %vm5519, %v5517, 0.0
      %5521 = vadd.xlane.f32.xlu0 %v5520
      %v5522 = vpop.xlane.xlu0 %5521
      %v5523 = vmul.f32 %v5522, %v561
      %v5525 = vrot.slane %v5523, 1
      %v5526 = vrot.slane %v5523, 2
      %v5530 = vsub.f32 %v5506, %v5523
      %v5531 = vsub.f32 %v5507, %v5525
      %v5532 = vsub.f32 %v5508, %v5526
      %v5533 = vmul.f32 %v5530, %v5530
      %v5534 = vmul.f32 %v5531, %v5531
      %v5535 = vmul.f32 %v5532, %v5532
      %v5539 = vrot.slane %v5534, 7
      %v5540 = vsel %vm5513, %v5539, %v5533
      %v5541 = vrot.slane %v5535, 6
      %v5542 = vsel %vm5516, %v5541, %v5540
      %v5544 = vsel %vm5519, %v5542, 0.0
      %5545 = vadd.xlane.f32.xlu0 %v5544
      %v5546 = vpop.xlane.xlu0 %5545
      %v5547 = vmul.f32 %v5546, %v561
      %v5548 = vadd.f32 %v5547, 1e-05
      %v5549 = vrsqrt.pop %v5548
      %v5551 = vrot.slane %v5549, 1
      %v5552 = vrot.slane %v5549, 2
      %v5556 = vmul.f32 %v5530, %v5549
      %v5557 = vmul.f32 %v5531, %v5551
      %v5558 = vmul.f32 %v5532, %v5552
      %v5559 = vlaneseq
      %v5560 = vshrl.u32 %v5559, 7
      %v5561 = vsub.s32 0, %v5560
      %v5562 = vrot.slane %v356, %v5561
      %v5563 = vmul.f32 %v5556, %v5562
      %v5564 = vmul.f32 %v5557, %v5562
      %v5565 = vmul.f32 %v5558, %v5562
      %v5566 = vlaneseq
      %v5567 = vshrl.u32 %v5566, 7
      %v5568 = vsub.s32 0, %v5567
      %v5569 = vrot.slane %v357, %v5568
      %v5570 = vadd.f32 %v5563, %v5569
      %v5571 = vadd.f32 %v5564, %v5569
      %v5572 = vadd.f32 %v5565, %v5569
      %vm5573 = vcmask 253952
      %5574 = vst.msk [vmem:[%s344] sm:$0x1] %vm5573, %v5570
      %5575 = vst.msk [vmem:[%s344 + $0x1] sm:$0x1] %vm5573, %v5571
      %5576 = vst.msk [vmem:[%s344 + $0x2] sm:$0x1] %vm5573, %v5572
      %s5577 = smul.u32 3, %s21
      %p5578 = scmp.lt.s32.totalorder %s5577, 5
      %s5579 = scalar_select %p5578, %s5577, 5
      %s5580 = scalar_lea.vmem %s8, %s5579
      %s5581 = smul.u32 3, %s21
      %p5582 = scmp.lt.s32.totalorder %s5581, 5
      %s5583 = scalar_select %p5582, %s5581, 5
      %s5584 = smul.addr %s5583, 12
      %s5585 = smul.addr %s5584, 8
      %s5586 = scalar_lea.vmem %s9, %s5585
      // Predicated region
      $region53: #{_recorder_forward.1} parent=51 // pred_check
        %p5587 = pneg %p212
      $region54: #{_recorder_forward.1} parent=51 // pred_check_branch
        %5589 = sbr.rel (%p5587) target = $region56
      $region55: #{_recorder_forward.1} parent=51 // pred_region
        %s5590 = smul.u32 3, %s21
      $region56: #{_recorder_forward.1} parent=51 // pred_fallthru
        _
      // Predicated region
      $region57: #{_recorder_forward.1} parent=51 // pred_check
        %p5591 = pneg %p238
      $region58: #{_recorder_forward.1} parent=51 // pred_check_branch
        %5593 = sbr.rel (%p5591) target = $region60
      $region59: #{_recorder_forward.1} parent=51 // pred_region
        %s5594 = smul.u32 3, %s21
      $region60: #{_recorder_forward.1} parent=51 // pred_fallthru
        _
    $region52: #{_recorder_forward.1} parent=5 // pred_fallthru
      _
    %p5595 = scmp.le.s32.totalorder 2, %s16
    // Predicated region
    $region61: #{_recorder_forward.1} parent=5 // pred_check
      %p5596 = pneg %p5595
    $region62: #{_recorder_forward.1} parent=5 // pred_check_branch
      %5598 = sbr.rel (%p5596) target = $region64
    $region63: #{_recorder_forward.1} parent=5 // pred_region
      %s5599 = ssub.s32 %s16, 2
      // Predicated region
      $region65: #{_recorder_forward.1} parent=63 // pred_check
        %p5600 = pneg %p218
      $region66: #{_recorder_forward.1} parent=63 // pred_check_branch
        %5602 = sbr.rel (%p5600) target = $region68
      $region67: #{_recorder_forward.1} parent=63 // pred_region
        %s5603 = smul.u32 3, %s22
        %p5604 = scmp.lt.s32.totalorder %s5603, 5
        %s5605 = scalar_select %p5604, %s5603, 5
        %s5606 = scalar_lea.vmem %s8, %s5605
      $region68: #{_recorder_forward.1} parent=63 // pred_fallthru
        _
      // Predicated region
      $region69: #{_recorder_forward.1} parent=63 // pred_check
        %p5607 = pneg %p244
      $region70: #{_recorder_forward.1} parent=63 // pred_check_branch
        %5609 = sbr.rel (%p5607) target = $region72
      $region71: #{_recorder_forward.1} parent=63 // pred_region
        %s5610 = smul.u32 3, %s22
        %p5611 = scmp.lt.s32.totalorder %s5610, 5
        %s5612 = scalar_select %p5611, %s5610, 5
        %s5613 = smul.addr %s5612, 12
        %s5614 = smul.addr %s5613, 8
        %s5615 = scalar_lea.vmem %s9, %s5614
      $region72: #{_recorder_forward.1} parent=63 // pred_fallthru
        _
    $region64: #{_recorder_forward.1} parent=5 // pred_fallthru
      _
  $region6: #{_recorder_forward.1} parent=0 // loop_footer
    %s20 = sadd.s32 1, %s16
  $region7: #{_recorder_forward.1} parent=0 // loop_footer_branch
    %15 = sbr.rel target = $region3
  $region8: #{_recorder_forward.1} parent=0 // loop_exit
    _

</llo_original>
